<compile_context>
chip_gen: v7x
topology: tpu7x:2x2x1
jax: 0.10.0
libtpu: 0.0.40
codegen_flags: <defaults>
</compile_context>

<pallas_src>
import functools
import math

import jax
import jax.numpy as jnp
from jax.experimental import pallas as pl
from jax.experimental.pallas import tpu as pltpu

DIM_FEEDFORWARD = 2048   # nn.TransformerEncoderLayer default
LN_EPS = 1e-5            # nn.LayerNorm default
LANE = 128

_VMEM = pltpu.MemorySpace.VMEM


def _round_up(x, m):
    return ((x + m - 1) // m) * m


def _m_tile(m, target=256):
    # Whole extent if it fits a single block, otherwise 256-row tiles
    # (multiple of 8; sized so the (m_tile, 2048) f32 FFN intermediate stays
    # ~2 MiB — safe for v7x's smaller VMEM as well as v5e/v6e).
    return m if m <= target else target


def _parallel():
    return pltpu.CompilerParams(dimension_semantics=("parallel",))


# --------------------------------------------------------------------------
# In-kernel helpers (f32 epilogue math)
# --------------------------------------------------------------------------
def _layernorm(y, g, b):
    mean = jnp.mean(y, axis=-1, keepdims=True)
    var = jnp.mean(jnp.square(y - mean), axis=-1, keepdims=True)
    return (y - mean) * jax.lax.rsqrt(var + LN_EPS) * g + b


# --------------------------------------------------------------------------
# Kernels
# --------------------------------------------------------------------------
def _qkv_proj_kernel(x_ref, w_ref, b_ref, o_ref):
    """qkv = x @ Wqkv + b ; x:(m,H) f32, Wqkv:(H,3H) bf16, b:(1,3H) f32."""
    x = x_ref[...].astype(jnp.bfloat16)
    o = jnp.dot(x, w_ref[...], preferred_element_type=jnp.float32) + b_ref[...]
    o_ref[...] = o.astype(o_ref.dtype)


def _mha_core_kernel(x_ref, qkv_ref, wo_ref, bo_ref, g_ref, beta_ref, o_ref, *, nhead):
    """Fused: per-(batch,head) attention + out_proj + residual + LayerNorm1.

    x:(S,B,H) f32, qkv:(S,B,3H) f32, Wo:(H,H) bf16, bo/g/beta:(1,H) f32.
    Heads are taken as static column slices of the lane-dense (S,3H) buffer.
    TODO(synk): for non-toy S, tile flash-style (online softmax over kv tiles)
                and grid over batch/heads instead of holding (S,S) scores.
    """
    S, B, H = x_ref.shape
    D = H // nhead
    scale = 1.0 / math.sqrt(D)

    for b in range(B):                      # static Python loops (B, nhead small)
        qkv_b = qkv_ref[:, b, :]            # (S, 3H) f32
        heads = []
        for h in range(nhead):
            q = qkv_b[:, h * D:(h + 1) * D].astype(jnp.bfloat16)
            k = qkv_b[:, H + h * D:H + (h + 1) * D].astype(jnp.bfloat16)
            v = qkv_b[:, 2 * H + h * D:2 * H + (h + 1) * D].astype(jnp.bfloat16)
            # scores = q @ k^T  (contract last dims; no explicit transpose)
            s = jax.lax.dot_general(q, k, (((1,), (1,)), ((), ())),
                                    preferred_element_type=jnp.float32) * scale
            m = jnp.max(s, axis=-1, keepdims=True)
            p = jnp.exp(s - m)
            denom = jnp.sum(p, axis=-1, keepdims=True)
            o_h = jnp.dot(p.astype(jnp.bfloat16), v,
                          preferred_element_type=jnp.float32)
            heads.append(o_h * pl.reciprocal(denom, approx=True))
        attn_b = jnp.concatenate(heads, axis=-1)                 # (S, H) f32
        proj = jnp.dot(attn_b.astype(jnp.bfloat16), wo_ref[...],
                       preferred_element_type=jnp.float32) + bo_ref[...]
        y = x_ref[:, b, :] + proj                                # residual
        o_ref[:, b, :] = _layernorm(y, g_ref[...], beta_ref[...]).astype(o_ref.dtype)


def _ffn_ln_kernel(h_ref, w1_ref, b1_ref, w2_ref, b2_ref, g_ref, beta_ref, o_ref):
    """Fused: relu(h @ W1 + b1) @ W2 + b2, residual add, LayerNorm2."""
    h = h_ref[...]                                               # (m, H) f32
    t = jnp.dot(h.astype(jnp.bfloat16), w1_ref[...],
                preferred_element_type=jnp.float32) + b1_ref[...]
    t = jnp.maximum(t, 0.0)                                      # relu (PyTorch default)
    f = jnp.dot(t.astype(jnp.bfloat16), w2_ref[...],
                preferred_element_type=jnp.float32) + b2_ref[...]
    y = h + f                                                    # residual
    o_ref[...] = _layernorm(y, g_ref[...], beta_ref[...]).astype(o_ref.dtype)


def _classifier_kernel(x_ref, w1_ref, b1_ref, w2_ref, b2_ref, o_ref, *, act):
    """Fused classifier: act(x @ Wc1 + b1) @ Wc2_pad + b2_pad (lane-dense N)."""
    x = x_ref[...]
    t = jnp.dot(x.astype(jnp.bfloat16), w1_ref[...],
                preferred_element_type=jnp.float32) + b1_ref[...]
    if act == "gelu":        # exact (erf) gelu, matches F.gelu default
        t = 0.5 * t * (1.0 + jax.lax.erf(t * (1.0 / math.sqrt(2.0))))
    elif act == "relu":
        t = jnp.maximum(t, 0.0)
    elif act == "tanh":
        t = jnp.tanh(t)
    else:
        raise ValueError(act)
    # dropout: eval-mode identity
    o = jnp.dot(t.astype(jnp.bfloat16), w2_ref[...],
                preferred_element_type=jnp.float32) + b2_ref[...]
    o_ref[...] = o.astype(o_ref.dtype)


# --------------------------------------------------------------------------
# pallas_call wrappers
# --------------------------------------------------------------------------
def qkv_proj(x2d, w, b):
    m, h = x2d.shape
    n = w.shape[1]
    mt = _m_tile(m)
    return pl.pallas_call(
        _qkv_proj_kernel,
        out_shape=jax.ShapeDtypeStruct((m, n), jnp.float32),
        grid=(pl.cdiv(m, mt),),
        in_specs=[
            pl.BlockSpec((mt, h), lambda i: (i, 0)),
            pl.BlockSpec((h, n), lambda i: (0, 0)),
            pl.BlockSpec((1, n), lambda i: (0, 0)),
        ],
        out_specs=pl.BlockSpec((mt, n), lambda i: (i, 0)),
        compiler_params=_parallel(),
    )(x2d, w, b)


def mha_core(x3, qkv3, wo, bo, g, beta, nhead):
    S, B, H = x3.shape
    return pl.pallas_call(
        functools.partial(_mha_core_kernel, nhead=nhead),
        out_shape=jax.ShapeDtypeStruct((S, B, H), jnp.float32),
        in_specs=[pl.BlockSpec(memory_space=_VMEM)] * 6,
        out_specs=pl.BlockSpec(memory_space=_VMEM),
    )(x3, qkv3, wo, bo, g, beta)


def ffn_ln(h2d, w1, b1, w2, b2, g, beta):
    m, H = h2d.shape
    dff = w1.shape[1]
    mt = _m_tile(m)
    return pl.pallas_call(
        _ffn_ln_kernel,
        out_shape=jax.ShapeDtypeStruct((m, H), jnp.float32),
        grid=(pl.cdiv(m, mt),),
        in_specs=[
            pl.BlockSpec((mt, H), lambda i: (i, 0)),
            pl.BlockSpec((H, dff), lambda i: (0, 0)),
            pl.BlockSpec((1, dff), lambda i: (0, 0)),
            pl.BlockSpec((dff, H), lambda i: (0, 0)),
            pl.BlockSpec((1, H), lambda i: (0, 0)),
            pl.BlockSpec((1, H), lambda i: (0, 0)),
            pl.BlockSpec((1, H), lambda i: (0, 0)),
        ],
        out_specs=pl.BlockSpec((mt, H), lambda i: (i, 0)),
        compiler_params=_parallel(),
    )(h2d, w1, b1, w2, b2, g, beta)


def classifier_head(x2d, w1, b1, w2p, b2p, act):
    m, H = x2d.shape
    inter = w1.shape[1]
    npad = w2p.shape[1]
    mt = _m_tile(m)
    return pl.pallas_call(
        functools.partial(_classifier_kernel, act=act),
        out_shape=jax.ShapeDtypeStruct((m, npad), jnp.float32),
        grid=(pl.cdiv(m, mt),),
        in_specs=[
            pl.BlockSpec((mt, H), lambda i: (i, 0)),
            pl.BlockSpec((H, inter), lambda i: (0, 0)),
            pl.BlockSpec((1, inter), lambda i: (0, 0)),
            pl.BlockSpec((inter, npad), lambda i: (0, 0)),
            pl.BlockSpec((1, npad), lambda i: (0, 0)),
        ],
        out_specs=pl.BlockSpec((mt, npad), lambda i: (i, 0)),
        compiler_params=_parallel(),
    )(x2d, w1, b1, w2p, b2p)


# --------------------------------------------------------------------------
# Model forward (glue in plain JAX — only free bitcast reshapes, no transposes)
# --------------------------------------------------------------------------
def encoder_layer_forward(x_flat, S, B, p, nhead):
    H = x_flat.shape[-1]
    qkv = qkv_proj(x_flat, p["in_proj_w"], p["in_proj_b"])            # (S*B, 3H)
    h1 = mha_core(x_flat.reshape(S, B, H), qkv.reshape(S, B, 3 * H),
                  p["out_proj_w"], p["out_proj_b"],
                  p["ln1_g"], p["ln1_b"], nhead)                      # (S, B, H)
    h1 = h1.reshape(S * B, H)
    h2 = ffn_ln(h1, p["lin1_w"], p["lin1_b"], p["lin2_w"], p["lin2_b"],
                p["ln2_g"], p["ln2_b"])                               # (S*B, H)
    return h2


def transformer_classifier_forward(x, params, nhead, num_label, act_func="gelu"):
    S, B, H = x.shape
    assert H % nhead == 0
    x_flat = x.reshape(S * B, H)
    for lp in params["layers"]:
        x_flat = encoder_layer_forward(x_flat, S, B, lp, nhead)
    # PyTorch: features.view(batch, seq, hidden) == pure reshape of the contiguous
    # (S,B,H) buffer (intentionally NOT a transpose); row order of x_flat unchanged.
    y = classifier_head(x_flat, params["cls1_w"], params["cls1_b"],
                        params["cls2_w_pad"], params["cls2_b_pad"], act_func)
    return y[:, :num_label].reshape(B, S, num_label)


# --------------------------------------------------------------------------
# Deterministic parameter init
#  - matmul weights stored pre-transposed (in, out) in bf16
#  - biases / LN params stored as (1, N) f32 (hoisted out of the hot path)
#  - classifier2 weight/bias zero-padded to a 128-lane-dense output width
# --------------------------------------------------------------------------
def init_params(key, hidden, nhead, nlayers, num_label,
                dff=DIM_FEEDFORWARD, intermediate=None):
    intermediate = hidden if intermediate is None else intermediate

    def dense(k, fan_in, fan_out):
        kw, kb = jax.random.split(k)
        w = (jax.random.normal(kw, (fan_in, fan_out), jnp.float32) * 0.02
             ).astype(jnp.bfloat16)
        b = (jax.random.normal(kb, (fan_out,), jnp.float32) * 0.02
             ).reshape(1, fan_out)
        return w, b

    keys = jax.random.split(key, nlayers + 1)
    layers = []
    for i in range(nlayers):
        ks = jax.random.split(keys[i], 4)
        in_w, in_b = dense(ks[0], hidden, 3 * hidden)
        out_w, out_b = dense(ks[1], hidden, hidden)
        l1_w, l1_b = dense(ks[2], hidden, dff)
        l2_w, l2_b = dense(ks[3], dff, hidden)
        layers.append(dict(
            in_proj_w=in_w, in_proj_b=in_b,
            out_proj_w=out_w, out_proj_b=out_b,
            lin1_w=l1_w, lin1_b=l1_b,
            lin2_w=l2_w, lin2_b=l2_b,
            ln1_g=jnp.ones((1, hidden), jnp.float32),
            ln1_b=jnp.zeros((1, hidden), jnp.float32),
            ln2_g=jnp.ones((1, hidden), jnp.float32),
            ln2_b=jnp.zeros((1, hidden), jnp.float32),
        ))
    kc1, kc2 = jax.random.split(keys[-1])
    c1_w, c1_b = dense(kc1, hidden, intermediate)
    c2_w, c2_b = dense(kc2, intermediate, num_label)
    npad = _round_up(max(num_label, LANE), LANE)
    c2_w_pad = jnp.zeros((intermediate, npad), jnp.bfloat16).at[:, :num_label].set(c2_w)
    c2_b_pad = jnp.zeros((1, npad), jnp.float32).at[:, :num_label].set(c2_b)
    return dict(layers=layers, cls1_w=c1_w, cls1_b=c1_b,
                cls2_w_pad=c2_w_pad, cls2_b_pad=c2_b_pad)


# --------------------------------------------------------------------------
if __name__ == "__main__":
    hidden = 32
    nhead = 4
    nlayers = 2
    num_label = 5
    seq = 8
    batch = 2

    key = jax.random.PRNGKey(0)
    kx, kp = jax.random.split(key)
    x = jax.random.normal(kx, (seq, batch, hidden), jnp.float32)
    params = init_params(kp, hidden, nhead, nlayers, num_label)

    fwd = jax.jit(functools.partial(transformer_classifier_forward,
                                    nhead=nhead, num_label=num_label,
                                    act_func="gelu"))
    out = fwd(x, params)
    out = jax.block_until_ready(out)

    assert out.shape == (batch, seq, num_label), out.shape
    assert bool(jnp.all(jnp.isfinite(out)))
    print("KERNEL_OK")
</pallas_src>

<mosaic_0001>
module attributes {stable_mosaic.version = 11 : i64} {
  func.func @_qkv_proj_kernel(%arg0: i32, %arg1: memref<16x32xf32, #tpu.memory_space<vmem>>, %arg2: memref<32x96xbf16, #tpu.memory_space<vmem>>, %arg3: memref<1x96xf32, #tpu.memory_space<vmem>>, %arg4: memref<16x96xf32, #tpu.memory_space<vmem>>) attributes {dimension_semantics = [#tpu.dimension_semantics<parallel>], iteration_bounds = array<i64: 1>, scalar_prefetch = 0 : i64, scratch_operands = 0 : i64, tpu.core_type = #tpu.core_type<tc>, window_params = [{transform_indices = @transform_0, window_bounds = array<i64: 16, 32>}, {pipeline_mode = #tpu.pipeline_mode<synchronous>, transform_indices = @transform_1, window_bounds = array<i64: 32, 96>}, {pipeline_mode = #tpu.pipeline_mode<synchronous>, transform_indices = @transform_2, window_bounds = array<i64: 1, 96>}, {transform_indices = @transform_3, window_bounds = array<i64: 16, 96>}]} {
    %c0 = arith.constant 0 : index
    %c0_0 = arith.constant 0 : index
    %0 = vector.load %arg1[%c0, %c0_0] : memref<16x32xf32, #tpu.memory_space<vmem>>, vector<16x32xf32>
    %1 = arith.truncf %0 : vector<16x32xf32> to vector<16x32xbf16>
    %c0_1 = arith.constant 0 : index
    %c0_2 = arith.constant 0 : index
    %2 = vector.load %arg2[%c0_1, %c0_2] : memref<32x96xbf16, #tpu.memory_space<vmem>>, vector<32x96xbf16>
    %cst = arith.constant dense<0.000000e+00> : vector<16x96xf32>
    %3 = tpu.matmul %1, %2, %cst {dimension_numbers = #tpu.dot_dimension_numbers<[1], [0], [0], [1], [0, 0, 1, 1], [], []>} : vector<16x32xbf16>, vector<32x96xbf16>, vector<16x96xf32> -> vector<16x96xf32>
    %c0_3 = arith.constant 0 : index
    %c0_4 = arith.constant 0 : index
    %4 = vector.load %arg3[%c0_3, %c0_4] : memref<1x96xf32, #tpu.memory_space<vmem>>, vector<1x96xf32>
    %5 = vector.broadcast %4 : vector<1x96xf32> to vector<16x96xf32>
    %6 = arith.addf %3, %5 : vector<16x96xf32>
    %c0_5 = arith.constant 0 : index
    %c0_6 = arith.constant 0 : index
    %7 = vector.load %arg4[%c0_5, %c0_6] : memref<16x96xf32, #tpu.memory_space<vmem>>, vector<16x96xf32>
    tpu.vector_store %arg4[%c0_5, %c0_6], %6 {strides = array<i32>} : memref<16x96xf32, #tpu.memory_space<vmem>>, vector<16x96xf32>,
    return
  }
  func.func @transform_0(%arg0: i32) -> (i32, i32) {
    %c0_i32 = arith.constant 0 : i32
    %c0_i32_0 = arith.constant 0 : i32
    return %arg0, %c0_i32 : i32, i32
  }
  func.func @transform_1(%arg0: i32) -> (i32, i32) {
    %c0_i32 = arith.constant 0 : i32
    %c0_i32_0 = arith.constant 0 : i32
    %c0_i32_1 = arith.constant 0 : i32
    return %c0_i32, %c0_i32_0 : i32, i32
  }
  func.func @transform_2(%arg0: i32) -> (i32, i32) {
    %c0_i32 = arith.constant 0 : i32
    %c0_i32_0 = arith.constant 0 : i32
    %c0_i32_1 = arith.constant 0 : i32
    return %c0_i32, %c0_i32_0 : i32, i32
  }
  func.func @transform_3(%arg0: i32) -> (i32, i32) {
    %c0_i32 = arith.constant 0 : i32
    %c0_i32_0 = arith.constant 0 : i32
    return %arg0, %c0_i32 : i32, i32
  }
}

module attributes {stable_mosaic.version = 11 : i64} {
  func.func @_ffn_ln_kernel(%arg0: i32, %arg1: memref<16x32xf32, #tpu.memory_space<vmem>>, %arg2: memref<32x2048xbf16, #tpu.memory_space<vmem>>, %arg3: memref<1x2048xf32, #tpu.memory_space<vmem>>, %arg4: memref<2048x32xbf16, #tpu.memory_space<vmem>>, %arg5: memref<1x32xf32, #tpu.memory_space<vmem>>, %arg6: memref<1x32xf32, #tpu.memory_space<vmem>>, %arg7: memref<1x32xf32, #tpu.memory_space<vmem>>, %arg8: memref<16x32xf32, #tpu.memory_space<vmem>>) attributes {dimension_semantics = [#tpu.dimension_semantics<parallel>], iteration_bounds = array<i64: 1>, scalar_prefetch = 0 : i64, scratch_operands = 0 : i64, tpu.core_type = #tpu.core_type<tc>, window_params = [{transform_indices = @transform_0, window_bounds = array<i64: 16, 32>}, {pipeline_mode = #tpu.pipeline_mode<synchronous>, transform_indices = @transform_1, window_bounds = array<i64: 32, 2048>}, {pipeline_mode = #tpu.pipeline_mode<synchronous>, transform_indices = @transform_2, window_bounds = array<i64: 1, 2048>}, {pipeline_mode = #tpu.pipeline_mode<synchronous>, transform_indices = @transform_3, window_bounds = array<i64: 2048, 32>}, {pipeline_mode = #tpu.pipeline_mode<synchronous>, transform_indices = @transform_4, window_bounds = array<i64: 1, 32>}, {pipeline_mode = #tpu.pipeline_mode<synchronous>, transform_indices = @transform_5, window_bounds = array<i64: 1, 32>}, {pipeline_mode = #tpu.pipeline_mode<synchronous>, transform_indices = @transform_6, window_bounds = array<i64: 1, 32>}, {transform_indices = @transform_7, window_bounds = array<i64: 16, 32>}]} {
    %c0 = arith.constant 0 : index
    %c0_0 = arith.constant 0 : index
    %0 = vector.load %arg1[%c0, %c0_0] : memref<16x32xf32, #tpu.memory_space<vmem>>, vector<16x32xf32>
    %1 = arith.truncf %0 : vector<16x32xf32> to vector<16x32xbf16>
    %c0_1 = arith.constant 0 : index
    %c0_2 = arith.constant 0 : index
    %2 = vector.load %arg2[%c0_1, %c0_2] : memref<32x2048xbf16, #tpu.memory_space<vmem>>, vector<32x2048xbf16>
    %cst = arith.constant dense<0.000000e+00> : vector<16x2048xf32>
    %3 = tpu.matmul %1, %2, %cst {dimension_numbers = #tpu.dot_dimension_numbers<[1], [0], [0], [1], [0, 0, 1, 1], [], []>} : vector<16x32xbf16>, vector<32x2048xbf16>, vector<16x2048xf32> -> vector<16x2048xf32>
    %c0_3 = arith.constant 0 : index
    %c0_4 = arith.constant 0 : index
    %4 = vector.load %arg3[%c0_3, %c0_4] : memref<1x2048xf32, #tpu.memory_space<vmem>>, vector<1x2048xf32>
    %5 = vector.broadcast %4 : vector<1x2048xf32> to vector<16x2048xf32>
    %6 = arith.addf %3, %5 : vector<16x2048xf32>
    %cst_5 = arith.constant 0.000000e+00 : f32
    %7 = vector.broadcast %cst_5 : f32 to vector<16x2048xf32>
    %8 = arith.maximumf %6, %7 : vector<16x2048xf32>
    %9 = arith.truncf %8 : vector<16x2048xf32> to vector<16x2048xbf16>
    %c0_6 = arith.constant 0 : index
    %c0_7 = arith.constant 0 : index
    %10 = vector.load %arg4[%c0_6, %c0_7] : memref<2048x32xbf16, #tpu.memory_space<vmem>>, vector<2048x32xbf16>
    %cst_8 = arith.constant dense<0.000000e+00> : vector<16x32xf32>
    %11 = tpu.matmul %9, %10, %cst_8 {dimension_numbers = #tpu.dot_dimension_numbers<[1], [0], [0], [1], [0, 0, 1, 1], [], []>} : vector<16x2048xbf16>, vector<2048x32xbf16>, vector<16x32xf32> -> vector<16x32xf32>
    %c0_9 = arith.constant 0 : index
    %c0_10 = arith.constant 0 : index
    %12 = vector.load %arg5[%c0_9, %c0_10] : memref<1x32xf32, #tpu.memory_space<vmem>>, vector<1x32xf32>
    %13 = vector.broadcast %12 : vector<1x32xf32> to vector<16x32xf32>
    %14 = arith.addf %11, %13 : vector<16x32xf32>
    %15 = arith.addf %0, %14 : vector<16x32xf32>
    %c0_11 = arith.constant 0 : index
    %c0_12 = arith.constant 0 : index
    %16 = vector.load %arg6[%c0_11, %c0_12] : memref<1x32xf32, #tpu.memory_space<vmem>>, vector<1x32xf32>
    %c0_13 = arith.constant 0 : index
    %c0_14 = arith.constant 0 : index
    %17 = vector.load %arg7[%c0_13, %c0_14] : memref<1x32xf32, #tpu.memory_space<vmem>>, vector<1x32xf32>
    %cst_15 = arith.constant dense<0.000000e+00> : vector<16xf32>
    %18 = vector.multi_reduction <add>, %15, %cst_15 [1] : vector<16x32xf32> to vector<16xf32>
    %19 = vector.shape_cast %18 : vector<16xf32> to vector<16x1xf32>
    %cst_16 = arith.constant 3.200000e+01 : f32
    %20 = vector.broadcast %cst_16 : f32 to vector<16x1xf32>
    %21 = arith.divf %19, %20 : vector<16x1xf32>
    %22 = vector.broadcast %21 : vector<16x1xf32> to vector<16x32xf32>
    %23 = arith.subf %15, %22 : vector<16x32xf32>
    %24 = arith.mulf %23, %23 : vector<16x32xf32>
    %cst_17 = arith.constant dense<0.000000e+00> : vector<16xf32>
    %25 = vector.multi_reduction <add>, %24, %cst_17 [1] : vector<16x32xf32> to vector<16xf32>
    %26 = vector.shape_cast %25 : vector<16xf32> to vector<16x1xf32>
    %cst_18 = arith.constant 3.200000e+01 : f32
    %27 = vector.broadcast %cst_18 : f32 to vector<16x1xf32>
    %28 = arith.divf %26, %27 : vector<16x1xf32>
    %29 = vector.broadcast %21 : vector<16x1xf32> to vector<16x32xf32>
    %30 = arith.subf %15, %29 : vector<16x32xf32>
    %cst_19 = arith.constant 9.99999974E-6 : f32
    %31 = vector.broadcast %cst_19 : f32 to vector<16x1xf32>
    %32 = arith.addf %28, %31 : vector<16x1xf32>
    %33 = math.rsqrt %32 : vector<16x1xf32>
    %34 = vector.broadcast %33 : vector<16x1xf32> to vector<16x32xf32>
    %35 = arith.mulf %30, %34 : vector<16x32xf32>
    %36 = vector.broadcast %16 : vector<1x32xf32> to vector<16x32xf32>
    %37 = arith.mulf %35, %36 : vector<16x32xf32>
    %38 = vector.broadcast %17 : vector<1x32xf32> to vector<16x32xf32>
    %39 = arith.addf %37, %38 : vector<16x32xf32>
    %c0_20 = arith.constant 0 : index
    %c0_21 = arith.constant 0 : index
    %40 = vector.load %arg8[%c0_20, %c0_21] : memref<16x32xf32, #tpu.memory_space<vmem>>, vector<16x32xf32>
    tpu.vector_store %arg8[%c0_20, %c0_21], %39 {strides = array<i32>} : memref<16x32xf32, #tpu.memory_space<vmem>>, vector<16x32xf32>,
    return
  }
  func.func @transform_0(%arg0: i32) -> (i32, i32) {
    %c0_i32 = arith.constant 0 : i32
    %c0_i32_0 = arith.constant 0 : i32
    return %arg0, %c0_i32 : i32, i32
  }
  func.func @transform_1(%arg0: i32) -> (i32, i32) {
    %c0_i32 = arith.constant 0 : i32
    %c0_i32_0 = arith.constant 0 : i32
    %c0_i32_1 = arith.constant 0 : i32
    return %c0_i32, %c0_i32_0 : i32, i32
  }
  func.func @transform_2(%arg0: i32) -> (i32, i32) {
    %c0_i32 = arith.constant 0 : i32
    %c0_i32_0 = arith.constant 0 : i32
    %c0_i32_1 = arith.constant 0 : i32
    return %c0_i32, %c0_i32_0 : i32, i32
  }
  func.func @transform_3(%arg0: i32) -> (i32, i32) {
    %c0_i32 = arith.constant 0 : i32
    %c0_i32_0 = arith.constant 0 : i32
    %c0_i32_1 = arith.constant 0 : i32
    return %c0_i32, %c0_i32_0 : i32, i32
  }
  func.func @transform_4(%arg0: i32) -> (i32, i32) {
    %c0_i32 = arith.constant 0 : i32
    %c0_i32_0 = arith.constant 0 : i32
    %c0_i32_1 = arith.constant 0 : i32
    return %c0_i32, %c0_i32_0 : i32, i32
  }
  func.func @transform_5(%arg0: i32) -> (i32, i32) {
    %c0_i32 = arith.constant 0 : i32
    %c0_i32_0 = arith.constant 0 : i32
    %c0_i32_1 = arith.constant 0 : i32
    return %c0_i32, %c0_i32_0 : i32, i32
  }
  func.func @transform_6(%arg0: i32) -> (i32, i32) {
    %c0_i32 = arith.constant 0 : i32
    %c0_i32_0 = arith.constant 0 : i32
    %c0_i32_1 = arith.constant 0 : i32
    return %c0_i32, %c0_i32_0 : i32, i32
  }
  func.func @transform_7(%arg0: i32) -> (i32, i32) {
    %c0_i32 = arith.constant 0 : i32
    %c0_i32_0 = arith.constant 0 : i32
    return %arg0, %c0_i32 : i32, i32
  }
}

module attributes {stable_mosaic.version = 11 : i64} {
  func.func @_mha_core_kernel(%arg0: memref<8x2x32xf32, #tpu.memory_space<vmem>>, %arg1: memref<8x2x96xf32, #tpu.memory_space<vmem>>, %arg2: memref<32x32xbf16, #tpu.memory_space<vmem>>, %arg3: memref<1x32xf32, #tpu.memory_space<vmem>>, %arg4: memref<1x32xf32, #tpu.memory_space<vmem>>, %arg5: memref<1x32xf32, #tpu.memory_space<vmem>>, %arg6: memref<8x2x32xf32, #tpu.memory_space<vmem>>) attributes {dimension_semantics = [], scalar_prefetch = 0 : i64, scratch_operands = 0 : i64, tpu.core_type = #tpu.core_type<tc>} {
    %c0 = arith.constant 0 : index
    %c0_0 = arith.constant 0 : index
    %c0_1 = arith.constant 0 : index
    %0 = vector.load %arg1[%c0, %c0_0, %c0_1] : memref<8x2x96xf32, #tpu.memory_space<vmem>>, vector<8x1x96xf32>
    %1 = vector.shape_cast %0 : vector<8x1x96xf32> to vector<8x96xf32>
    %2 = vector.extract_strided_slice %1 {offsets = [0, 0], sizes = [8, 8], strides = [1, 1]} : vector<8x96xf32> to vector<8x8xf32>
    %3 = arith.truncf %2 : vector<8x8xf32> to vector<8x8xbf16>
    %4 = vector.extract_strided_slice %1 {offsets = [0, 32], sizes = [8, 8], strides = [1, 1]} : vector<8x96xf32> to vector<8x8xf32>
    %5 = arith.truncf %4 : vector<8x8xf32> to vector<8x8xbf16>
    %6 = vector.extract_strided_slice %1 {offsets = [0, 64], sizes = [8, 8], strides = [1, 1]} : vector<8x96xf32> to vector<8x8xf32>
    %7 = arith.truncf %6 : vector<8x8xf32> to vector<8x8xbf16>
    %cst = arith.constant dense<0.000000e+00> : vector<8x8xf32>
    %8 = tpu.matmul %3, %5, %cst {dimension_numbers = #tpu.dot_dimension_numbers<[1], [1], [0], [0], [0, 0, 1, 0], [], []>} : vector<8x8xbf16>, vector<8x8xbf16>, vector<8x8xf32> -> vector<8x8xf32>
    %cst_2 = arith.constant 0.353553385 : f32
    %9 = vector.broadcast %cst_2 : f32 to vector<8x8xf32>
    %10 = arith.mulf %8, %9 : vector<8x8xf32>
    %cst_3 = arith.constant dense<0xFF800000> : vector<8xf32>
    %11 = vector.multi_reduction <maximumf>, %10, %cst_3 [1] : vector<8x8xf32> to vector<8xf32>
    %12 = vector.shape_cast %11 : vector<8xf32> to vector<8x1xf32>
    %13 = vector.broadcast %12 : vector<8x1xf32> to vector<8x8xf32>
    %14 = arith.subf %10, %13 : vector<8x8xf32>
    %15 = math.exp %14 : vector<8x8xf32>
    %cst_4 = arith.constant dense<0.000000e+00> : vector<8xf32>
    %16 = vector.multi_reduction <add>, %15, %cst_4 [1] : vector<8x8xf32> to vector<8xf32>
    %17 = vector.shape_cast %16 : vector<8xf32> to vector<8x1xf32>
    %18 = arith.truncf %15 : vector<8x8xf32> to vector<8x8xbf16>
    %cst_5 = arith.constant dense<0.000000e+00> : vector<8x8xf32>
    %19 = tpu.matmul %18, %7, %cst_5 {dimension_numbers = #tpu.dot_dimension_numbers<[1], [0], [0], [1], [0, 0, 1, 1], [], []>} : vector<8x8xbf16>, vector<8x8xbf16>, vector<8x8xf32> -> vector<8x8xf32>
    %20 = tpu.reciprocal %17 {approx = true} : vector<8x1xf32> -> vector<8x1xf32>
    %21 = vector.broadcast %20 : vector<8x1xf32> to vector<8x8xf32>
    %22 = arith.mulf %19, %21 : vector<8x8xf32>
    %23 = vector.extract_strided_slice %1 {offsets = [0, 8], sizes = [8, 8], strides = [1, 1]} : vector<8x96xf32> to vector<8x8xf32>
    %24 = arith.truncf %23 : vector<8x8xf32> to vector<8x8xbf16>
    %25 = vector.extract_strided_slice %1 {offsets = [0, 40], sizes = [8, 8], strides = [1, 1]} : vector<8x96xf32> to vector<8x8xf32>
    %26 = arith.truncf %25 : vector<8x8xf32> to vector<8x8xbf16>
    %27 = vector.extract_strided_slice %1 {offsets = [0, 72], sizes = [8, 8], strides = [1, 1]} : vector<8x96xf32> to vector<8x8xf32>
    %28 = arith.truncf %27 : vector<8x8xf32> to vector<8x8xbf16>
    %cst_6 = arith.constant dense<0.000000e+00> : vector<8x8xf32>
    %29 = tpu.matmul %24, %26, %cst_6 {dimension_numbers = #tpu.dot_dimension_numbers<[1], [1], [0], [0], [0, 0, 1, 0], [], []>} : vector<8x8xbf16>, vector<8x8xbf16>, vector<8x8xf32> -> vector<8x8xf32>
    %cst_7 = arith.constant 0.353553385 : f32
    %30 = vector.broadcast %cst_7 : f32 to vector<8x8xf32>
    %31 = arith.mulf %29, %30 : vector<8x8xf32>
    %cst_8 = arith.constant dense<0xFF800000> : vector<8xf32>
    %32 = vector.multi_reduction <maximumf>, %31, %cst_8 [1] : vector<8x8xf32> to vector<8xf32>
    %33 = vector.shape_cast %32 : vector<8xf32> to vector<8x1xf32>
    %34 = vector.broadcast %33 : vector<8x1xf32> to vector<8x8xf32>
    %35 = arith.subf %31, %34 : vector<8x8xf32>
    %36 = math.exp %35 : vector<8x8xf32>
    %cst_9 = arith.constant dense<0.000000e+00> : vector<8xf32>
    %37 = vector.multi_reduction <add>, %36, %cst_9 [1] : vector<8x8xf32> to vector<8xf32>
    %38 = vector.shape_cast %37 : vector<8xf32> to vector<8x1xf32>
    %39 = arith.truncf %36 : vector<8x8xf32> to vector<8x8xbf16>
    %cst_10 = arith.constant dense<0.000000e+00> : vector<8x8xf32>
    %40 = tpu.matmul %39, %28, %cst_10 {dimension_numbers = #tpu.dot_dimension_numbers<[1], [0], [0], [1], [0, 0, 1, 1], [], []>} : vector<8x8xbf16>, vector<8x8xbf16>, vector<8x8xf32> -> vector<8x8xf32>
    %41 = tpu.reciprocal %38 {approx = true} : vector<8x1xf32> -> vector<8x1xf32>
    %42 = vector.broadcast %41 : vector<8x1xf32> to vector<8x8xf32>
    %43 = arith.mulf %40, %42 : vector<8x8xf32>
    %44 = vector.extract_strided_slice %1 {offsets = [0, 16], sizes = [8, 8], strides = [1, 1]} : vector<8x96xf32> to vector<8x8xf32>
    %45 = arith.truncf %44 : vector<8x8xf32> to vector<8x8xbf16>
    %46 = vector.extract_strided_slice %1 {offsets = [0, 48], sizes = [8, 8], strides = [1, 1]} : vector<8x96xf32> to vector<8x8xf32>
    %47 = arith.truncf %46 : vector<8x8xf32> to vector<8x8xbf16>
    %48 = vector.extract_strided_slice %1 {offsets = [0, 80], sizes = [8, 8], strides = [1, 1]} : vector<8x96xf32> to vector<8x8xf32>
    %49 = arith.truncf %48 : vector<8x8xf32> to vector<8x8xbf16>
    %cst_11 = arith.constant dense<0.000000e+00> : vector<8x8xf32>
    %50 = tpu.matmul %45, %47, %cst_11 {dimension_numbers = #tpu.dot_dimension_numbers<[1], [1], [0], [0], [0, 0, 1, 0], [], []>} : vector<8x8xbf16>, vector<8x8xbf16>, vector<8x8xf32> -> vector<8x8xf32>
    %cst_12 = arith.constant 0.353553385 : f32
    %51 = vector.broadcast %cst_12 : f32 to vector<8x8xf32>
    %52 = arith.mulf %50, %51 : vector<8x8xf32>
    %cst_13 = arith.constant dense<0xFF800000> : vector<8xf32>
    %53 = vector.multi_reduction <maximumf>, %52, %cst_13 [1] : vector<8x8xf32> to vector<8xf32>
    %54 = vector.shape_cast %53 : vector<8xf32> to vector<8x1xf32>
    %55 = vector.broadcast %54 : vector<8x1xf32> to vector<8x8xf32>
    %56 = arith.subf %52, %55 : vector<8x8xf32>
    %57 = math.exp %56 : vector<8x8xf32>
    %cst_14 = arith.constant dense<0.000000e+00> : vector<8xf32>
    %58 = vector.multi_reduction <add>, %57, %cst_14 [1] : vector<8x8xf32> to vector<8xf32>
    %59 = vector.shape_cast %58 : vector<8xf32> to vector<8x1xf32>
    %60 = arith.truncf %57 : vector<8x8xf32> to vector<8x8xbf16>
    %cst_15 = arith.constant dense<0.000000e+00> : vector<8x8xf32>
    %61 = tpu.matmul %60, %49, %cst_15 {dimension_numbers = #tpu.dot_dimension_numbers<[1], [0], [0], [1], [0, 0, 1, 1], [], []>} : vector<8x8xbf16>, vector<8x8xbf16>, vector<8x8xf32> -> vector<8x8xf32>
    %62 = tpu.reciprocal %59 {approx = true} : vector<8x1xf32> -> vector<8x1xf32>
    %63 = vector.broadcast %62 : vector<8x1xf32> to vector<8x8xf32>
    %64 = arith.mulf %61, %63 : vector<8x8xf32>
    %65 = vector.extract_strided_slice %1 {offsets = [0, 24], sizes = [8, 8], strides = [1, 1]} : vector<8x96xf32> to vector<8x8xf32>
    %66 = arith.truncf %65 : vector<8x8xf32> to vector<8x8xbf16>
    %67 = vector.extract_strided_slice %1 {offsets = [0, 56], sizes = [8, 8], strides = [1, 1]} : vector<8x96xf32> to vector<8x8xf32>
    %68 = arith.truncf %67 : vector<8x8xf32> to vector<8x8xbf16>
    %69 = vector.extract_strided_slice %1 {offsets = [0, 88], sizes = [8, 8], strides = [1, 1]} : vector<8x96xf32> to vector<8x8xf32>
    %70 = arith.truncf %69 : vector<8x8xf32> to vector<8x8xbf16>
    %cst_16 = arith.constant dense<0.000000e+00> : vector<8x8xf32>
    %71 = tpu.matmul %66, %68, %cst_16 {dimension_numbers = #tpu.dot_dimension_numbers<[1], [1], [0], [0], [0, 0, 1, 0], [], []>} : vector<8x8xbf16>, vector<8x8xbf16>, vector<8x8xf32> -> vector<8x8xf32>
    %cst_17 = arith.constant 0.353553385 : f32
    %72 = vector.broadcast %cst_17 : f32 to vector<8x8xf32>
    %73 = arith.mulf %71, %72 : vector<8x8xf32>
    %cst_18 = arith.constant dense<0xFF800000> : vector<8xf32>
    %74 = vector.multi_reduction <maximumf>, %73, %cst_18 [1] : vector<8x8xf32> to vector<8xf32>
    %75 = vector.shape_cast %74 : vector<8xf32> to vector<8x1xf32>
    %76 = vector.broadcast %75 : vector<8x1xf32> to vector<8x8xf32>
    %77 = arith.subf %73, %76 : vector<8x8xf32>
    %78 = math.exp %77 : vector<8x8xf32>
    %cst_19 = arith.constant dense<0.000000e+00> : vector<8xf32>
    %79 = vector.multi_reduction <add>, %78, %cst_19 [1] : vector<8x8xf32> to vector<8xf32>
    %80 = vector.shape_cast %79 : vector<8xf32> to vector<8x1xf32>
    %81 = arith.truncf %78 : vector<8x8xf32> to vector<8x8xbf16>
    %cst_20 = arith.constant dense<0.000000e+00> : vector<8x8xf32>
    %82 = tpu.matmul %81, %70, %cst_20 {dimension_numbers = #tpu.dot_dimension_numbers<[1], [0], [0], [1], [0, 0, 1, 1], [], []>} : vector<8x8xbf16>, vector<8x8xbf16>, vector<8x8xf32> -> vector<8x8xf32>
    %83 = tpu.reciprocal %80 {approx = true} : vector<8x1xf32> -> vector<8x1xf32>
    %84 = vector.broadcast %83 : vector<8x1xf32> to vector<8x8xf32>
    %85 = arith.mulf %82, %84 : vector<8x8xf32>
    %86 = tpu.concatenate %22, %43, %64, %85 in 1 : vector<8x8xf32>, vector<8x8xf32>, vector<8x8xf32>, vector<8x8xf32> -> vector<8x32xf32>
    %87 = arith.truncf %86 : vector<8x32xf32> to vector<8x32xbf16>
    %c0_21 = arith.constant 0 : index
    %c0_22 = arith.constant 0 : index
    %88 = vector.load %arg2[%c0_21, %c0_22] : memref<32x32xbf16, #tpu.memory_space<vmem>>, vector<32x32xbf16>
    %cst_23 = arith.constant dense<0.000000e+00> : vector<8x32xf32>
    %89 = tpu.matmul %87, %88, %cst_23 {dimension_numbers = #tpu.dot_dimension_numbers<[1], [0], [0], [1], [0, 0, 1, 1], [], []>} : vector<8x32xbf16>, vector<32x32xbf16>, vector<8x32xf32> -> vector<8x32xf32>
    %c0_24 = arith.constant 0 : index
    %c0_25 = arith.constant 0 : index
    %90 = vector.load %arg3[%c0_24, %c0_25] : memref<1x32xf32, #tpu.memory_space<vmem>>, vector<1x32xf32>
    %91 = vector.broadcast %90 : vector<1x32xf32> to vector<8x32xf32>
    %92 = arith.addf %89, %91 : vector<8x32xf32>
    %c0_26 = arith.constant 0 : index
    %c0_27 = arith.constant 0 : index
    %c0_28 = arith.constant 0 : index
    %93 = vector.load %arg0[%c0_26, %c0_27, %c0_28] : memref<8x2x32xf32, #tpu.memory_space<vmem>>, vector<8x1x32xf32>
    %94 = vector.shape_cast %93 : vector<8x1x32xf32> to vector<8x32xf32>
    %95 = arith.addf %94, %92 : vector<8x32xf32>
    %c0_29 = arith.constant 0 : index
    %c0_30 = arith.constant 0 : index
    %96 = vector.load %arg4[%c0_29, %c0_30] : memref<1x32xf32, #tpu.memory_space<vmem>>, vector<1x32xf32>
    %c0_31 = arith.constant 0 : index
    %c0_32 = arith.constant 0 : index
    %97 = vector.load %arg5[%c0_31, %c0_32] : memref<1x32xf32, #tpu.memory_space<vmem>>, vector<1x32xf32>
    %cst_33 = arith.constant dense<0.000000e+00> : vector<8xf32>
    %98 = vector.multi_reduction <add>, %95, %cst_33 [1] : vector<8x32xf32> to vector<8xf32>
    %99 = vector.shape_cast %98 : vector<8xf32> to vector<8x1xf32>
    %cst_34 = arith.constant 3.200000e+01 : f32
    %100 = vector.broadcast %cst_34 : f32 to vector<8x1xf32>
    %101 = arith.divf %99, %100 : vector<8x1xf32>
    %102 = vector.broadcast %101 : vector<8x1xf32> to vector<8x32xf32>
    %103 = arith.subf %95, %102 : vector<8x32xf32>
    %104 = arith.mulf %103, %103 : vector<8x32xf32>
    %cst_35 = arith.constant dense<0.000000e+00> : vector<8xf32>
    %105 = vector.multi_reduction <add>, %104, %cst_35 [1] : vector<8x32xf32> to vector<8xf32>
    %106 = vector.shape_cast %105 : vector<8xf32> to vector<8x1xf32>
    %cst_36 = arith.constant 3.200000e+01 : f32
    %107 = vector.broadcast %cst_36 : f32 to vector<8x1xf32>
    %108 = arith.divf %106, %107 : vector<8x1xf32>
    %109 = vector.broadcast %101 : vector<8x1xf32> to vector<8x32xf32>
    %110 = arith.subf %95, %109 : vector<8x32xf32>
    %cst_37 = arith.constant 9.99999974E-6 : f32
    %111 = vector.broadcast %cst_37 : f32 to vector<8x1xf32>
    %112 = arith.addf %108, %111 : vector<8x1xf32>
    %113 = math.rsqrt %112 : vector<8x1xf32>
    %114 = vector.broadcast %113 : vector<8x1xf32> to vector<8x32xf32>
    %115 = arith.mulf %110, %114 : vector<8x32xf32>
    %116 = vector.broadcast %96 : vector<1x32xf32> to vector<8x32xf32>
    %117 = arith.mulf %115, %116 : vector<8x32xf32>
    %118 = vector.broadcast %97 : vector<1x32xf32> to vector<8x32xf32>
    %119 = arith.addf %117, %118 : vector<8x32xf32>
    %c0_38 = arith.constant 0 : index
    %c0_39 = arith.constant 0 : index
    %c0_40 = arith.constant 0 : index
    %120 = vector.load %arg6[%c0_38, %c0_39, %c0_40] : memref<8x2x32xf32, #tpu.memory_space<vmem>>, vector<8x1x32xf32>
    %121 = vector.shape_cast %120 : vector<8x1x32xf32> to vector<8x32xf32>
    %122 = vector.shape_cast %119 : vector<8x32xf32> to vector<8x1x32xf32>
    tpu.vector_store %arg6[%c0_38, %c0_39, %c0_40], %122 {strides = array<i32>} : memref<8x2x32xf32, #tpu.memory_space<vmem>>, vector<8x1x32xf32>,
    %c0_41 = arith.constant 0 : index
    %c1 = arith.constant 1 : index
    %c0_42 = arith.constant 0 : index
    %123 = vector.load %arg1[%c0_41, %c1, %c0_42] : memref<8x2x96xf32, #tpu.memory_space<vmem>>, vector<8x1x96xf32>
    %124 = vector.shape_cast %123 : vector<8x1x96xf32> to vector<8x96xf32>
    %125 = vector.extract_strided_slice %124 {offsets = [0, 0], sizes = [8, 8], strides = [1, 1]} : vector<8x96xf32> to vector<8x8xf32>
    %126 = arith.truncf %125 : vector<8x8xf32> to vector<8x8xbf16>
    %127 = vector.extract_strided_slice %124 {offsets = [0, 32], sizes = [8, 8], strides = [1, 1]} : vector<8x96xf32> to vector<8x8xf32>
    %128 = arith.truncf %127 : vector<8x8xf32> to vector<8x8xbf16>
    %129 = vector.extract_strided_slice %124 {offsets = [0, 64], sizes = [8, 8], strides = [1, 1]} : vector<8x96xf32> to vector<8x8xf32>
    %130 = arith.truncf %129 : vector<8x8xf32> to vector<8x8xbf16>
    %cst_43 = arith.constant dense<0.000000e+00> : vector<8x8xf32>
    %131 = tpu.matmul %126, %128, %cst_43 {dimension_numbers = #tpu.dot_dimension_numbers<[1], [1], [0], [0], [0, 0, 1, 0], [], []>} : vector<8x8xbf16>, vector<8x8xbf16>, vector<8x8xf32> -> vector<8x8xf32>
    %cst_44 = arith.constant 0.353553385 : f32
    %132 = vector.broadcast %cst_44 : f32 to vector<8x8xf32>
    %133 = arith.mulf %131, %132 : vector<8x8xf32>
    %cst_45 = arith.constant dense<0xFF800000> : vector<8xf32>
    %134 = vector.multi_reduction <maximumf>, %133, %cst_45 [1] : vector<8x8xf32> to vector<8xf32>
    %135 = vector.shape_cast %134 : vector<8xf32> to vector<8x1xf32>
    %136 = vector.broadcast %135 : vector<8x1xf32> to vector<8x8xf32>
    %137 = arith.subf %133, %136 : vector<8x8xf32>
    %138 = math.exp %137 : vector<8x8xf32>
    %cst_46 = arith.constant dense<0.000000e+00> : vector<8xf32>
    %139 = vector.multi_reduction <add>, %138, %cst_46 [1] : vector<8x8xf32> to vector<8xf32>
    %140 = vector.shape_cast %139 : vector<8xf32> to vector<8x1xf32>
    %141 = arith.truncf %138 : vector<8x8xf32> to vector<8x8xbf16>
    %cst_47 = arith.constant dense<0.000000e+00> : vector<8x8xf32>
    %142 = tpu.matmul %141, %130, %cst_47 {dimension_numbers = #tpu.dot_dimension_numbers<[1], [0], [0], [1], [0, 0, 1, 1], [], []>} : vector<8x8xbf16>, vector<8x8xbf16>, vector<8x8xf32> -> vector<8x8xf32>
    %143 = tpu.reciprocal %140 {approx = true} : vector<8x1xf32> -> vector<8x1xf32>
    %144 = vector.broadcast %143 : vector<8x1xf32> to vector<8x8xf32>
    %145 = arith.mulf %142, %144 : vector<8x8xf32>
    %146 = vector.extract_strided_slice %124 {offsets = [0, 8], sizes = [8, 8], strides = [1, 1]} : vector<8x96xf32> to vector<8x8xf32>
    %147 = arith.truncf %146 : vector<8x8xf32> to vector<8x8xbf16>
    %148 = vector.extract_strided_slice %124 {offsets = [0, 40], sizes = [8, 8], strides = [1, 1]} : vector<8x96xf32> to vector<8x8xf32>
    %149 = arith.truncf %148 : vector<8x8xf32> to vector<8x8xbf16>
    %150 = vector.extract_strided_slice %124 {offsets = [0, 72], sizes = [8, 8], strides = [1, 1]} : vector<8x96xf32> to vector<8x8xf32>
    %151 = arith.truncf %150 : vector<8x8xf32> to vector<8x8xbf16>
    %cst_48 = arith.constant dense<0.000000e+00> : vector<8x8xf32>
    %152 = tpu.matmul %147, %149, %cst_48 {dimension_numbers = #tpu.dot_dimension_numbers<[1], [1], [0], [0], [0, 0, 1, 0], [], []>} : vector<8x8xbf16>, vector<8x8xbf16>, vector<8x8xf32> -> vector<8x8xf32>
    %cst_49 = arith.constant 0.353553385 : f32
    %153 = vector.broadcast %cst_49 : f32 to vector<8x8xf32>
    %154 = arith.mulf %152, %153 : vector<8x8xf32>
    %cst_50 = arith.constant dense<0xFF800000> : vector<8xf32>
    %155 = vector.multi_reduction <maximumf>, %154, %cst_50 [1] : vector<8x8xf32> to vector<8xf32>
    %156 = vector.shape_cast %155 : vector<8xf32> to vector<8x1xf32>
    %157 = vector.broadcast %156 : vector<8x1xf32> to vector<8x8xf32>
    %158 = arith.subf %154, %157 : vector<8x8xf32>
    %159 = math.exp %158 : vector<8x8xf32>
    %cst_51 = arith.constant dense<0.000000e+00> : vector<8xf32>
    %160 = vector.multi_reduction <add>, %159, %cst_51 [1] : vector<8x8xf32> to vector<8xf32>
    %161 = vector.shape_cast %160 : vector<8xf32> to vector<8x1xf32>
    %162 = arith.truncf %159 : vector<8x8xf32> to vector<8x8xbf16>
    %cst_52 = arith.constant dense<0.000000e+00> : vector<8x8xf32>
    %163 = tpu.matmul %162, %151, %cst_52 {dimension_numbers = #tpu.dot_dimension_numbers<[1], [0], [0], [1], [0, 0, 1, 1], [], []>} : vector<8x8xbf16>, vector<8x8xbf16>, vector<8x8xf32> -> vector<8x8xf32>
    %164 = tpu.reciprocal %161 {approx = true} : vector<8x1xf32> -> vector<8x1xf32>
    %165 = vector.broadcast %164 : vector<8x1xf32> to vector<8x8xf32>
    %166 = arith.mulf %163, %165 : vector<8x8xf32>
    %167 = vector.extract_strided_slice %124 {offsets = [0, 16], sizes = [8, 8], strides = [1, 1]} : vector<8x96xf32> to vector<8x8xf32>
    %168 = arith.truncf %167 : vector<8x8xf32> to vector<8x8xbf16>
    %169 = vector.extract_strided_slice %124 {offsets = [0, 48], sizes = [8, 8], strides = [1, 1]} : vector<8x96xf32> to vector<8x8xf32>
    %170 = arith.truncf %169 : vector<8x8xf32> to vector<8x8xbf16>
    %171 = vector.extract_strided_slice %124 {offsets = [0, 80], sizes = [8, 8], strides = [1, 1]} : vector<8x96xf32> to vector<8x8xf32>
    %172 = arith.truncf %171 : vector<8x8xf32> to vector<8x8xbf16>
    %cst_53 = arith.constant dense<0.000000e+00> : vector<8x8xf32>
    %173 = tpu.matmul %168, %170, %cst_53 {dimension_numbers = #tpu.dot_dimension_numbers<[1], [1], [0], [0], [0, 0, 1, 0], [], []>} : vector<8x8xbf16>, vector<8x8xbf16>, vector<8x8xf32> -> vector<8x8xf32>
    %cst_54 = arith.constant 0.353553385 : f32
    %174 = vector.broadcast %cst_54 : f32 to vector<8x8xf32>
    %175 = arith.mulf %173, %174 : vector<8x8xf32>
    %cst_55 = arith.constant dense<0xFF800000> : vector<8xf32>
    %176 = vector.multi_reduction <maximumf>, %175, %cst_55 [1] : vector<8x8xf32> to vector<8xf32>
    %177 = vector.shape_cast %176 : vector<8xf32> to vector<8x1xf32>
    %178 = vector.broadcast %177 : vector<8x1xf32> to vector<8x8xf32>
    %179 = arith.subf %175, %178 : vector<8x8xf32>
    %180 = math.exp %179 : vector<8x8xf32>
    %cst_56 = arith.constant dense<0.000000e+00> : vector<8xf32>
    %181 = vector.multi_reduction <add>, %180, %cst_56 [1] : vector<8x8xf32> to vector<8xf32>
    %182 = vector.shape_cast %181 : vector<8xf32> to vector<8x1xf32>
    %183 = arith.truncf %180 : vector<8x8xf32> to vector<8x8xbf16>
    %cst_57 = arith.constant dense<0.000000e+00> : vector<8x8xf32>
    %184 = tpu.matmul %183, %172, %cst_57 {dimension_numbers = #tpu.dot_dimension_numbers<[1], [0], [0], [1], [0, 0, 1, 1], [], []>} : vector<8x8xbf16>, vector<8x8xbf16>, vector<8x8xf32> -> vector<8x8xf32>
    %185 = tpu.reciprocal %182 {approx = true} : vector<8x1xf32> -> vector<8x1xf32>
    %186 = vector.broadcast %185 : vector<8x1xf32> to vector<8x8xf32>
    %187 = arith.mulf %184, %186 : vector<8x8xf32>
    %188 = vector.extract_strided_slice %124 {offsets = [0, 24], sizes = [8, 8], strides = [1, 1]} : vector<8x96xf32> to vector<8x8xf32>
    %189 = arith.truncf %188 : vector<8x8xf32> to vector<8x8xbf16>
    %190 = vector.extract_strided_slice %124 {offsets = [0, 56], sizes = [8, 8], strides = [1, 1]} : vector<8x96xf32> to vector<8x8xf32>
    %191 = arith.truncf %190 : vector<8x8xf32> to vector<8x8xbf16>
    %192 = vector.extract_strided_slice %124 {offsets = [0, 88], sizes = [8, 8], strides = [1, 1]} : vector<8x96xf32> to vector<8x8xf32>
    %193 = arith.truncf %192 : vector<8x8xf32> to vector<8x8xbf16>
    %cst_58 = arith.constant dense<0.000000e+00> : vector<8x8xf32>
    %194 = tpu.matmul %189, %191, %cst_58 {dimension_numbers = #tpu.dot_dimension_numbers<[1], [1], [0], [0], [0, 0, 1, 0], [], []>} : vector<8x8xbf16>, vector<8x8xbf16>, vector<8x8xf32> -> vector<8x8xf32>
    %cst_59 = arith.constant 0.353553385 : f32
    %195 = vector.broadcast %cst_59 : f32 to vector<8x8xf32>
    %196 = arith.mulf %194, %195 : vector<8x8xf32>
    %cst_60 = arith.constant dense<0xFF800000> : vector<8xf32>
    %197 = vector.multi_reduction <maximumf>, %196, %cst_60 [1] : vector<8x8xf32> to vector<8xf32>
    %198 = vector.shape_cast %197 : vector<8xf32> to vector<8x1xf32>
    %199 = vector.broadcast %198 : vector<8x1xf32> to vector<8x8xf32>
    %200 = arith.subf %196, %199 : vector<8x8xf32>
    %201 = math.exp %200 : vector<8x8xf32>
    %cst_61 = arith.constant dense<0.000000e+00> : vector<8xf32>
    %202 = vector.multi_reduction <add>, %201, %cst_61 [1] : vector<8x8xf32> to vector<8xf32>
    %203 = vector.shape_cast %202 : vector<8xf32> to vector<8x1xf32>
    %204 = arith.truncf %201 : vector<8x8xf32> to vector<8x8xbf16>
    %cst_62 = arith.constant dense<0.000000e+00> : vector<8x8xf32>
    %205 = tpu.matmul %204, %193, %cst_62 {dimension_numbers = #tpu.dot_dimension_numbers<[1], [0], [0], [1], [0, 0, 1, 1], [], []>} : vector<8x8xbf16>, vector<8x8xbf16>, vector<8x8xf32> -> vector<8x8xf32>
    %206 = tpu.reciprocal %203 {approx = true} : vector<8x1xf32> -> vector<8x1xf32>
    %207 = vector.broadcast %206 : vector<8x1xf32> to vector<8x8xf32>
    %208 = arith.mulf %205, %207 : vector<8x8xf32>
    %209 = tpu.concatenate %145, %166, %187, %208 in 1 : vector<8x8xf32>, vector<8x8xf32>, vector<8x8xf32>, vector<8x8xf32> -> vector<8x32xf32>
    %210 = arith.truncf %209 : vector<8x32xf32> to vector<8x32xbf16>
    %c0_63 = arith.constant 0 : index
    %c0_64 = arith.constant 0 : index
    %211 = vector.load %arg2[%c0_63, %c0_64] : memref<32x32xbf16, #tpu.memory_space<vmem>>, vector<32x32xbf16>
    %cst_65 = arith.constant dense<0.000000e+00> : vector<8x32xf32>
    %212 = tpu.matmul %210, %211, %cst_65 {dimension_numbers = #tpu.dot_dimension_numbers<[1], [0], [0], [1], [0, 0, 1, 1], [], []>} : vector<8x32xbf16>, vector<32x32xbf16>, vector<8x32xf32> -> vector<8x32xf32>
    %c0_66 = arith.constant 0 : index
    %c0_67 = arith.constant 0 : index
    %213 = vector.load %arg3[%c0_66, %c0_67] : memref<1x32xf32, #tpu.memory_space<vmem>>, vector<1x32xf32>
    %214 = vector.broadcast %213 : vector<1x32xf32> to vector<8x32xf32>
    %215 = arith.addf %212, %214 : vector<8x32xf32>
    %c0_68 = arith.constant 0 : index
    %c1_69 = arith.constant 1 : index
    %c0_70 = arith.constant 0 : index
    %216 = vector.load %arg0[%c0_68, %c1_69, %c0_70] : memref<8x2x32xf32, #tpu.memory_space<vmem>>, vector<8x1x32xf32>
    %217 = vector.shape_cast %216 : vector<8x1x32xf32> to vector<8x32xf32>
    %218 = arith.addf %217, %215 : vector<8x32xf32>
    %c0_71 = arith.constant 0 : index
    %c0_72 = arith.constant 0 : index
    %219 = vector.load %arg4[%c0_71, %c0_72] : memref<1x32xf32, #tpu.memory_space<vmem>>, vector<1x32xf32>
    %c0_73 = arith.constant 0 : index
    %c0_74 = arith.constant 0 : index
    %220 = vector.load %arg5[%c0_73, %c0_74] : memref<1x32xf32, #tpu.memory_space<vmem>>, vector<1x32xf32>
    %cst_75 = arith.constant dense<0.000000e+00> : vector<8xf32>
    %221 = vector.multi_reduction <add>, %218, %cst_75 [1] : vector<8x32xf32> to vector<8xf32>
    %222 = vector.shape_cast %221 : vector<8xf32> to vector<8x1xf32>
    %cst_76 = arith.constant 3.200000e+01 : f32
    %223 = vector.broadcast %cst_76 : f32 to vector<8x1xf32>
    %224 = arith.divf %222, %223 : vector<8x1xf32>
    %225 = vector.broadcast %224 : vector<8x1xf32> to vector<8x32xf32>
    %226 = arith.subf %218, %225 : vector<8x32xf32>
    %227 = arith.mulf %226, %226 : vector<8x32xf32>
    %cst_77 = arith.constant dense<0.000000e+00> : vector<8xf32>
    %228 = vector.multi_reduction <add>, %227, %cst_77 [1] : vector<8x32xf32> to vector<8xf32>
    %229 = vector.shape_cast %228 : vector<8xf32> to vector<8x1xf32>
    %cst_78 = arith.constant 3.200000e+01 : f32
    %230 = vector.broadcast %cst_78 : f32 to vector<8x1xf32>
    %231 = arith.divf %229, %230 : vector<8x1xf32>
    %232 = vector.broadcast %224 : vector<8x1xf32> to vector<8x32xf32>
    %233 = arith.subf %218, %232 : vector<8x32xf32>
    %cst_79 = arith.constant 9.99999974E-6 : f32
    %234 = vector.broadcast %cst_79 : f32 to vector<8x1xf32>
    %235 = arith.addf %231, %234 : vector<8x1xf32>
    %236 = math.rsqrt %235 : vector<8x1xf32>
    %237 = vector.broadcast %236 : vector<8x1xf32> to vector<8x32xf32>
    %238 = arith.mulf %233, %237 : vector<8x32xf32>
    %239 = vector.broadcast %219 : vector<1x32xf32> to vector<8x32xf32>
    %240 = arith.mulf %238, %239 : vector<8x32xf32>
    %241 = vector.broadcast %220 : vector<1x32xf32> to vector<8x32xf32>
    %242 = arith.addf %240, %241 : vector<8x32xf32>
    %c0_80 = arith.constant 0 : index
    %c1_81 = arith.constant 1 : index
    %c0_82 = arith.constant 0 : index
    %243 = vector.load %arg6[%c0_80, %c1_81, %c0_82] : memref<8x2x32xf32, #tpu.memory_space<vmem>>, vector<8x1x32xf32>
    %244 = vector.shape_cast %243 : vector<8x1x32xf32> to vector<8x32xf32>
    %245 = vector.shape_cast %242 : vector<8x32xf32> to vector<8x1x32xf32>
    tpu.vector_store %arg6[%c0_80, %c1_81, %c0_82], %245 {strides = array<i32>} : memref<8x2x32xf32, #tpu.memory_space<vmem>>, vector<8x1x32xf32>,
    return
  }
}

module attributes {stable_mosaic.version = 11 : i64} {
  func.func @_qkv_proj_kernel(%arg0: i32, %arg1: memref<16x32xf32, #tpu.memory_space<vmem>>, %arg2: memref<32x96xbf16, #tpu.memory_space<vmem>>, %arg3: memref<1x96xf32, #tpu.memory_space<vmem>>, %arg4: memref<16x96xf32, #tpu.memory_space<vmem>>) attributes {dimension_semantics = [#tpu.dimension_semantics<parallel>], iteration_bounds = array<i64: 1>, scalar_prefetch = 0 : i64, scratch_operands = 0 : i64, tpu.core_type = #tpu.core_type<tc>, window_params = [{transform_indices = @transform_0, window_bounds = array<i64: 16, 32>}, {pipeline_mode = #tpu.pipeline_mode<synchronous>, transform_indices = @transform_1, window_bounds = array<i64: 32, 96>}, {pipeline_mode = #tpu.pipeline_mode<synchronous>, transform_indices = @transform_2, window_bounds = array<i64: 1, 96>}, {transform_indices = @transform_3, window_bounds = array<i64: 16, 96>}]} {
    %c0 = arith.constant 0 : index
    %c0_0 = arith.constant 0 : index
    %0 = vector.load %arg1[%c0, %c0_0] : memref<16x32xf32, #tpu.memory_space<vmem>>, vector<16x32xf32>
    %1 = arith.truncf %0 : vector<16x32xf32> to vector<16x32xbf16>
    %c0_1 = arith.constant 0 : index
    %c0_2 = arith.constant 0 : index
    %2 = vector.load %arg2[%c0_1, %c0_2] : memref<32x96xbf16, #tpu.memory_space<vmem>>, vector<32x96xbf16>
    %cst = arith.constant dense<0.000000e+00> : vector<16x96xf32>
    %3 = tpu.matmul %1, %2, %cst {dimension_numbers = #tpu.dot_dimension_numbers<[1], [0], [0], [1], [0, 0, 1, 1], [], []>} : vector<16x32xbf16>, vector<32x96xbf16>, vector<16x96xf32> -> vector<16x96xf32>
    %c0_3 = arith.constant 0 : index
    %c0_4 = arith.constant 0 : index
    %4 = vector.load %arg3[%c0_3, %c0_4] : memref<1x96xf32, #tpu.memory_space<vmem>>, vector<1x96xf32>
    %5 = vector.broadcast %4 : vector<1x96xf32> to vector<16x96xf32>
    %6 = arith.addf %3, %5 : vector<16x96xf32>
    %c0_5 = arith.constant 0 : index
    %c0_6 = arith.constant 0 : index
    %7 = vector.load %arg4[%c0_5, %c0_6] : memref<16x96xf32, #tpu.memory_space<vmem>>, vector<16x96xf32>
    tpu.vector_store %arg4[%c0_5, %c0_6], %6 {strides = array<i32>} : memref<16x96xf32, #tpu.memory_space<vmem>>, vector<16x96xf32>,
    return
  }
  func.func @transform_0(%arg0: i32) -> (i32, i32) {
    %c0_i32 = arith.constant 0 : i32
    %c0_i32_0 = arith.constant 0 : i32
    return %arg0, %c0_i32 : i32, i32
  }
  func.func @transform_1(%arg0: i32) -> (i32, i32) {
    %c0_i32 = arith.constant 0 : i32
    %c0_i32_0 = arith.constant 0 : i32
    %c0_i32_1 = arith.constant 0 : i32
    return %c0_i32, %c0_i32_0 : i32, i32
  }
  func.func @transform_2(%arg0: i32) -> (i32, i32) {
    %c0_i32 = arith.constant 0 : i32
    %c0_i32_0 = arith.constant 0 : i32
    %c0_i32_1 = arith.constant 0 : i32
    return %c0_i32, %c0_i32_0 : i32, i32
  }
  func.func @transform_3(%arg0: i32) -> (i32, i32) {
    %c0_i32 = arith.constant 0 : i32
    %c0_i32_0 = arith.constant 0 : i32
    return %arg0, %c0_i32 : i32, i32
  }
}

module attributes {stable_mosaic.version = 11 : i64} {
  func.func @_classifier_kernel(%arg0: i32, %arg1: memref<16x32xf32, #tpu.memory_space<vmem>>, %arg2: memref<32x32xbf16, #tpu.memory_space<vmem>>, %arg3: memref<1x32xf32, #tpu.memory_space<vmem>>, %arg4: memref<32x128xbf16, #tpu.memory_space<vmem>>, %arg5: memref<1x128xf32, #tpu.memory_space<vmem>>, %arg6: memref<16x128xf32, #tpu.memory_space<vmem>>) attributes {dimension_semantics = [#tpu.dimension_semantics<parallel>], iteration_bounds = array<i64: 1>, scalar_prefetch = 0 : i64, scratch_operands = 0 : i64, tpu.core_type = #tpu.core_type<tc>, window_params = [{transform_indices = @transform_0, window_bounds = array<i64: 16, 32>}, {pipeline_mode = #tpu.pipeline_mode<synchronous>, transform_indices = @transform_1, window_bounds = array<i64: 32, 32>}, {pipeline_mode = #tpu.pipeline_mode<synchronous>, transform_indices = @transform_2, window_bounds = array<i64: 1, 32>}, {pipeline_mode = #tpu.pipeline_mode<synchronous>, transform_indices = @transform_3, window_bounds = array<i64: 32, 128>}, {pipeline_mode = #tpu.pipeline_mode<synchronous>, transform_indices = @transform_4, window_bounds = array<i64: 1, 128>}, {transform_indices = @transform_5, window_bounds = array<i64: 16, 128>}]} {
    %c0 = arith.constant 0 : index
    %c0_0 = arith.constant 0 : index
    %0 = vector.load %arg1[%c0, %c0_0] : memref<16x32xf32, #tpu.memory_space<vmem>>, vector<16x32xf32>
    %1 = arith.truncf %0 : vector<16x32xf32> to vector<16x32xbf16>
    %c0_1 = arith.constant 0 : index
    %c0_2 = arith.constant 0 : index
    %2 = vector.load %arg2[%c0_1, %c0_2] : memref<32x32xbf16, #tpu.memory_space<vmem>>, vector<32x32xbf16>
    %cst = arith.constant dense<0.000000e+00> : vector<16x32xf32>
    %3 = tpu.matmul %1, %2, %cst {dimension_numbers = #tpu.dot_dimension_numbers<[1], [0], [0], [1], [0, 0, 1, 1], [], []>} : vector<16x32xbf16>, vector<32x32xbf16>, vector<16x32xf32> -> vector<16x32xf32>
    %c0_3 = arith.constant 0 : index
    %c0_4 = arith.constant 0 : index
    %4 = vector.load %arg3[%c0_3, %c0_4] : memref<1x32xf32, #tpu.memory_space<vmem>>, vector<1x32xf32>
    %5 = vector.broadcast %4 : vector<1x32xf32> to vector<16x32xf32>
    %6 = arith.addf %3, %5 : vector<16x32xf32>
    %cst_5 = arith.constant 5.000000e-01 : f32
    %7 = vector.broadcast %cst_5 : f32 to vector<16x32xf32>
    %8 = arith.mulf %7, %6 : vector<16x32xf32>
    %cst_6 = arith.constant 0.707106769 : f32
    %9 = vector.broadcast %cst_6 : f32 to vector<16x32xf32>
    %10 = arith.mulf %6, %9 : vector<16x32xf32>
    %11 = math.erf %10 : vector<16x32xf32>
    %cst_7 = arith.constant 1.000000e+00 : f32
    %12 = vector.broadcast %cst_7 : f32 to vector<16x32xf32>
    %13 = arith.addf %12, %11 : vector<16x32xf32>
    %14 = arith.mulf %8, %13 : vector<16x32xf32>
    %15 = arith.truncf %14 : vector<16x32xf32> to vector<16x32xbf16>
    %c0_8 = arith.constant 0 : index
    %c0_9 = arith.constant 0 : index
    %16 = vector.load %arg4[%c0_8, %c0_9] : memref<32x128xbf16, #tpu.memory_space<vmem>>, vector<32x128xbf16>
    %cst_10 = arith.constant dense<0.000000e+00> : vector<16x128xf32>
    %17 = tpu.matmul %15, %16, %cst_10 {dimension_numbers = #tpu.dot_dimension_numbers<[1], [0], [0], [1], [0, 0, 1, 1], [], []>} : vector<16x32xbf16>, vector<32x128xbf16>, vector<16x128xf32> -> vector<16x128xf32>
    %c0_11 = arith.constant 0 : index
    %c0_12 = arith.constant 0 : index
    %18 = vector.load %arg5[%c0_11, %c0_12] : memref<1x128xf32, #tpu.memory_space<vmem>>, vector<1x128xf32>
    %19 = vector.broadcast %18 : vector<1x128xf32> to vector<16x128xf32>
    %20 = arith.addf %17, %19 : vector<16x128xf32>
    %c0_13 = arith.constant 0 : index
    %c0_14 = arith.constant 0 : index
    %21 = vector.load %arg6[%c0_13, %c0_14] : memref<16x128xf32, #tpu.memory_space<vmem>>, vector<16x128xf32>
    tpu.vector_store %arg6[%c0_13, %c0_14], %20 {strides = array<i32>} : memref<16x128xf32, #tpu.memory_space<vmem>>, vector<16x128xf32>,
    return
  }
  func.func @transform_0(%arg0: i32) -> (i32, i32) {
    %c0_i32 = arith.constant 0 : i32
    %c0_i32_0 = arith.constant 0 : i32
    return %arg0, %c0_i32 : i32, i32
  }
  func.func @transform_1(%arg0: i32) -> (i32, i32) {
    %c0_i32 = arith.constant 0 : i32
    %c0_i32_0 = arith.constant 0 : i32
    %c0_i32_1 = arith.constant 0 : i32
    return %c0_i32, %c0_i32_0 : i32, i32
  }
  func.func @transform_2(%arg0: i32) -> (i32, i32) {
    %c0_i32 = arith.constant 0 : i32
    %c0_i32_0 = arith.constant 0 : i32
    %c0_i32_1 = arith.constant 0 : i32
    return %c0_i32, %c0_i32_0 : i32, i32
  }
  func.func @transform_3(%arg0: i32) -> (i32, i32) {
    %c0_i32 = arith.constant 0 : i32
    %c0_i32_0 = arith.constant 0 : i32
    %c0_i32_1 = arith.constant 0 : i32
    return %c0_i32, %c0_i32_0 : i32, i32
  }
  func.func @transform_4(%arg0: i32) -> (i32, i32) {
    %c0_i32 = arith.constant 0 : i32
    %c0_i32_0 = arith.constant 0 : i32
    %c0_i32_1 = arith.constant 0 : i32
    return %c0_i32, %c0_i32_0 : i32, i32
  }
  func.func @transform_5(%arg0: i32) -> (i32, i32) {
    %c0_i32 = arith.constant 0 : i32
    %c0_i32_0 = arith.constant 0 : i32
    return %arg0, %c0_i32 : i32, i32
  }
}

</mosaic_0001>

<llo_original>
// kernel: transformer_classifier_forward.7
$region0: #{transformer_classifier_forward.7}
  #allocation0 [shape = 'u32[]', space=smem, size = 0x4, offset = 0x4, fixed_abs, tag = 'smem constant byte address 0x4 - core index']
  #allocation1 [shape = 'u32[144,128]{1,0:T(1,128)}', space=vmem, size = 0x12000, scoped, tag = 'internal scratch']
  %s0 = inlined_call_operand.vmem [shape: f32[16,32], index: 0, kind: input, shape index: {}]
  %s1 = inlined_call_operand.hbm [shape: bf16[32,96], index: 1, kind: input, shape index: {}]
  %s2 = inlined_call_operand.vmem [shape: f32[1,96], index: 2, kind: input, shape index: {}]
  %s3 = inlined_call_operand.vmem [shape: f32[16,96], index: 3, kind: output, shape index: {}]
  %s4 = sld [smem:[#allocation0]]
  $region26: #{transformer_classifier_forward.7} parent=0
    _
  %s6 = ssub.s32 1, %s4
  %s7 = scalar_select 0, %s6, %s4
  $region1: #{transformer_classifier_forward.7} parent=0
    #allocation2 [shape = 'u8[8192]{0}', space=vmem, size = 0x2000, scoped, tag = 'input window, operand 1, single buffered']
    #allocation3 [shape = 's32[1]{0}', space=sflag, size = 0x4, scoped, tag = 'scoped memory for transformer_classifier_forward.7']
    %8 = vsyncpa [#allocation3], 0
    // Predicated region
    $region2: #{transformer_classifier_forward.7} parent=1 // pred_check
      _
    $region3: #{transformer_classifier_forward.7} parent=1 // pred_check_branch
      %10 = sbr.rel (0) target = $region5
    $region4: #{transformer_classifier_forward.7} parent=1 // pred_region
      _
    $region5: #{transformer_classifier_forward.7} parent=1 // pred_fallthru
      _
    // Predicated region
    $region6: #{transformer_classifier_forward.7} parent=1 // pred_check
      _
    $region7: #{transformer_classifier_forward.7} parent=1 // pred_check_branch
      %12 = sbr.rel (0) target = $region9
    $region8: #{transformer_classifier_forward.7} parent=1 // pred_region
      %s14 = ssub.s32 256, 256
      %15 = vsyncadd [#allocation3], %s14
      %s16 = sshll.u32 [#allocation2], 4
      %s17 = int_to_ptr.vmem [resolvable:$true] %s16
      %22 = dma.hbm_to_vmem [thread:$0]  %s1, 256, %s17, [#allocation3], 64, 64, 4
    $region9: #{transformer_classifier_forward.7} parent=1 // pred_fallthru
      _
    // Predicated region
    $region10: #{transformer_classifier_forward.7} parent=1 // pred_check
      _
    $region11: #{transformer_classifier_forward.7} parent=1 // pred_check_branch
      %24 = sbr.rel (0) target = $region13
    $region12: #{transformer_classifier_forward.7} parent=1 // pred_region
      _
    $region13: #{transformer_classifier_forward.7} parent=1 // pred_fallthru
      _
    // Predicated region
    $region14: #{transformer_classifier_forward.7} parent=1 // pred_check
      _
    $region15: #{transformer_classifier_forward.7} parent=1 // pred_check_branch
      %26 = sbr.rel (0) target = $region17
    $region16: #{transformer_classifier_forward.7} parent=1 // pred_region
      %27 = dma.done [#allocation3], 256
    $region17: #{transformer_classifier_forward.7} parent=1 // pred_fallthru
      _
    %v29 = vld [vmem:[%s0] sm:$0xff]
    %v30 = vld [vmem:[%s0 + $0x8] sm:$0xff]
    %v31 = vpack.c.bf16 %v30, %v29
    %v32 = vld [vmem:[#allocation2] sm:$0xf]
    %v33 = vld [vmem:[#allocation2 + $0x4] sm:$0xf]
    %v34 = vld [vmem:[#allocation2 + $0x8] sm:$0xf]
    %v35 = vld [vmem:[#allocation2 + $0xc] sm:$0xf]
    %v36 = vld [vmem:[%s2] sm:$0x1]
    %v38 = vlaneseq
    %v39 = vshrl.u32 %v38, 7
    %v40 = vsub.s32 0, %v39
    %v41 = vrot.slane %v36, %v40
    %v47 = vunpack.c.l.b16 %v32
    %v48 = vunpack.c.l.b16 %v33
    %v49 = vunpack.c.l.b16 %v34
    %v50 = vunpack.c.l.b16 %v35
    %v51 = vpack.c.b16 %v48, %v47
    %v52 = vpack.c.b16 %v50, %v49
    %vm55 = vcmask 261120
    %v57 = vsel %vm55, %v31, 0
    %59 = vmatprep.subr.bf16.mxu0 0
    %60 = vmatpush1.bf16.msra.mxu0 %v51
    %61 = vmatprep.subr.bf16.mxu0 0
    %62 = vmatpush1.bf16.msra.mxu0 %v52
    %63 = vmatprep.subr.bf16.mxu0 0
    %64 = vmatpush1.bf16.msra.mxu0 0
    %65 = vmatprep.subr.bf16.mxu0 0
    %66 = vmatpush1.bf16.msra.mxu0 0
    %67 = vmatprep.subr.bf16.mxu0 0
    %68 = vmatpush1.bf16.msra.mxu0 0
    %69 = vmatprep.subr.bf16.mxu0 0
    %70 = vmatpush1.bf16.msra.mxu0 0
    %71 = vmatprep.subr.bf16.mxu0 0
    %72 = vmatpush1.bf16.msra.mxu0 0
    %73 = vmatprep.subr.bf16.mxu0 0
    %74 = vmatpush1.bf16.msra.mxu0 0
    %75 = vmatprep.subr.bf16.mxu0 0
    %76 = vmatpush1.bf16.msra.mxu0 0
    %77 = vmatprep.subr.bf16.mxu0 0
    %78 = vmatpush1.bf16.msra.mxu0 0
    %79 = vmatprep.subr.bf16.mxu0 0
    %80 = vmatpush1.bf16.msra.mxu0 0
    %81 = vmatprep.subr.bf16.mxu0 0
    %82 = vmatpush1.bf16.msra.mxu0 0
    %83 = vmatprep.subr.bf16.mxu0 0
    %84 = vmatpush1.bf16.msra.mxu0 0
    %85 = vmatprep.subr.bf16.mxu0 0
    %86 = vmatpush1.bf16.msra.mxu0 0
    %87 = vmatprep.subr.bf16.mxu0 0
    %88 = vmatpush1.bf16.msra.mxu0 0
    %89 = vmatprep.subr.bf16.mxu0 0
    %90 = vmatpush1.bf16.msra.mxu0 0
    %91 = vmatprep.mubr.bf16.mxu0 0
    %92 = vmatmul.mubr.bf16.gmra.mrb[0].mxu0 %v57
    %v93 = vpop.f32.mrb[0].mxu0
    %v94 = vadd.f32 %v41, %v93
    %v95 = vpop.f32.mrb[0].mxu0
    %v96 = vpop.f32.mrb[0].mxu0
    %v97 = vadd.f32 %v41, %v96
    %v98 = vpop.f32.mrb[0].mxu0
    %99 = vdwg.mxu0
    %vm100 = vcmask 785408
    %101 = vst.msk [vmem:[%s3] sm:$0xff] %vm100, %v94
    %102 = vst.msk [vmem:[%s3 + $0x8] sm:$0xff] %vm100, %v97
    // Predicated region
    $region18: #{transformer_classifier_forward.7} parent=1 // pred_check
      _
    $region19: #{transformer_classifier_forward.7} parent=1 // pred_check_branch
      %104 = sbr.rel (0) target = $region21
    $region20: #{transformer_classifier_forward.7} parent=1 // pred_region
      _
    $region21: #{transformer_classifier_forward.7} parent=1 // pred_fallthru
      _
    // Predicated region
    $region22: #{transformer_classifier_forward.7} parent=1 // pred_check
      _
    $region23: #{transformer_classifier_forward.7} parent=1 // pred_check_branch
      %106 = sbr.rel (0) target = $region25
    $region24: #{transformer_classifier_forward.7} parent=1 // pred_region
      _
    $region25: #{transformer_classifier_forward.7} parent=1 // pred_fallthru
      _
    %107 = vsyncpa [#allocation3], 1

// kernel: transformer_classifier_forward.10
$region0: #{transformer_classifier_forward.10}
  #allocation0 [shape = 'u32[]', space=smem, size = 0x4, offset = 0x4, fixed_abs, tag = 'smem constant byte address 0x4 - core index']
  #allocation1 [shape = 'u32[144,128]{1,0:T(1,128)}', space=vmem, size = 0x12000, scoped, tag = 'internal scratch']
  %s0 = inlined_call_operand.vmem [shape: f32[16,32], index: 0, kind: input, shape index: {}]
  %s1 = inlined_call_operand.vmem [shape: bf16[32,96], index: 1, kind: input, shape index: {}]
  %s2 = inlined_call_operand.vmem [shape: f32[1,96], index: 2, kind: input, shape index: {}]
  %s3 = inlined_call_operand.vmem [shape: f32[16,96], index: 3, kind: output, shape index: {}]
  %s4 = sld [smem:[#allocation0]]
  $region22: #{transformer_classifier_forward.10} parent=0
    _
  %s6 = ssub.s32 1, %s4
  %s7 = scalar_select 0, %s6, %s4
  // Predicated region
  $region2: #{transformer_classifier_forward.10} parent=0 // pred_check
    _
  $region3: #{transformer_classifier_forward.10} parent=0 // pred_check_branch
    %9 = sbr.rel (0) target = $region5
  $region4: #{transformer_classifier_forward.10} parent=0 // pred_region
    _
  $region5: #{transformer_classifier_forward.10} parent=0 // pred_fallthru
    _
  // Predicated region
  $region6: #{transformer_classifier_forward.10} parent=0 // pred_check
    _
  $region7: #{transformer_classifier_forward.10} parent=0 // pred_check_branch
    %11 = sbr.rel (0) target = $region9
  $region8: #{transformer_classifier_forward.10} parent=0 // pred_region
    _
  $region9: #{transformer_classifier_forward.10} parent=0 // pred_fallthru
    _
  // Predicated region
  $region10: #{transformer_classifier_forward.10} parent=0 // pred_check
    _
  $region11: #{transformer_classifier_forward.10} parent=0 // pred_check_branch
    %13 = sbr.rel (0) target = $region13
  $region12: #{transformer_classifier_forward.10} parent=0 // pred_region
    _
  $region13: #{transformer_classifier_forward.10} parent=0 // pred_fallthru
    _
  %v15 = vld [vmem:[%s0] sm:$0xff]
  %v16 = vld [vmem:[%s0 + $0x8] sm:$0xff]
  %v17 = vpack.c.bf16 %v16, %v15
  %v18 = vld [vmem:[%s1] sm:$0xf]
  %v19 = vld [vmem:[%s1 + $0x4] sm:$0xf]
  %v20 = vld [vmem:[%s1 + $0x8] sm:$0xf]
  %v21 = vld [vmem:[%s1 + $0xc] sm:$0xf]
  %v22 = vld [vmem:[%s2] sm:$0x1]
  %v24 = vlaneseq
  %v25 = vshrl.u32 %v24, 7
  %v26 = vsub.s32 0, %v25
  %v27 = vrot.slane %v22, %v26
  %v33 = vunpack.c.l.b16 %v18
  %v34 = vunpack.c.l.b16 %v19
  %v35 = vunpack.c.l.b16 %v20
  %v36 = vunpack.c.l.b16 %v21
  %v37 = vpack.c.b16 %v34, %v33
  %v38 = vpack.c.b16 %v36, %v35
  %vm41 = vcmask 261120
  %v43 = vsel %vm41, %v17, 0
  %45 = vmatprep.subr.bf16.mxu0 0
  %46 = vmatpush1.bf16.msra.mxu0 %v37
  %47 = vmatprep.subr.bf16.mxu0 0
  %48 = vmatpush1.bf16.msra.mxu0 %v38
  %49 = vmatprep.subr.bf16.mxu0 0
  %50 = vmatpush1.bf16.msra.mxu0 0
  %51 = vmatprep.subr.bf16.mxu0 0
  %52 = vmatpush1.bf16.msra.mxu0 0
  %53 = vmatprep.subr.bf16.mxu0 0
  %54 = vmatpush1.bf16.msra.mxu0 0
  %55 = vmatprep.subr.bf16.mxu0 0
  %56 = vmatpush1.bf16.msra.mxu0 0
  %57 = vmatprep.subr.bf16.mxu0 0
  %58 = vmatpush1.bf16.msra.mxu0 0
  %59 = vmatprep.subr.bf16.mxu0 0
  %60 = vmatpush1.bf16.msra.mxu0 0
  %61 = vmatprep.subr.bf16.mxu0 0
  %62 = vmatpush1.bf16.msra.mxu0 0
  %63 = vmatprep.subr.bf16.mxu0 0
  %64 = vmatpush1.bf16.msra.mxu0 0
  %65 = vmatprep.subr.bf16.mxu0 0
  %66 = vmatpush1.bf16.msra.mxu0 0
  %67 = vmatprep.subr.bf16.mxu0 0
  %68 = vmatpush1.bf16.msra.mxu0 0
  %69 = vmatprep.subr.bf16.mxu0 0
  %70 = vmatpush1.bf16.msra.mxu0 0
  %71 = vmatprep.subr.bf16.mxu0 0
  %72 = vmatpush1.bf16.msra.mxu0 0
  %73 = vmatprep.subr.bf16.mxu0 0
  %74 = vmatpush1.bf16.msra.mxu0 0
  %75 = vmatprep.subr.bf16.mxu0 0
  %76 = vmatpush1.bf16.msra.mxu0 0
  %77 = vmatprep.mubr.bf16.mxu0 0
  %78 = vmatmul.mubr.bf16.gmra.mrb[0].mxu0 %v43
  %v79 = vpop.f32.mrb[0].mxu0
  %v80 = vadd.f32 %v27, %v79
  %v81 = vpop.f32.mrb[0].mxu0
  %v82 = vpop.f32.mrb[0].mxu0
  %v83 = vadd.f32 %v27, %v82
  %v84 = vpop.f32.mrb[0].mxu0
  %85 = vdwg.mxu0
  %vm86 = vcmask 785408
  %87 = vst.msk [vmem:[%s3] sm:$0xff] %vm86, %v80
  %88 = vst.msk [vmem:[%s3 + $0x8] sm:$0xff] %vm86, %v83
  // Predicated region
  $region14: #{transformer_classifier_forward.10} parent=0 // pred_check
    _
  $region15: #{transformer_classifier_forward.10} parent=0 // pred_check_branch
    %90 = sbr.rel (0) target = $region17
  $region16: #{transformer_classifier_forward.10} parent=0 // pred_region
    _
  $region17: #{transformer_classifier_forward.10} parent=0 // pred_fallthru
    _
  // Predicated region
  $region18: #{transformer_classifier_forward.10} parent=0 // pred_check
    _
  $region19: #{transformer_classifier_forward.10} parent=0 // pred_check_branch
    %92 = sbr.rel (0) target = $region21
  $region20: #{transformer_classifier_forward.10} parent=0 // pred_region
    _
  $region21: #{transformer_classifier_forward.10} parent=0 // pred_fallthru
    _

// kernel: transformer_classifier_forward.8
$region0: #{transformer_classifier_forward.8}
  #allocation0 [shape = 'u32[]', space=smem, size = 0x4, offset = 0x4, fixed_abs, tag = 'smem constant byte address 0x4 - core index']
  #allocation1 [shape = 'u32[144,128]{1,0:T(1,128)}', space=vmem, size = 0x12000, scoped, tag = 'internal scratch']
  %s0 = inlined_call_operand.vmem [shape: f32[8,2,32], index: 0, kind: input, shape index: {}]
  %s1 = inlined_call_operand.vmem [shape: f32[8,2,96], index: 1, kind: input, shape index: {}]
  %s2 = inlined_call_operand.vmem [shape: bf16[32,32], index: 2, kind: input, shape index: {}]
  %s3 = inlined_call_operand.vmem [shape: f32[1,32], index: 3, kind: input, shape index: {}]
  %s4 = inlined_call_operand.vmem [shape: f32[1,32], index: 4, kind: input, shape index: {}]
  %s5 = inlined_call_operand.vmem [shape: f32[1,32], index: 5, kind: input, shape index: {}]
  %s6 = inlined_call_operand.vmem [shape: f32[8,2,32], index: 6, kind: output, shape index: {}]
  %s7 = sld [smem:[#allocation0]]
  $region34: #{transformer_classifier_forward.8} parent=0
    _
  %s9 = ssub.s32 1, %s7
  %s10 = scalar_select 0, %s9, %s7
  // Predicated region
  $region2: #{transformer_classifier_forward.8} parent=0 // pred_check
    _
  $region3: #{transformer_classifier_forward.8} parent=0 // pred_check_branch
    %12 = sbr.rel (0) target = $region5
  $region4: #{transformer_classifier_forward.8} parent=0 // pred_region
    _
  $region5: #{transformer_classifier_forward.8} parent=0 // pred_fallthru
    _
  // Predicated region
  $region6: #{transformer_classifier_forward.8} parent=0 // pred_check
    _
  $region7: #{transformer_classifier_forward.8} parent=0 // pred_check_branch
    %14 = sbr.rel (0) target = $region9
  $region8: #{transformer_classifier_forward.8} parent=0 // pred_region
    _
  $region9: #{transformer_classifier_forward.8} parent=0 // pred_fallthru
    _
  // Predicated region
  $region10: #{transformer_classifier_forward.8} parent=0 // pred_check
    _
  $region11: #{transformer_classifier_forward.8} parent=0 // pred_check_branch
    %16 = sbr.rel (0) target = $region13
  $region12: #{transformer_classifier_forward.8} parent=0 // pred_region
    _
  $region13: #{transformer_classifier_forward.8} parent=0 // pred_fallthru
    _
  // Predicated region
  $region14: #{transformer_classifier_forward.8} parent=0 // pred_check
    _
  $region15: #{transformer_classifier_forward.8} parent=0 // pred_check_branch
    %18 = sbr.rel (0) target = $region17
  $region16: #{transformer_classifier_forward.8} parent=0 // pred_region
    _
  $region17: #{transformer_classifier_forward.8} parent=0 // pred_fallthru
    _
  // Predicated region
  $region18: #{transformer_classifier_forward.8} parent=0 // pred_check
    _
  $region19: #{transformer_classifier_forward.8} parent=0 // pred_check_branch
    %20 = sbr.rel (0) target = $region21
  $region20: #{transformer_classifier_forward.8} parent=0 // pred_region
    _
  $region21: #{transformer_classifier_forward.8} parent=0 // pred_fallthru
    _
  // Predicated region
  $region22: #{transformer_classifier_forward.8} parent=0 // pred_check
    _
  $region23: #{transformer_classifier_forward.8} parent=0 // pred_check_branch
    %22 = sbr.rel (0) target = $region25
  $region24: #{transformer_classifier_forward.8} parent=0 // pred_region
    _
  $region25: #{transformer_classifier_forward.8} parent=0 // pred_fallthru
    _
  %v24 = vld [vmem:[%s1] sm:$0x1]
  %v25 = vld [vmem:[%s1 + $0x2] sm:$0x1]
  %v26 = vld [vmem:[%s1 + $0x4] sm:$0x1]
  %v27 = vld [vmem:[%s1 + $0x6] sm:$0x1]
  %v28 = vld [vmem:[%s1 + $0x8] sm:$0x1]
  %v29 = vld [vmem:[%s1 + $0xa] sm:$0x1]
  %v30 = vld [vmem:[%s1 + $0xc] sm:$0x1]
  %v31 = vld [vmem:[%s1 + $0xe] sm:$0x1]
  %v32 = vpack.c.bf16 %v24, %v24
  %v33 = vpack.c.bf16 %v25, %v25
  %v34 = vpack.c.bf16 %v26, %v26
  %v35 = vpack.c.bf16 %v27, %v27
  %v36 = vpack.c.bf16 %v28, %v28
  %v37 = vpack.c.bf16 %v29, %v29
  %v38 = vpack.c.bf16 %v30, %v30
  %v39 = vpack.c.bf16 %v31, %v31
  %v48 = vunpack.c.l.b16 %v32
  %v49 = vunpack.c.l.b16 %v33
  %v50 = vunpack.c.l.b16 %v34
  %v51 = vunpack.c.l.b16 %v35
  %v52 = vunpack.c.l.b16 %v36
  %v53 = vunpack.c.l.b16 %v37
  %v54 = vunpack.c.l.b16 %v38
  %v55 = vunpack.c.l.b16 %v39
  %v56 = vrot.slane %v49, 7
  %vm57 = vcmask 1041409
  %v58 = vsel %vm57, %v56, %v48
  %v59 = vrot.slane %v50, 6
  %vm60 = vcmask 1042434
  %v61 = vsel %vm60, %v59, %v58
  %v62 = vrot.slane %v51, 5
  %vm63 = vcmask 1043459
  %v64 = vsel %vm63, %v62, %v61
  %v65 = vrot.slane %v52, 4
  %vm66 = vcmask 1044484
  %v67 = vsel %vm66, %v65, %v64
  %v68 = vrot.slane %v53, 3
  %vm69 = vcmask 1045509
  %v70 = vsel %vm69, %v68, %v67
  %v71 = vrot.slane %v54, 2
  %vm72 = vcmask 1046534
  %v73 = vsel %vm72, %v71, %v70
  %v74 = vrot.slane %v55, 1
  %vm75 = vcmask 1047559
  %v76 = vsel %vm75, %v74, %v73
  %v77 = vpack.c.b16 %v76, %v76
  %78 = vrot.lane.b32.xlu0 %v77, 96
  %v79 = vpop.permute.xlu0 %78
  %vm80 = vcmask 64512
  %v82 = vsel %vm80, %v77, 0
  %v85 = vsel %vm80, %v79, 0
  %87 = vmatprep.subr.bf16.mxu0 0
  %88 = vmatpush1.bf16.xpose.msra.mxu0 %v85
  %89 = vmatprep.subr.bf16.mxu0 0
  %90 = vmatpush1.bf16.xpose.msra.mxu0 0
  %91 = vmatprep.subr.bf16.mxu0 0
  %92 = vmatpush1.bf16.xpose.msra.mxu0 0
  %93 = vmatprep.subr.bf16.mxu0 0
  %94 = vmatpush1.bf16.xpose.msra.mxu0 0
  %95 = vmatprep.subr.bf16.mxu0 0
  %96 = vmatpush1.bf16.xpose.msra.mxu0 0
  %97 = vmatprep.subr.bf16.mxu0 0
  %98 = vmatpush1.bf16.xpose.msra.mxu0 0
  %99 = vmatprep.subr.bf16.mxu0 0
  %100 = vmatpush1.bf16.xpose.msra.mxu0 0
  %101 = vmatprep.subr.bf16.mxu0 0
  %102 = vmatpush1.bf16.xpose.msra.mxu0 0
  %103 = vmatprep.subr.bf16.mxu0 0
  %104 = vmatpush1.bf16.xpose.msra.mxu0 0
  %105 = vmatprep.subr.bf16.mxu0 0
  %106 = vmatpush1.bf16.xpose.msra.mxu0 0
  %107 = vmatprep.subr.bf16.mxu0 0
  %108 = vmatpush1.bf16.xpose.msra.mxu0 0
  %109 = vmatprep.subr.bf16.mxu0 0
  %110 = vmatpush1.bf16.xpose.msra.mxu0 0
  %111 = vmatprep.subr.bf16.mxu0 0
  %112 = vmatpush1.bf16.xpose.msra.mxu0 0
  %113 = vmatprep.subr.bf16.mxu0 0
  %114 = vmatpush1.bf16.xpose.msra.mxu0 0
  %115 = vmatprep.subr.bf16.mxu0 0
  %116 = vmatpush1.bf16.xpose.msra.mxu0 0
  %117 = vmatprep.subr.bf16.mxu0 0
  %118 = vmatpush1.bf16.xpose.msra.mxu0 0
  %119 = vmatprep.mubr.bf16.mxu0 0
  %120 = vmatmul.mubr.bf16.gmra.mrb[0].mxu0 %v82
  %v121 = vpop.f32.mrb[0].mxu0
  %v122 = vadd.f32 0.0, %v121
  %v123 = vpop.f32.mrb[0].mxu0
  %v124 = vpop.f32.mrb[0].mxu0
  %v125 = vpop.f32.mrb[0].mxu0
  %126 = vdwg.mxu0
  %v127 = vmul.f32 %v122, 0.35355338
  %v128 = vsel %vm80, %v127, -inf
  %129 = vmax.xlane.f32.xlu0 %v128
  %v130 = vpop.xlane.xlu0 %129
  %v131 = vsub.f32 %v127, %v130
  %v132 = vmul.f32 %v131, 1.442695
  %v133 = vpow.pop %v132
  %v134 = vsel %vm80, %v133, 0.0
  %135 = vadd.xlane.f32.xlu0 %v134
  %v136 = vpop.xlane.xlu0 %135
  %v137 = vpack.c.bf16 %v133, %v133
  %138 = vrot.lane.b32.xlu0 %v77, 64
  %v139 = vpop.permute.xlu0 %138
  %v141 = vsel %vm80, %v137, 0
  %vm143 = vcmask 1043456
  %v145 = vsel %vm143, %v139, 0
  %147 = vmatprep.subr.bf16.mxu0 0
  %148 = vmatpush1.bf16.msra.mxu0 %v145
  %149 = vmatprep.subr.bf16.mxu0 0
  %150 = vmatpush1.bf16.msra.mxu0 0
  %151 = vmatprep.subr.bf16.mxu0 0
  %152 = vmatpush1.bf16.msra.mxu0 0
  %153 = vmatprep.subr.bf16.mxu0 0
  %154 = vmatpush1.bf16.msra.mxu0 0
  %155 = vmatprep.subr.bf16.mxu0 0
  %156 = vmatpush1.bf16.msra.mxu0 0
  %157 = vmatprep.subr.bf16.mxu0 0
  %158 = vmatpush1.bf16.msra.mxu0 0
  %159 = vmatprep.subr.bf16.mxu0 0
  %160 = vmatpush1.bf16.msra.mxu0 0
  %161 = vmatprep.subr.bf16.mxu0 0
  %162 = vmatpush1.bf16.msra.mxu0 0
  %163 = vmatprep.subr.bf16.mxu0 0
  %164 = vmatpush1.bf16.msra.mxu0 0
  %165 = vmatprep.subr.bf16.mxu0 0
  %166 = vmatpush1.bf16.msra.mxu0 0
  %167 = vmatprep.subr.bf16.mxu0 0
  %168 = vmatpush1.bf16.msra.mxu0 0
  %169 = vmatprep.subr.bf16.mxu0 0
  %170 = vmatpush1.bf16.msra.mxu0 0
  %171 = vmatprep.subr.bf16.mxu0 0
  %172 = vmatpush1.bf16.msra.mxu0 0
  %173 = vmatprep.subr.bf16.mxu0 0
  %174 = vmatpush1.bf16.msra.mxu0 0
  %175 = vmatprep.subr.bf16.mxu0 0
  %176 = vmatpush1.bf16.msra.mxu0 0
  %177 = vmatprep.subr.bf16.mxu0 0
  %178 = vmatpush1.bf16.msra.mxu0 0
  %179 = vmatprep.mubr.bf16.mxu0 0
  %180 = vmatmul.mubr.bf16.gmra.mrb[0].mxu0 %v141
  %v181 = vpop.f32.mrb[0].mxu0
  %v182 = vadd.f32 0.0, %v181
  %v183 = vpop.f32.mrb[0].mxu0
  %v184 = vpop.f32.mrb[0].mxu0
  %v185 = vpop.f32.mrb[0].mxu0
  %186 = vdwg.mxu0
  %v187 = vrcp.pop %v136
  %v188 = vmul.f32 %v182, %v187
  %189 = vrot.lane.b32.xlu0 %v77, 120
  %v190 = vpop.permute.xlu0 %189
  %191 = vrot.lane.b32.xlu0 %v77, 88
  %v192 = vpop.permute.xlu0 %191
  %v194 = vsel %vm80, %v190, 0
  %v197 = vsel %vm80, %v192, 0
  %199 = vmatprep.subr.bf16.mxu0 0
  %200 = vmatpush1.bf16.xpose.msra.mxu0 %v197
  %201 = vmatprep.subr.bf16.mxu0 0
  %202 = vmatpush1.bf16.xpose.msra.mxu0 0
  %203 = vmatprep.subr.bf16.mxu0 0
  %204 = vmatpush1.bf16.xpose.msra.mxu0 0
  %205 = vmatprep.subr.bf16.mxu0 0
  %206 = vmatpush1.bf16.xpose.msra.mxu0 0
  %207 = vmatprep.subr.bf16.mxu0 0
  %208 = vmatpush1.bf16.xpose.msra.mxu0 0
  %209 = vmatprep.subr.bf16.mxu0 0
  %210 = vmatpush1.bf16.xpose.msra.mxu0 0
  %211 = vmatprep.subr.bf16.mxu0 0
  %212 = vmatpush1.bf16.xpose.msra.mxu0 0
  %213 = vmatprep.subr.bf16.mxu0 0
  %214 = vmatpush1.bf16.xpose.msra.mxu0 0
  %215 = vmatprep.subr.bf16.mxu0 0
  %216 = vmatpush1.bf16.xpose.msra.mxu0 0
  %217 = vmatprep.subr.bf16.mxu0 0
  %218 = vmatpush1.bf16.xpose.msra.mxu0 0
  %219 = vmatprep.subr.bf16.mxu0 0
  %220 = vmatpush1.bf16.xpose.msra.mxu0 0
  %221 = vmatprep.subr.bf16.mxu0 0
  %222 = vmatpush1.bf16.xpose.msra.mxu0 0
  %223 = vmatprep.subr.bf16.mxu0 0
  %224 = vmatpush1.bf16.xpose.msra.mxu0 0
  %225 = vmatprep.subr.bf16.mxu0 0
  %226 = vmatpush1.bf16.xpose.msra.mxu0 0
  %227 = vmatprep.subr.bf16.mxu0 0
  %228 = vmatpush1.bf16.xpose.msra.mxu0 0
  %229 = vmatprep.subr.bf16.mxu0 0
  %230 = vmatpush1.bf16.xpose.msra.mxu0 0
  %231 = vmatprep.mubr.bf16.mxu0 0
  %232 = vmatmul.mubr.bf16.gmra.mrb[0].mxu0 %v194
  %v233 = vpop.f32.mrb[0].mxu0
  %v234 = vadd.f32 0.0, %v233
  %v235 = vpop.f32.mrb[0].mxu0
  %v236 = vpop.f32.mrb[0].mxu0
  %v237 = vpop.f32.mrb[0].mxu0
  %238 = vdwg.mxu0
  %v239 = vmul.f32 %v234, 0.35355338
  %v240 = vsel %vm80, %v239, -inf
  %241 = vmax.xlane.f32.xlu0 %v240
  %v242 = vpop.xlane.xlu0 %241
  %v243 = vsub.f32 %v239, %v242
  %v244 = vmul.f32 %v243, 1.442695
  %v245 = vpow.pop %v244
  %v246 = vsel %vm80, %v245, 0.0
  %247 = vadd.xlane.f32.xlu0 %v246
  %v248 = vpop.xlane.xlu0 %247
  %v249 = vpack.c.bf16 %v245, %v245
  %250 = vrot.lane.b32.xlu0 %v77, 56
  %v251 = vpop.permute.xlu0 %250
  %v253 = vsel %vm80, %v249, 0
  %v256 = vsel %vm143, %v251, 0
  %258 = vmatprep.subr.bf16.mxu0 0
  %259 = vmatpush1.bf16.msra.mxu0 %v256
  %260 = vmatprep.subr.bf16.mxu0 0
  %261 = vmatpush1.bf16.msra.mxu0 0
  %262 = vmatprep.subr.bf16.mxu0 0
  %263 = vmatpush1.bf16.msra.mxu0 0
  %264 = vmatprep.subr.bf16.mxu0 0
  %265 = vmatpush1.bf16.msra.mxu0 0
  %266 = vmatprep.subr.bf16.mxu0 0
  %267 = vmatpush1.bf16.msra.mxu0 0
  %268 = vmatprep.subr.bf16.mxu0 0
  %269 = vmatpush1.bf16.msra.mxu0 0
  %270 = vmatprep.subr.bf16.mxu0 0
  %271 = vmatpush1.bf16.msra.mxu0 0
  %272 = vmatprep.subr.bf16.mxu0 0
  %273 = vmatpush1.bf16.msra.mxu0 0
  %274 = vmatprep.subr.bf16.mxu0 0
  %275 = vmatpush1.bf16.msra.mxu0 0
  %276 = vmatprep.subr.bf16.mxu0 0
  %277 = vmatpush1.bf16.msra.mxu0 0
  %278 = vmatprep.subr.bf16.mxu0 0
  %279 = vmatpush1.bf16.msra.mxu0 0
  %280 = vmatprep.subr.bf16.mxu0 0
  %281 = vmatpush1.bf16.msra.mxu0 0
  %282 = vmatprep.subr.bf16.mxu0 0
  %283 = vmatpush1.bf16.msra.mxu0 0
  %284 = vmatprep.subr.bf16.mxu0 0
  %285 = vmatpush1.bf16.msra.mxu0 0
  %286 = vmatprep.subr.bf16.mxu0 0
  %287 = vmatpush1.bf16.msra.mxu0 0
  %288 = vmatprep.subr.bf16.mxu0 0
  %289 = vmatpush1.bf16.msra.mxu0 0
  %290 = vmatprep.mubr.bf16.mxu0 0
  %291 = vmatmul.mubr.bf16.gmra.mrb[0].mxu0 %v253
  %v292 = vpop.f32.mrb[0].mxu0
  %v293 = vadd.f32 0.0, %v292
  %v294 = vpop.f32.mrb[0].mxu0
  %v295 = vpop.f32.mrb[0].mxu0
  %v296 = vpop.f32.mrb[0].mxu0
  %297 = vdwg.mxu0
  %v298 = vrcp.pop %v248
  %v299 = vmul.f32 %v293, %v298
  %300 = vrot.lane.b32.xlu0 %v77, 112
  %v301 = vpop.permute.xlu0 %300
  %302 = vrot.lane.b32.xlu0 %v77, 80
  %v303 = vpop.permute.xlu0 %302
  %v305 = vsel %vm80, %v301, 0
  %v308 = vsel %vm80, %v303, 0
  %310 = vmatprep.subr.bf16.mxu0 0
  %311 = vmatpush1.bf16.xpose.msra.mxu0 %v308
  %312 = vmatprep.subr.bf16.mxu0 0
  %313 = vmatpush1.bf16.xpose.msra.mxu0 0
  %314 = vmatprep.subr.bf16.mxu0 0
  %315 = vmatpush1.bf16.xpose.msra.mxu0 0
  %316 = vmatprep.subr.bf16.mxu0 0
  %317 = vmatpush1.bf16.xpose.msra.mxu0 0
  %318 = vmatprep.subr.bf16.mxu0 0
  %319 = vmatpush1.bf16.xpose.msra.mxu0 0
  %320 = vmatprep.subr.bf16.mxu0 0
  %321 = vmatpush1.bf16.xpose.msra.mxu0 0
  %322 = vmatprep.subr.bf16.mxu0 0
  %323 = vmatpush1.bf16.xpose.msra.mxu0 0
  %324 = vmatprep.subr.bf16.mxu0 0
  %325 = vmatpush1.bf16.xpose.msra.mxu0 0
  %326 = vmatprep.subr.bf16.mxu0 0
  %327 = vmatpush1.bf16.xpose.msra.mxu0 0
  %328 = vmatprep.subr.bf16.mxu0 0
  %329 = vmatpush1.bf16.xpose.msra.mxu0 0
  %330 = vmatprep.subr.bf16.mxu0 0
  %331 = vmatpush1.bf16.xpose.msra.mxu0 0
  %332 = vmatprep.subr.bf16.mxu0 0
  %333 = vmatpush1.bf16.xpose.msra.mxu0 0
  %334 = vmatprep.subr.bf16.mxu0 0
  %335 = vmatpush1.bf16.xpose.msra.mxu0 0
  %336 = vmatprep.subr.bf16.mxu0 0
  %337 = vmatpush1.bf16.xpose.msra.mxu0 0
  %338 = vmatprep.subr.bf16.mxu0 0
  %339 = vmatpush1.bf16.xpose.msra.mxu0 0
  %340 = vmatprep.subr.bf16.mxu0 0
  %341 = vmatpush1.bf16.xpose.msra.mxu0 0
  %342 = vmatprep.mubr.bf16.mxu0 0
  %343 = vmatmul.mubr.bf16.gmra.mrb[0].mxu0 %v305
  %v344 = vpop.f32.mrb[0].mxu0
  %v345 = vadd.f32 0.0, %v344
  %v346 = vpop.f32.mrb[0].mxu0
  %v347 = vpop.f32.mrb[0].mxu0
  %v348 = vpop.f32.mrb[0].mxu0
  %349 = vdwg.mxu0
  %v350 = vmul.f32 %v345, 0.35355338
  %v351 = vsel %vm80, %v350, -inf
  %352 = vmax.xlane.f32.xlu0 %v351
  %v353 = vpop.xlane.xlu0 %352
  %v354 = vsub.f32 %v350, %v353
  %v355 = vmul.f32 %v354, 1.442695
  %v356 = vpow.pop %v355
  %v357 = vsel %vm80, %v356, 0.0
  %358 = vadd.xlane.f32.xlu0 %v357
  %v359 = vpop.xlane.xlu0 %358
  %v360 = vpack.c.bf16 %v356, %v356
  %361 = vrot.lane.b32.xlu0 %v77, 48
  %v362 = vpop.permute.xlu0 %361
  %v364 = vsel %vm80, %v360, 0
  %v367 = vsel %vm143, %v362, 0
  %369 = vmatprep.subr.bf16.mxu0 0
  %370 = vmatpush1.bf16.msra.mxu0 %v367
  %371 = vmatprep.subr.bf16.mxu0 0
  %372 = vmatpush1.bf16.msra.mxu0 0
  %373 = vmatprep.subr.bf16.mxu0 0
  %374 = vmatpush1.bf16.msra.mxu0 0
  %375 = vmatprep.subr.bf16.mxu0 0
  %376 = vmatpush1.bf16.msra.mxu0 0
  %377 = vmatprep.subr.bf16.mxu0 0
  %378 = vmatpush1.bf16.msra.mxu0 0
  %379 = vmatprep.subr.bf16.mxu0 0
  %380 = vmatpush1.bf16.msra.mxu0 0
  %381 = vmatprep.subr.bf16.mxu0 0
  %382 = vmatpush1.bf16.msra.mxu0 0
  %383 = vmatprep.subr.bf16.mxu0 0
  %384 = vmatpush1.bf16.msra.mxu0 0
  %385 = vmatprep.subr.bf16.mxu0 0
  %386 = vmatpush1.bf16.msra.mxu0 0
  %387 = vmatprep.subr.bf16.mxu0 0
  %388 = vmatpush1.bf16.msra.mxu0 0
  %389 = vmatprep.subr.bf16.mxu0 0
  %390 = vmatpush1.bf16.msra.mxu0 0
  %391 = vmatprep.subr.bf16.mxu0 0
  %392 = vmatpush1.bf16.msra.mxu0 0
  %393 = vmatprep.subr.bf16.mxu0 0
  %394 = vmatpush1.bf16.msra.mxu0 0
  %395 = vmatprep.subr.bf16.mxu0 0
  %396 = vmatpush1.bf16.msra.mxu0 0
  %397 = vmatprep.subr.bf16.mxu0 0
  %398 = vmatpush1.bf16.msra.mxu0 0
  %399 = vmatprep.subr.bf16.mxu0 0
  %400 = vmatpush1.bf16.msra.mxu0 0
  %401 = vmatprep.mubr.bf16.mxu0 0
  %402 = vmatmul.mubr.bf16.gmra.mrb[0].mxu0 %v364
  %v403 = vpop.f32.mrb[0].mxu0
  %v404 = vadd.f32 0.0, %v403
  %v405 = vpop.f32.mrb[0].mxu0
  %v406 = vpop.f32.mrb[0].mxu0
  %v407 = vpop.f32.mrb[0].mxu0
  %408 = vdwg.mxu0
  %v409 = vrcp.pop %v359
  %v410 = vmul.f32 %v404, %v409
  %411 = vrot.lane.b32.xlu0 %v77, 104
  %v412 = vpop.permute.xlu0 %411
  %413 = vrot.lane.b32.xlu0 %v77, 72
  %v414 = vpop.permute.xlu0 %413
  %v416 = vsel %vm80, %v412, 0
  %v419 = vsel %vm80, %v414, 0
  %421 = vmatprep.subr.bf16.mxu0 0
  %422 = vmatpush1.bf16.xpose.msra.mxu0 %v419
  %423 = vmatprep.subr.bf16.mxu0 0
  %424 = vmatpush1.bf16.xpose.msra.mxu0 0
  %425 = vmatprep.subr.bf16.mxu0 0
  %426 = vmatpush1.bf16.xpose.msra.mxu0 0
  %427 = vmatprep.subr.bf16.mxu0 0
  %428 = vmatpush1.bf16.xpose.msra.mxu0 0
  %429 = vmatprep.subr.bf16.mxu0 0
  %430 = vmatpush1.bf16.xpose.msra.mxu0 0
  %431 = vmatprep.subr.bf16.mxu0 0
  %432 = vmatpush1.bf16.xpose.msra.mxu0 0
  %433 = vmatprep.subr.bf16.mxu0 0
  %434 = vmatpush1.bf16.xpose.msra.mxu0 0
  %435 = vmatprep.subr.bf16.mxu0 0
  %436 = vmatpush1.bf16.xpose.msra.mxu0 0
  %437 = vmatprep.subr.bf16.mxu0 0
  %438 = vmatpush1.bf16.xpose.msra.mxu0 0
  %439 = vmatprep.subr.bf16.mxu0 0
  %440 = vmatpush1.bf16.xpose.msra.mxu0 0
  %441 = vmatprep.subr.bf16.mxu0 0
  %442 = vmatpush1.bf16.xpose.msra.mxu0 0
  %443 = vmatprep.subr.bf16.mxu0 0
  %444 = vmatpush1.bf16.xpose.msra.mxu0 0
  %445 = vmatprep.subr.bf16.mxu0 0
  %446 = vmatpush1.bf16.xpose.msra.mxu0 0
  %447 = vmatprep.subr.bf16.mxu0 0
  %448 = vmatpush1.bf16.xpose.msra.mxu0 0
  %449 = vmatprep.subr.bf16.mxu0 0
  %450 = vmatpush1.bf16.xpose.msra.mxu0 0
  %451 = vmatprep.subr.bf16.mxu0 0
  %452 = vmatpush1.bf16.xpose.msra.mxu0 0
  %453 = vmatprep.mubr.bf16.mxu0 0
  %454 = vmatmul.mubr.bf16.gmra.mrb[0].mxu0 %v416
  %v455 = vpop.f32.mrb[0].mxu0
  %v456 = vadd.f32 0.0, %v455
  %v457 = vpop.f32.mrb[0].mxu0
  %v458 = vpop.f32.mrb[0].mxu0
  %v459 = vpop.f32.mrb[0].mxu0
  %460 = vdwg.mxu0
  %v461 = vmul.f32 %v456, 0.35355338
  %v462 = vsel %vm80, %v461, -inf
  %463 = vmax.xlane.f32.xlu0 %v462
  %v464 = vpop.xlane.xlu0 %463
  %v465 = vsub.f32 %v461, %v464
  %v466 = vmul.f32 %v465, 1.442695
  %v467 = vpow.pop %v466
  %v468 = vsel %vm80, %v467, 0.0
  %469 = vadd.xlane.f32.xlu0 %v468
  %v470 = vpop.xlane.xlu0 %469
  %v471 = vpack.c.bf16 %v467, %v467
  %472 = vrot.lane.b32.xlu0 %v77, 40
  %v473 = vpop.permute.xlu0 %472
  %v475 = vsel %vm80, %v471, 0
  %v478 = vsel %vm143, %v473, 0
  %480 = vmatprep.subr.bf16.mxu0 0
  %481 = vmatpush1.bf16.msra.mxu0 %v478
  %482 = vmatprep.subr.bf16.mxu0 0
  %483 = vmatpush1.bf16.msra.mxu0 0
  %484 = vmatprep.subr.bf16.mxu0 0
  %485 = vmatpush1.bf16.msra.mxu0 0
  %486 = vmatprep.subr.bf16.mxu0 0
  %487 = vmatpush1.bf16.msra.mxu0 0
  %488 = vmatprep.subr.bf16.mxu0 0
  %489 = vmatpush1.bf16.msra.mxu0 0
  %490 = vmatprep.subr.bf16.mxu0 0
  %491 = vmatpush1.bf16.msra.mxu0 0
  %492 = vmatprep.subr.bf16.mxu0 0
  %493 = vmatpush1.bf16.msra.mxu0 0
  %494 = vmatprep.subr.bf16.mxu0 0
  %495 = vmatpush1.bf16.msra.mxu0 0
  %496 = vmatprep.subr.bf16.mxu0 0
  %497 = vmatpush1.bf16.msra.mxu0 0
  %498 = vmatprep.subr.bf16.mxu0 0
  %499 = vmatpush1.bf16.msra.mxu0 0
  %500 = vmatprep.subr.bf16.mxu0 0
  %501 = vmatpush1.bf16.msra.mxu0 0
  %502 = vmatprep.subr.bf16.mxu0 0
  %503 = vmatpush1.bf16.msra.mxu0 0
  %504 = vmatprep.subr.bf16.mxu0 0
  %505 = vmatpush1.bf16.msra.mxu0 0
  %506 = vmatprep.subr.bf16.mxu0 0
  %507 = vmatpush1.bf16.msra.mxu0 0
  %508 = vmatprep.subr.bf16.mxu0 0
  %509 = vmatpush1.bf16.msra.mxu0 0
  %510 = vmatprep.subr.bf16.mxu0 0
  %511 = vmatpush1.bf16.msra.mxu0 0
  %512 = vmatprep.mubr.bf16.mxu0 0
  %513 = vmatmul.mubr.bf16.gmra.mrb[0].mxu0 %v475
  %v514 = vpop.f32.mrb[0].mxu0
  %v515 = vadd.f32 0.0, %v514
  %v516 = vpop.f32.mrb[0].mxu0
  %v517 = vpop.f32.mrb[0].mxu0
  %v518 = vpop.f32.mrb[0].mxu0
  %519 = vdwg.mxu0
  %v520 = vrcp.pop %v470
  %v521 = vmul.f32 %v515, %v520
  %523 = vrot.lane.b32.xlu0 %v299, 8
  %v524 = vpop.permute.xlu0 %523
  %527 = vrot.lane.b32.xlu0 %v410, 16
  %v528 = vpop.permute.xlu0 %527
  %531 = vrot.lane.b32.xlu0 %v521, 24
  %v532 = vpop.permute.xlu0 %531
  %v534 = vsel %vm80, %v188, %v524
  %vm535 = vcmask 130048
  %v536 = vsel %vm535, %v534, %v528
  %vm537 = vcmask 195584
  %v538 = vsel %vm537, %v536, %v532
  %v539 = vpack.c.bf16 %v538, %v538
  %v540 = vld [vmem:[%s2] sm:$0xf]
  %v541 = vld [vmem:[%s2 + $0x4] sm:$0xf]
  %v542 = vld [vmem:[%s2 + $0x8] sm:$0xf]
  %v543 = vld [vmem:[%s2 + $0xc] sm:$0xf]
  %v544 = vld [vmem:[%s3] sm:$0x1]
  %v546 = vlaneseq
  %v547 = vshrl.u32 %v546, 7
  %v548 = vsub.s32 0, %v547
  %v549 = vrot.slane %v544, %v548
  %v555 = vunpack.c.l.b16 %v540
  %v556 = vunpack.c.l.b16 %v541
  %v557 = vunpack.c.l.b16 %v542
  %v558 = vunpack.c.l.b16 %v543
  %v559 = vpack.c.b16 %v556, %v555
  %v560 = vpack.c.b16 %v558, %v557
  %vm563 = vcmask 261120
  %v565 = vsel %vm563, %v539, 0
  %567 = vmatprep.subr.bf16.mxu0 0
  %568 = vmatpush1.bf16.msra.mxu0 %v559
  %569 = vmatprep.subr.bf16.mxu0 0
  %570 = vmatpush1.bf16.msra.mxu0 %v560
  %571 = vmatprep.subr.bf16.mxu0 0
  %572 = vmatpush1.bf16.msra.mxu0 0
  %573 = vmatprep.subr.bf16.mxu0 0
  %574 = vmatpush1.bf16.msra.mxu0 0
  %575 = vmatprep.subr.bf16.mxu0 0
  %576 = vmatpush1.bf16.msra.mxu0 0
  %577 = vmatprep.subr.bf16.mxu0 0
  %578 = vmatpush1.bf16.msra.mxu0 0
  %579 = vmatprep.subr.bf16.mxu0 0
  %580 = vmatpush1.bf16.msra.mxu0 0
  %581 = vmatprep.subr.bf16.mxu0 0
  %582 = vmatpush1.bf16.msra.mxu0 0
  %583 = vmatprep.subr.bf16.mxu0 0
  %584 = vmatpush1.bf16.msra.mxu0 0
  %585 = vmatprep.subr.bf16.mxu0 0
  %586 = vmatpush1.bf16.msra.mxu0 0
  %587 = vmatprep.subr.bf16.mxu0 0
  %588 = vmatpush1.bf16.msra.mxu0 0
  %589 = vmatprep.subr.bf16.mxu0 0
  %590 = vmatpush1.bf16.msra.mxu0 0
  %591 = vmatprep.subr.bf16.mxu0 0
  %592 = vmatpush1.bf16.msra.mxu0 0
  %593 = vmatprep.subr.bf16.mxu0 0
  %594 = vmatpush1.bf16.msra.mxu0 0
  %595 = vmatprep.subr.bf16.mxu0 0
  %596 = vmatpush1.bf16.msra.mxu0 0
  %597 = vmatprep.subr.bf16.mxu0 0
  %598 = vmatpush1.bf16.msra.mxu0 0
  %599 = vmatprep.mubr.bf16.mxu0 0
  %600 = vmatmul.mubr.bf16.gmra.mrb[0].mxu0 %v565
  %v601 = vpop.f32.mrb[0].mxu0
  %v602 = vadd.f32 %v549, %v601
  %v603 = vpop.f32.mrb[0].mxu0
  %v604 = vpop.f32.mrb[0].mxu0
  %v605 = vpop.f32.mrb[0].mxu0
  %606 = vdwg.mxu0
  %v607 = vld [vmem:[%s0] sm:$0x1]
  %v608 = vld [vmem:[%s0 + $0x2] sm:$0x1]
  %v609 = vld [vmem:[%s0 + $0x4] sm:$0x1]
  %v610 = vld [vmem:[%s0 + $0x6] sm:$0x1]
  %v611 = vld [vmem:[%s0 + $0x8] sm:$0x1]
  %v612 = vld [vmem:[%s0 + $0xa] sm:$0x1]
  %v613 = vld [vmem:[%s0 + $0xc] sm:$0x1]
  %v614 = vld [vmem:[%s0 + $0xe] sm:$0x1]
  %v616 = vrot.slane %v602, 1
  %v617 = vrot.slane %v602, 2
  %v618 = vrot.slane %v602, 3
  %v619 = vrot.slane %v602, 4
  %v620 = vrot.slane %v602, 5
  %v621 = vrot.slane %v602, 6
  %v622 = vrot.slane %v602, 7
  %v631 = vadd.f32 %v607, %v602
  %v632 = vadd.f32 %v608, %v616
  %v633 = vadd.f32 %v609, %v617
  %v634 = vadd.f32 %v610, %v618
  %v635 = vadd.f32 %v611, %v619
  %v636 = vadd.f32 %v612, %v620
  %v637 = vadd.f32 %v613, %v621
  %v638 = vadd.f32 %v614, %v622
  %v639 = vld [vmem:[%s4] sm:$0x1]
  %v640 = vld [vmem:[%s5] sm:$0x1]
  %v649 = vrot.slane %v632, 7
  %v650 = vsel %vm57, %v649, %v631
  %v651 = vrot.slane %v633, 6
  %v652 = vsel %vm60, %v651, %v650
  %v653 = vrot.slane %v634, 5
  %v654 = vsel %vm63, %v653, %v652
  %v655 = vrot.slane %v635, 4
  %v656 = vsel %vm66, %v655, %v654
  %v657 = vrot.slane %v636, 3
  %v658 = vsel %vm69, %v657, %v656
  %v659 = vrot.slane %v637, 2
  %v660 = vsel %vm72, %v659, %v658
  %v661 = vrot.slane %v638, 1
  %v662 = vsel %vm75, %v661, %v660
  %v664 = vsel %vm563, %v662, 0.0
  %665 = vadd.xlane.f32.xlu0 %v664
  %v666 = vpop.xlane.xlu0 %665
  %v667 = vrcp.pop 32.0
  %v668 = vmul.f32 %v666, %v667
  %v670 = vrot.slane %v668, 1
  %v671 = vrot.slane %v668, 2
  %v672 = vrot.slane %v668, 3
  %v673 = vrot.slane %v668, 4
  %v674 = vrot.slane %v668, 5
  %v675 = vrot.slane %v668, 6
  %v676 = vrot.slane %v668, 7
  %v685 = vsub.f32 %v631, %v668
  %v686 = vsub.f32 %v632, %v670
  %v687 = vsub.f32 %v633, %v671
  %v688 = vsub.f32 %v634, %v672
  %v689 = vsub.f32 %v635, %v673
  %v690 = vsub.f32 %v636, %v674
  %v691 = vsub.f32 %v637, %v675
  %v692 = vsub.f32 %v638, %v676
  %v693 = vmul.f32 %v685, %v685
  %v694 = vmul.f32 %v686, %v686
  %v695 = vmul.f32 %v687, %v687
  %v696 = vmul.f32 %v688, %v688
  %v697 = vmul.f32 %v689, %v689
  %v698 = vmul.f32 %v690, %v690
  %v699 = vmul.f32 %v691, %v691
  %v700 = vmul.f32 %v692, %v692
  %v709 = vrot.slane %v694, 7
  %v710 = vsel %vm57, %v709, %v693
  %v711 = vrot.slane %v695, 6
  %v712 = vsel %vm60, %v711, %v710
  %v713 = vrot.slane %v696, 5
  %v714 = vsel %vm63, %v713, %v712
  %v715 = vrot.slane %v697, 4
  %v716 = vsel %vm66, %v715, %v714
  %v717 = vrot.slane %v698, 3
  %v718 = vsel %vm69, %v717, %v716
  %v719 = vrot.slane %v699, 2
  %v720 = vsel %vm72, %v719, %v718
  %v721 = vrot.slane %v700, 1
  %v722 = vsel %vm75, %v721, %v720
  %v724 = vsel %vm563, %v722, 0.0
  %725 = vadd.xlane.f32.xlu0 %v724
  %v726 = vpop.xlane.xlu0 %725
  %v727 = vmul.f32 %v726, %v667
  %v728 = vadd.f32 %v727, 1e-05
  %v729 = vrsqrt.pop %v728
  %v731 = vrot.slane %v729, 1
  %v732 = vrot.slane %v729, 2
  %v733 = vrot.slane %v729, 3
  %v734 = vrot.slane %v729, 4
  %v735 = vrot.slane %v729, 5
  %v736 = vrot.slane %v729, 6
  %v737 = vrot.slane %v729, 7
  %v746 = vmul.f32 %v685, %v729
  %v747 = vmul.f32 %v686, %v731
  %v748 = vmul.f32 %v687, %v732
  %v749 = vmul.f32 %v688, %v733
  %v750 = vmul.f32 %v689, %v734
  %v751 = vmul.f32 %v690, %v735
  %v752 = vmul.f32 %v691, %v736
  %v753 = vmul.f32 %v692, %v737
  %v755 = vlaneseq
  %v756 = vshrl.u32 %v755, 7
  %v757 = vsub.s32 0, %v756
  %v758 = vrot.slane %v639, %v757
  %v760 = vmul.f32 %v746, %v758
  %v761 = vmul.f32 %v747, %v758
  %v762 = vmul.f32 %v748, %v758
  %v763 = vmul.f32 %v749, %v758
  %v764 = vmul.f32 %v750, %v758
  %v765 = vmul.f32 %v751, %v758
  %v766 = vmul.f32 %v752, %v758
  %v767 = vmul.f32 %v753, %v758
  %v769 = vlaneseq
  %v770 = vshrl.u32 %v769, 7
  %v771 = vsub.s32 0, %v770
  %v772 = vrot.slane %v640, %v771
  %v774 = vadd.f32 %v760, %v772
  %v775 = vadd.f32 %v761, %v772
  %v776 = vadd.f32 %v762, %v772
  %v777 = vadd.f32 %v763, %v772
  %v778 = vadd.f32 %v764, %v772
  %v779 = vadd.f32 %v765, %v772
  %v780 = vadd.f32 %v766, %v772
  %v781 = vadd.f32 %v767, %v772
  %vm782 = vcmask 253952
  %783 = vst.msk [vmem:[%s6] sm:$0x1] %vm782, %v774
  %784 = vst.msk [vmem:[%s6 + $0x2] sm:$0x1] %vm782, %v775
  %785 = vst.msk [vmem:[%s6 + $0x4] sm:$0x1] %vm782, %v776
  %786 = vst.msk [vmem:[%s6 + $0x6] sm:$0x1] %vm782, %v777
  %787 = vst.msk [vmem:[%s6 + $0x8] sm:$0x1] %vm782, %v778
  %788 = vst.msk [vmem:[%s6 + $0xa] sm:$0x1] %vm782, %v779
  %789 = vst.msk [vmem:[%s6 + $0xc] sm:$0x1] %vm782, %v780
  %790 = vst.msk [vmem:[%s6 + $0xe] sm:$0x1] %vm782, %v781
  %v791 = vld [vmem:[%s1 + $0x1] sm:$0x1]
  %v792 = vld [vmem:[%s1 + $0x3] sm:$0x1]
  %v793 = vld [vmem:[%s1 + $0x5] sm:$0x1]
  %v794 = vld [vmem:[%s1 + $0x7] sm:$0x1]
  %v795 = vld [vmem:[%s1 + $0x9] sm:$0x1]
  %v796 = vld [vmem:[%s1 + $0xb] sm:$0x1]
  %v797 = vld [vmem:[%s1 + $0xd] sm:$0x1]
  %v798 = vld [vmem:[%s1 + $0xf] sm:$0x1]
  %v799 = vpack.c.bf16 %v791, %v791
  %v800 = vpack.c.bf16 %v792, %v792
  %v801 = vpack.c.bf16 %v793, %v793
  %v802 = vpack.c.bf16 %v794, %v794
  %v803 = vpack.c.bf16 %v795, %v795
  %v804 = vpack.c.bf16 %v796, %v796
  %v805 = vpack.c.bf16 %v797, %v797
  %v806 = vpack.c.bf16 %v798, %v798
  %v815 = vunpack.c.l.b16 %v799
  %v816 = vunpack.c.l.b16 %v800
  %v817 = vunpack.c.l.b16 %v801
  %v818 = vunpack.c.l.b16 %v802
  %v819 = vunpack.c.l.b16 %v803
  %v820 = vunpack.c.l.b16 %v804
  %v821 = vunpack.c.l.b16 %v805
  %v822 = vunpack.c.l.b16 %v806
  %v823 = vrot.slane %v816, 7
  %v824 = vsel %vm57, %v823, %v815
  %v825 = vrot.slane %v817, 6
  %v826 = vsel %vm60, %v825, %v824
  %v827 = vrot.slane %v818, 5
  %v828 = vsel %vm63, %v827, %v826
  %v829 = vrot.slane %v819, 4
  %v830 = vsel %vm66, %v829, %v828
  %v831 = vrot.slane %v820, 3
  %v832 = vsel %vm69, %v831, %v830
  %v833 = vrot.slane %v821, 2
  %v834 = vsel %vm72, %v833, %v832
  %v835 = vrot.slane %v822, 1
  %v836 = vsel %vm75, %v835, %v834
  %v837 = vpack.c.b16 %v836, %v836
  %838 = vrot.lane.b32.xlu0 %v837, 96
  %v839 = vpop.permute.xlu0 %838
  %v841 = vsel %vm80, %v837, 0
  %v844 = vsel %vm80, %v839, 0
  %846 = vmatprep.subr.bf16.mxu0 0
  %847 = vmatpush1.bf16.xpose.msra.mxu0 %v844
  %848 = vmatprep.subr.bf16.mxu0 0
  %849 = vmatpush1.bf16.xpose.msra.mxu0 0
  %850 = vmatprep.subr.bf16.mxu0 0
  %851 = vmatpush1.bf16.xpose.msra.mxu0 0
  %852 = vmatprep.subr.bf16.mxu0 0
  %853 = vmatpush1.bf16.xpose.msra.mxu0 0
  %854 = vmatprep.subr.bf16.mxu0 0
  %855 = vmatpush1.bf16.xpose.msra.mxu0 0
  %856 = vmatprep.subr.bf16.mxu0 0
  %857 = vmatpush1.bf16.xpose.msra.mxu0 0
  %858 = vmatprep.subr.bf16.mxu0 0
  %859 = vmatpush1.bf16.xpose.msra.mxu0 0
  %860 = vmatprep.subr.bf16.mxu0 0
  %861 = vmatpush1.bf16.xpose.msra.mxu0 0
  %862 = vmatprep.subr.bf16.mxu0 0
  %863 = vmatpush1.bf16.xpose.msra.mxu0 0
  %864 = vmatprep.subr.bf16.mxu0 0
  %865 = vmatpush1.bf16.xpose.msra.mxu0 0
  %866 = vmatprep.subr.bf16.mxu0 0
  %867 = vmatpush1.bf16.xpose.msra.mxu0 0
  %868 = vmatprep.subr.bf16.mxu0 0
  %869 = vmatpush1.bf16.xpose.msra.mxu0 0
  %870 = vmatprep.subr.bf16.mxu0 0
  %871 = vmatpush1.bf16.xpose.msra.mxu0 0
  %872 = vmatprep.subr.bf16.mxu0 0
  %873 = vmatpush1.bf16.xpose.msra.mxu0 0
  %874 = vmatprep.subr.bf16.mxu0 0
  %875 = vmatpush1.bf16.xpose.msra.mxu0 0
  %876 = vmatprep.subr.bf16.mxu0 0
  %877 = vmatpush1.bf16.xpose.msra.mxu0 0
  %878 = vmatprep.mubr.bf16.mxu0 0
  %879 = vmatmul.mubr.bf16.gmra.mrb[0].mxu0 %v841
  %v880 = vpop.f32.mrb[0].mxu0
  %v881 = vadd.f32 0.0, %v880
  %v882 = vpop.f32.mrb[0].mxu0
  %v883 = vpop.f32.mrb[0].mxu0
  %v884 = vpop.f32.mrb[0].mxu0
  %885 = vdwg.mxu0
  %v886 = vmul.f32 %v881, 0.35355338
  %v887 = vsel %vm80, %v886, -inf
  %888 = vmax.xlane.f32.xlu0 %v887
  %v889 = vpop.xlane.xlu0 %888
  %v890 = vsub.f32 %v886, %v889
  %v891 = vmul.f32 %v890, 1.442695
  %v892 = vpow.pop %v891
  %v893 = vsel %vm80, %v892, 0.0
  %894 = vadd.xlane.f32.xlu0 %v893
  %v895 = vpop.xlane.xlu0 %894
  %v896 = vpack.c.bf16 %v892, %v892
  %897 = vrot.lane.b32.xlu0 %v837, 64
  %v898 = vpop.permute.xlu0 %897
  %v900 = vsel %vm80, %v896, 0
  %v903 = vsel %vm143, %v898, 0
  %905 = vmatprep.subr.bf16.mxu0 0
  %906 = vmatpush1.bf16.msra.mxu0 %v903
  %907 = vmatprep.subr.bf16.mxu0 0
  %908 = vmatpush1.bf16.msra.mxu0 0
  %909 = vmatprep.subr.bf16.mxu0 0
  %910 = vmatpush1.bf16.msra.mxu0 0
  %911 = vmatprep.subr.bf16.mxu0 0
  %912 = vmatpush1.bf16.msra.mxu0 0
  %913 = vmatprep.subr.bf16.mxu0 0
  %914 = vmatpush1.bf16.msra.mxu0 0
  %915 = vmatprep.subr.bf16.mxu0 0
  %916 = vmatpush1.bf16.msra.mxu0 0
  %917 = vmatprep.subr.bf16.mxu0 0
  %918 = vmatpush1.bf16.msra.mxu0 0
  %919 = vmatprep.subr.bf16.mxu0 0
  %920 = vmatpush1.bf16.msra.mxu0 0
  %921 = vmatprep.subr.bf16.mxu0 0
  %922 = vmatpush1.bf16.msra.mxu0 0
  %923 = vmatprep.subr.bf16.mxu0 0
  %924 = vmatpush1.bf16.msra.mxu0 0
  %925 = vmatprep.subr.bf16.mxu0 0
  %926 = vmatpush1.bf16.msra.mxu0 0
  %927 = vmatprep.subr.bf16.mxu0 0
  %928 = vmatpush1.bf16.msra.mxu0 0
  %929 = vmatprep.subr.bf16.mxu0 0
  %930 = vmatpush1.bf16.msra.mxu0 0
  %931 = vmatprep.subr.bf16.mxu0 0
  %932 = vmatpush1.bf16.msra.mxu0 0
  %933 = vmatprep.subr.bf16.mxu0 0
  %934 = vmatpush1.bf16.msra.mxu0 0
  %935 = vmatprep.subr.bf16.mxu0 0
  %936 = vmatpush1.bf16.msra.mxu0 0
  %937 = vmatprep.mubr.bf16.mxu0 0
  %938 = vmatmul.mubr.bf16.gmra.mrb[0].mxu0 %v900
  %v939 = vpop.f32.mrb[0].mxu0
  %v940 = vadd.f32 0.0, %v939
  %v941 = vpop.f32.mrb[0].mxu0
  %v942 = vpop.f32.mrb[0].mxu0
  %v943 = vpop.f32.mrb[0].mxu0
  %944 = vdwg.mxu0
  %v945 = vrcp.pop %v895
  %v946 = vmul.f32 %v940, %v945
  %947 = vrot.lane.b32.xlu0 %v837, 120
  %v948 = vpop.permute.xlu0 %947
  %949 = vrot.lane.b32.xlu0 %v837, 88
  %v950 = vpop.permute.xlu0 %949
  %v952 = vsel %vm80, %v948, 0
  %v955 = vsel %vm80, %v950, 0
  %957 = vmatprep.subr.bf16.mxu0 0
  %958 = vmatpush1.bf16.xpose.msra.mxu0 %v955
  %959 = vmatprep.subr.bf16.mxu0 0
  %960 = vmatpush1.bf16.xpose.msra.mxu0 0
  %961 = vmatprep.subr.bf16.mxu0 0
  %962 = vmatpush1.bf16.xpose.msra.mxu0 0
  %963 = vmatprep.subr.bf16.mxu0 0
  %964 = vmatpush1.bf16.xpose.msra.mxu0 0
  %965 = vmatprep.subr.bf16.mxu0 0
  %966 = vmatpush1.bf16.xpose.msra.mxu0 0
  %967 = vmatprep.subr.bf16.mxu0 0
  %968 = vmatpush1.bf16.xpose.msra.mxu0 0
  %969 = vmatprep.subr.bf16.mxu0 0
  %970 = vmatpush1.bf16.xpose.msra.mxu0 0
  %971 = vmatprep.subr.bf16.mxu0 0
  %972 = vmatpush1.bf16.xpose.msra.mxu0 0
  %973 = vmatprep.subr.bf16.mxu0 0
  %974 = vmatpush1.bf16.xpose.msra.mxu0 0
  %975 = vmatprep.subr.bf16.mxu0 0
  %976 = vmatpush1.bf16.xpose.msra.mxu0 0
  %977 = vmatprep.subr.bf16.mxu0 0
  %978 = vmatpush1.bf16.xpose.msra.mxu0 0
  %979 = vmatprep.subr.bf16.mxu0 0
  %980 = vmatpush1.bf16.xpose.msra.mxu0 0
  %981 = vmatprep.subr.bf16.mxu0 0
  %982 = vmatpush1.bf16.xpose.msra.mxu0 0
  %983 = vmatprep.subr.bf16.mxu0 0
  %984 = vmatpush1.bf16.xpose.msra.mxu0 0
  %985 = vmatprep.subr.bf16.mxu0 0
  %986 = vmatpush1.bf16.xpose.msra.mxu0 0
  %987 = vmatprep.subr.bf16.mxu0 0
  %988 = vmatpush1.bf16.xpose.msra.mxu0 0
  %989 = vmatprep.mubr.bf16.mxu0 0
  %990 = vmatmul.mubr.bf16.gmra.mrb[0].mxu0 %v952
  %v991 = vpop.f32.mrb[0].mxu0
  %v992 = vadd.f32 0.0, %v991
  %v993 = vpop.f32.mrb[0].mxu0
  %v994 = vpop.f32.mrb[0].mxu0
  %v995 = vpop.f32.mrb[0].mxu0
  %996 = vdwg.mxu0
  %v997 = vmul.f32 %v992, 0.35355338
  %v998 = vsel %vm80, %v997, -inf
  %999 = vmax.xlane.f32.xlu0 %v998
  %v1000 = vpop.xlane.xlu0 %999
  %v1001 = vsub.f32 %v997, %v1000
  %v1002 = vmul.f32 %v1001, 1.442695
  %v1003 = vpow.pop %v1002
  %v1004 = vsel %vm80, %v1003, 0.0
  %1005 = vadd.xlane.f32.xlu0 %v1004
  %v1006 = vpop.xlane.xlu0 %1005
  %v1007 = vpack.c.bf16 %v1003, %v1003
  %1008 = vrot.lane.b32.xlu0 %v837, 56
  %v1009 = vpop.permute.xlu0 %1008
  %v1011 = vsel %vm80, %v1007, 0
  %v1014 = vsel %vm143, %v1009, 0
  %1016 = vmatprep.subr.bf16.mxu0 0
  %1017 = vmatpush1.bf16.msra.mxu0 %v1014
  %1018 = vmatprep.subr.bf16.mxu0 0
  %1019 = vmatpush1.bf16.msra.mxu0 0
  %1020 = vmatprep.subr.bf16.mxu0 0
  %1021 = vmatpush1.bf16.msra.mxu0 0
  %1022 = vmatprep.subr.bf16.mxu0 0
  %1023 = vmatpush1.bf16.msra.mxu0 0
  %1024 = vmatprep.subr.bf16.mxu0 0
  %1025 = vmatpush1.bf16.msra.mxu0 0
  %1026 = vmatprep.subr.bf16.mxu0 0
  %1027 = vmatpush1.bf16.msra.mxu0 0
  %1028 = vmatprep.subr.bf16.mxu0 0
  %1029 = vmatpush1.bf16.msra.mxu0 0
  %1030 = vmatprep.subr.bf16.mxu0 0
  %1031 = vmatpush1.bf16.msra.mxu0 0
  %1032 = vmatprep.subr.bf16.mxu0 0
  %1033 = vmatpush1.bf16.msra.mxu0 0
  %1034 = vmatprep.subr.bf16.mxu0 0
  %1035 = vmatpush1.bf16.msra.mxu0 0
  %1036 = vmatprep.subr.bf16.mxu0 0
  %1037 = vmatpush1.bf16.msra.mxu0 0
  %1038 = vmatprep.subr.bf16.mxu0 0
  %1039 = vmatpush1.bf16.msra.mxu0 0
  %1040 = vmatprep.subr.bf16.mxu0 0
  %1041 = vmatpush1.bf16.msra.mxu0 0
  %1042 = vmatprep.subr.bf16.mxu0 0
  %1043 = vmatpush1.bf16.msra.mxu0 0
  %1044 = vmatprep.subr.bf16.mxu0 0
  %1045 = vmatpush1.bf16.msra.mxu0 0
  %1046 = vmatprep.subr.bf16.mxu0 0
  %1047 = vmatpush1.bf16.msra.mxu0 0
  %1048 = vmatprep.mubr.bf16.mxu0 0
  %1049 = vmatmul.mubr.bf16.gmra.mrb[0].mxu0 %v1011
  %v1050 = vpop.f32.mrb[0].mxu0
  %v1051 = vadd.f32 0.0, %v1050
  %v1052 = vpop.f32.mrb[0].mxu0
  %v1053 = vpop.f32.mrb[0].mxu0
  %v1054 = vpop.f32.mrb[0].mxu0
  %1055 = vdwg.mxu0
  %v1056 = vrcp.pop %v1006
  %v1057 = vmul.f32 %v1051, %v1056
  %1058 = vrot.lane.b32.xlu0 %v837, 112
  %v1059 = vpop.permute.xlu0 %1058
  %1060 = vrot.lane.b32.xlu0 %v837, 80
  %v1061 = vpop.permute.xlu0 %1060
  %v1063 = vsel %vm80, %v1059, 0
  %v1066 = vsel %vm80, %v1061, 0
  %1068 = vmatprep.subr.bf16.mxu0 0
  %1069 = vmatpush1.bf16.xpose.msra.mxu0 %v1066
  %1070 = vmatprep.subr.bf16.mxu0 0
  %1071 = vmatpush1.bf16.xpose.msra.mxu0 0
  %1072 = vmatprep.subr.bf16.mxu0 0
  %1073 = vmatpush1.bf16.xpose.msra.mxu0 0
  %1074 = vmatprep.subr.bf16.mxu0 0
  %1075 = vmatpush1.bf16.xpose.msra.mxu0 0
  %1076 = vmatprep.subr.bf16.mxu0 0
  %1077 = vmatpush1.bf16.xpose.msra.mxu0 0
  %1078 = vmatprep.subr.bf16.mxu0 0
  %1079 = vmatpush1.bf16.xpose.msra.mxu0 0
  %1080 = vmatprep.subr.bf16.mxu0 0
  %1081 = vmatpush1.bf16.xpose.msra.mxu0 0
  %1082 = vmatprep.subr.bf16.mxu0 0
  %1083 = vmatpush1.bf16.xpose.msra.mxu0 0
  %1084 = vmatprep.subr.bf16.mxu0 0
  %1085 = vmatpush1.bf16.xpose.msra.mxu0 0
  %1086 = vmatprep.subr.bf16.mxu0 0
  %1087 = vmatpush1.bf16.xpose.msra.mxu0 0
  %1088 = vmatprep.subr.bf16.mxu0 0
  %1089 = vmatpush1.bf16.xpose.msra.mxu0 0
  %1090 = vmatprep.subr.bf16.mxu0 0
  %1091 = vmatpush1.bf16.xpose.msra.mxu0 0
  %1092 = vmatprep.subr.bf16.mxu0 0
  %1093 = vmatpush1.bf16.xpose.msra.mxu0 0
  %1094 = vmatprep.subr.bf16.mxu0 0
  %1095 = vmatpush1.bf16.xpose.msra.mxu0 0
  %1096 = vmatprep.subr.bf16.mxu0 0
  %1097 = vmatpush1.bf16.xpose.msra.mxu0 0
  %1098 = vmatprep.subr.bf16.mxu0 0
  %1099 = vmatpush1.bf16.xpose.msra.mxu0 0
  %1100 = vmatprep.mubr.bf16.mxu0 0
  %1101 = vmatmul.mubr.bf16.gmra.mrb[0].mxu0 %v1063
  %v1102 = vpop.f32.mrb[0].mxu0
  %v1103 = vadd.f32 0.0, %v1102
  %v1104 = vpop.f32.mrb[0].mxu0
  %v1105 = vpop.f32.mrb[0].mxu0
  %v1106 = vpop.f32.mrb[0].mxu0
  %1107 = vdwg.mxu0
  %v1108 = vmul.f32 %v1103, 0.35355338
  %v1109 = vsel %vm80, %v1108, -inf
  %1110 = vmax.xlane.f32.xlu0 %v1109
  %v1111 = vpop.xlane.xlu0 %1110
  %v1112 = vsub.f32 %v1108, %v1111
  %v1113 = vmul.f32 %v1112, 1.442695
  %v1114 = vpow.pop %v1113
  %v1115 = vsel %vm80, %v1114, 0.0
  %1116 = vadd.xlane.f32.xlu0 %v1115
  %v1117 = vpop.xlane.xlu0 %1116
  %v1118 = vpack.c.bf16 %v1114, %v1114
  %1119 = vrot.lane.b32.xlu0 %v837, 48
  %v1120 = vpop.permute.xlu0 %1119
  %v1122 = vsel %vm80, %v1118, 0
  %v1125 = vsel %vm143, %v1120, 0
  %1127 = vmatprep.subr.bf16.mxu0 0
  %1128 = vmatpush1.bf16.msra.mxu0 %v1125
  %1129 = vmatprep.subr.bf16.mxu0 0
  %1130 = vmatpush1.bf16.msra.mxu0 0
  %1131 = vmatprep.subr.bf16.mxu0 0
  %1132 = vmatpush1.bf16.msra.mxu0 0
  %1133 = vmatprep.subr.bf16.mxu0 0
  %1134 = vmatpush1.bf16.msra.mxu0 0
  %1135 = vmatprep.subr.bf16.mxu0 0
  %1136 = vmatpush1.bf16.msra.mxu0 0
  %1137 = vmatprep.subr.bf16.mxu0 0
  %1138 = vmatpush1.bf16.msra.mxu0 0
  %1139 = vmatprep.subr.bf16.mxu0 0
  %1140 = vmatpush1.bf16.msra.mxu0 0
  %1141 = vmatprep.subr.bf16.mxu0 0
  %1142 = vmatpush1.bf16.msra.mxu0 0
  %1143 = vmatprep.subr.bf16.mxu0 0
  %1144 = vmatpush1.bf16.msra.mxu0 0
  %1145 = vmatprep.subr.bf16.mxu0 0
  %1146 = vmatpush1.bf16.msra.mxu0 0
  %1147 = vmatprep.subr.bf16.mxu0 0
  %1148 = vmatpush1.bf16.msra.mxu0 0
  %1149 = vmatprep.subr.bf16.mxu0 0
  %1150 = vmatpush1.bf16.msra.mxu0 0
  %1151 = vmatprep.subr.bf16.mxu0 0
  %1152 = vmatpush1.bf16.msra.mxu0 0
  %1153 = vmatprep.subr.bf16.mxu0 0
  %1154 = vmatpush1.bf16.msra.mxu0 0
  %1155 = vmatprep.subr.bf16.mxu0 0
  %1156 = vmatpush1.bf16.msra.mxu0 0
  %1157 = vmatprep.subr.bf16.mxu0 0
  %1158 = vmatpush1.bf16.msra.mxu0 0
  %1159 = vmatprep.mubr.bf16.mxu0 0
  %1160 = vmatmul.mubr.bf16.gmra.mrb[0].mxu0 %v1122
  %v1161 = vpop.f32.mrb[0].mxu0
  %v1162 = vadd.f32 0.0, %v1161
  %v1163 = vpop.f32.mrb[0].mxu0
  %v1164 = vpop.f32.mrb[0].mxu0
  %v1165 = vpop.f32.mrb[0].mxu0
  %1166 = vdwg.mxu0
  %v1167 = vrcp.pop %v1117
  %v1168 = vmul.f32 %v1162, %v1167
  %1169 = vrot.lane.b32.xlu0 %v837, 104
  %v1170 = vpop.permute.xlu0 %1169
  %1171 = vrot.lane.b32.xlu0 %v837, 72
  %v1172 = vpop.permute.xlu0 %1171
  %v1174 = vsel %vm80, %v1170, 0
  %v1177 = vsel %vm80, %v1172, 0
  %1179 = vmatprep.subr.bf16.mxu0 0
  %1180 = vmatpush1.bf16.xpose.msra.mxu0 %v1177
  %1181 = vmatprep.subr.bf16.mxu0 0
  %1182 = vmatpush1.bf16.xpose.msra.mxu0 0
  %1183 = vmatprep.subr.bf16.mxu0 0
  %1184 = vmatpush1.bf16.xpose.msra.mxu0 0
  %1185 = vmatprep.subr.bf16.mxu0 0
  %1186 = vmatpush1.bf16.xpose.msra.mxu0 0
  %1187 = vmatprep.subr.bf16.mxu0 0
  %1188 = vmatpush1.bf16.xpose.msra.mxu0 0
  %1189 = vmatprep.subr.bf16.mxu0 0
  %1190 = vmatpush1.bf16.xpose.msra.mxu0 0
  %1191 = vmatprep.subr.bf16.mxu0 0
  %1192 = vmatpush1.bf16.xpose.msra.mxu0 0
  %1193 = vmatprep.subr.bf16.mxu0 0
  %1194 = vmatpush1.bf16.xpose.msra.mxu0 0
  %1195 = vmatprep.subr.bf16.mxu0 0
  %1196 = vmatpush1.bf16.xpose.msra.mxu0 0
  %1197 = vmatprep.subr.bf16.mxu0 0
  %1198 = vmatpush1.bf16.xpose.msra.mxu0 0
  %1199 = vmatprep.subr.bf16.mxu0 0
  %1200 = vmatpush1.bf16.xpose.msra.mxu0 0
  %1201 = vmatprep.subr.bf16.mxu0 0
  %1202 = vmatpush1.bf16.xpose.msra.mxu0 0
  %1203 = vmatprep.subr.bf16.mxu0 0
  %1204 = vmatpush1.bf16.xpose.msra.mxu0 0
  %1205 = vmatprep.subr.bf16.mxu0 0
  %1206 = vmatpush1.bf16.xpose.msra.mxu0 0
  %1207 = vmatprep.subr.bf16.mxu0 0
  %1208 = vmatpush1.bf16.xpose.msra.mxu0 0
  %1209 = vmatprep.subr.bf16.mxu0 0
  %1210 = vmatpush1.bf16.xpose.msra.mxu0 0
  %1211 = vmatprep.mubr.bf16.mxu0 0
  %1212 = vmatmul.mubr.bf16.gmra.mrb[0].mxu0 %v1174
  %v1213 = vpop.f32.mrb[0].mxu0
  %v1214 = vadd.f32 0.0, %v1213
  %v1215 = vpop.f32.mrb[0].mxu0
  %v1216 = vpop.f32.mrb[0].mxu0
  %v1217 = vpop.f32.mrb[0].mxu0
  %1218 = vdwg.mxu0
  %v1219 = vmul.f32 %v1214, 0.35355338
  %v1220 = vsel %vm80, %v1219, -inf
  %1221 = vmax.xlane.f32.xlu0 %v1220
  %v1222 = vpop.xlane.xlu0 %1221
  %v1223 = vsub.f32 %v1219, %v1222
  %v1224 = vmul.f32 %v1223, 1.442695
  %v1225 = vpow.pop %v1224
  %v1226 = vsel %vm80, %v1225, 0.0
  %1227 = vadd.xlane.f32.xlu0 %v1226
  %v1228 = vpop.xlane.xlu0 %1227
  %v1229 = vpack.c.bf16 %v1225, %v1225
  %1230 = vrot.lane.b32.xlu0 %v837, 40
  %v1231 = vpop.permute.xlu0 %1230
  %v1233 = vsel %vm80, %v1229, 0
  %v1236 = vsel %vm143, %v1231, 0
  %1238 = vmatprep.subr.bf16.mxu0 0
  %1239 = vmatpush1.bf16.msra.mxu0 %v1236
  %1240 = vmatprep.subr.bf16.mxu0 0
  %1241 = vmatpush1.bf16.msra.mxu0 0
  %1242 = vmatprep.subr.bf16.mxu0 0
  %1243 = vmatpush1.bf16.msra.mxu0 0
  %1244 = vmatprep.subr.bf16.mxu0 0
  %1245 = vmatpush1.bf16.msra.mxu0 0
  %1246 = vmatprep.subr.bf16.mxu0 0
  %1247 = vmatpush1.bf16.msra.mxu0 0
  %1248 = vmatprep.subr.bf16.mxu0 0
  %1249 = vmatpush1.bf16.msra.mxu0 0
  %1250 = vmatprep.subr.bf16.mxu0 0
  %1251 = vmatpush1.bf16.msra.mxu0 0
  %1252 = vmatprep.subr.bf16.mxu0 0
  %1253 = vmatpush1.bf16.msra.mxu0 0
  %1254 = vmatprep.subr.bf16.mxu0 0
  %1255 = vmatpush1.bf16.msra.mxu0 0
  %1256 = vmatprep.subr.bf16.mxu0 0
  %1257 = vmatpush1.bf16.msra.mxu0 0
  %1258 = vmatprep.subr.bf16.mxu0 0
  %1259 = vmatpush1.bf16.msra.mxu0 0
  %1260 = vmatprep.subr.bf16.mxu0 0
  %1261 = vmatpush1.bf16.msra.mxu0 0
  %1262 = vmatprep.subr.bf16.mxu0 0
  %1263 = vmatpush1.bf16.msra.mxu0 0
  %1264 = vmatprep.subr.bf16.mxu0 0
  %1265 = vmatpush1.bf16.msra.mxu0 0
  %1266 = vmatprep.subr.bf16.mxu0 0
  %1267 = vmatpush1.bf16.msra.mxu0 0
  %1268 = vmatprep.subr.bf16.mxu0 0
  %1269 = vmatpush1.bf16.msra.mxu0 0
  %1270 = vmatprep.mubr.bf16.mxu0 0
  %1271 = vmatmul.mubr.bf16.gmra.mrb[0].mxu0 %v1233
  %v1272 = vpop.f32.mrb[0].mxu0
  %v1273 = vadd.f32 0.0, %v1272
  %v1274 = vpop.f32.mrb[0].mxu0
  %v1275 = vpop.f32.mrb[0].mxu0
  %v1276 = vpop.f32.mrb[0].mxu0
  %1277 = vdwg.mxu0
  %v1278 = vrcp.pop %v1228
  %v1279 = vmul.f32 %v1273, %v1278
  %1281 = vrot.lane.b32.xlu0 %v1057, 8
  %v1282 = vpop.permute.xlu0 %1281
  %1285 = vrot.lane.b32.xlu0 %v1168, 16
  %v1286 = vpop.permute.xlu0 %1285
  %1289 = vrot.lane.b32.xlu0 %v1279, 24
  %v1290 = vpop.permute.xlu0 %1289
  %v1292 = vsel %vm80, %v946, %v1282
  %v1293 = vsel %vm535, %v1292, %v1286
  %v1294 = vsel %vm537, %v1293, %v1290
  %v1295 = vpack.c.bf16 %v1294, %v1294
  %v1296 = vld [vmem:[%s2] sm:$0xf]
  %v1297 = vld [vmem:[%s2 + $0x4] sm:$0xf]
  %v1298 = vld [vmem:[%s2 + $0x8] sm:$0xf]
  %v1299 = vld [vmem:[%s2 + $0xc] sm:$0xf]
  %v1300 = vld [vmem:[%s3] sm:$0x1]
  %v1302 = vlaneseq
  %v1303 = vshrl.u32 %v1302, 7
  %v1304 = vsub.s32 0, %v1303
  %v1305 = vrot.slane %v1300, %v1304
  %v1311 = vunpack.c.l.b16 %v1296
  %v1312 = vunpack.c.l.b16 %v1297
  %v1313 = vunpack.c.l.b16 %v1298
  %v1314 = vunpack.c.l.b16 %v1299
  %v1315 = vpack.c.b16 %v1312, %v1311
  %v1316 = vpack.c.b16 %v1314, %v1313
  %v1320 = vsel %vm563, %v1295, 0
  %1322 = vmatprep.subr.bf16.mxu0 0
  %1323 = vmatpush1.bf16.msra.mxu0 %v1315
  %1324 = vmatprep.subr.bf16.mxu0 0
  %1325 = vmatpush1.bf16.msra.mxu0 %v1316
  %1326 = vmatprep.subr.bf16.mxu0 0
  %1327 = vmatpush1.bf16.msra.mxu0 0
  %1328 = vmatprep.subr.bf16.mxu0 0
  %1329 = vmatpush1.bf16.msra.mxu0 0
  %1330 = vmatprep.subr.bf16.mxu0 0
  %1331 = vmatpush1.bf16.msra.mxu0 0
  %1332 = vmatprep.subr.bf16.mxu0 0
  %1333 = vmatpush1.bf16.msra.mxu0 0
  %1334 = vmatprep.subr.bf16.mxu0 0
  %1335 = vmatpush1.bf16.msra.mxu0 0
  %1336 = vmatprep.subr.bf16.mxu0 0
  %1337 = vmatpush1.bf16.msra.mxu0 0
  %1338 = vmatprep.subr.bf16.mxu0 0
  %1339 = vmatpush1.bf16.msra.mxu0 0
  %1340 = vmatprep.subr.bf16.mxu0 0
  %1341 = vmatpush1.bf16.msra.mxu0 0
  %1342 = vmatprep.subr.bf16.mxu0 0
  %1343 = vmatpush1.bf16.msra.mxu0 0
  %1344 = vmatprep.subr.bf16.mxu0 0
  %1345 = vmatpush1.bf16.msra.mxu0 0
  %1346 = vmatprep.subr.bf16.mxu0 0
  %1347 = vmatpush1.bf16.msra.mxu0 0
  %1348 = vmatprep.subr.bf16.mxu0 0
  %1349 = vmatpush1.bf16.msra.mxu0 0
  %1350 = vmatprep.subr.bf16.mxu0 0
  %1351 = vmatpush1.bf16.msra.mxu0 0
  %1352 = vmatprep.subr.bf16.mxu0 0
  %1353 = vmatpush1.bf16.msra.mxu0 0
  %1354 = vmatprep.mubr.bf16.mxu0 0
  %1355 = vmatmul.mubr.bf16.gmra.mrb[0].mxu0 %v1320
  %v1356 = vpop.f32.mrb[0].mxu0
  %v1357 = vadd.f32 %v1305, %v1356
  %v1358 = vpop.f32.mrb[0].mxu0
  %v1359 = vpop.f32.mrb[0].mxu0
  %v1360 = vpop.f32.mrb[0].mxu0
  %1361 = vdwg.mxu0
  %v1362 = vld [vmem:[%s0 + $0x1] sm:$0x1]
  %v1363 = vld [vmem:[%s0 + $0x3] sm:$0x1]
  %v1364 = vld [vmem:[%s0 + $0x5] sm:$0x1]
  %v1365 = vld [vmem:[%s0 + $0x7] sm:$0x1]
  %v1366 = vld [vmem:[%s0 + $0x9] sm:$0x1]
  %v1367 = vld [vmem:[%s0 + $0xb] sm:$0x1]
  %v1368 = vld [vmem:[%s0 + $0xd] sm:$0x1]
  %v1369 = vld [vmem:[%s0 + $0xf] sm:$0x1]
  %v1371 = vrot.slane %v1357, 1
  %v1372 = vrot.slane %v1357, 2
  %v1373 = vrot.slane %v1357, 3
  %v1374 = vrot.slane %v1357, 4
  %v1375 = vrot.slane %v1357, 5
  %v1376 = vrot.slane %v1357, 6
  %v1377 = vrot.slane %v1357, 7
  %v1386 = vadd.f32 %v1362, %v1357
  %v1387 = vadd.f32 %v1363, %v1371
  %v1388 = vadd.f32 %v1364, %v1372
  %v1389 = vadd.f32 %v1365, %v1373
  %v1390 = vadd.f32 %v1366, %v1374
  %v1391 = vadd.f32 %v1367, %v1375
  %v1392 = vadd.f32 %v1368, %v1376
  %v1393 = vadd.f32 %v1369, %v1377
  %v1394 = vld [vmem:[%s4] sm:$0x1]
  %v1395 = vld [vmem:[%s5] sm:$0x1]
  %v1404 = vrot.slane %v1387, 7
  %v1405 = vsel %vm57, %v1404, %v1386
  %v1406 = vrot.slane %v1388, 6
  %v1407 = vsel %vm60, %v1406, %v1405
  %v1408 = vrot.slane %v1389, 5
  %v1409 = vsel %vm63, %v1408, %v1407
  %v1410 = vrot.slane %v1390, 4
  %v1411 = vsel %vm66, %v1410, %v1409
  %v1412 = vrot.slane %v1391, 3
  %v1413 = vsel %vm69, %v1412, %v1411
  %v1414 = vrot.slane %v1392, 2
  %v1415 = vsel %vm72, %v1414, %v1413
  %v1416 = vrot.slane %v1393, 1
  %v1417 = vsel %vm75, %v1416, %v1415
  %v1419 = vsel %vm563, %v1417, 0.0
  %1420 = vadd.xlane.f32.xlu0 %v1419
  %v1421 = vpop.xlane.xlu0 %1420
  %v1422 = vmul.f32 %v1421, %v667
  %v1424 = vrot.slane %v1422, 1
  %v1425 = vrot.slane %v1422, 2
  %v1426 = vrot.slane %v1422, 3
  %v1427 = vrot.slane %v1422, 4
  %v1428 = vrot.slane %v1422, 5
  %v1429 = vrot.slane %v1422, 6
  %v1430 = vrot.slane %v1422, 7
  %v1439 = vsub.f32 %v1386, %v1422
  %v1440 = vsub.f32 %v1387, %v1424
  %v1441 = vsub.f32 %v1388, %v1425
  %v1442 = vsub.f32 %v1389, %v1426
  %v1443 = vsub.f32 %v1390, %v1427
  %v1444 = vsub.f32 %v1391, %v1428
  %v1445 = vsub.f32 %v1392, %v1429
  %v1446 = vsub.f32 %v1393, %v1430
  %v1447 = vmul.f32 %v1439, %v1439
  %v1448 = vmul.f32 %v1440, %v1440
  %v1449 = vmul.f32 %v1441, %v1441
  %v1450 = vmul.f32 %v1442, %v1442
  %v1451 = vmul.f32 %v1443, %v1443
  %v1452 = vmul.f32 %v1444, %v1444
  %v1453 = vmul.f32 %v1445, %v1445
  %v1454 = vmul.f32 %v1446, %v1446
  %v1463 = vrot.slane %v1448, 7
  %v1464 = vsel %vm57, %v1463, %v1447
  %v1465 = vrot.slane %v1449, 6
  %v1466 = vsel %vm60, %v1465, %v1464
  %v1467 = vrot.slane %v1450, 5
  %v1468 = vsel %vm63, %v1467, %v1466
  %v1469 = vrot.slane %v1451, 4
  %v1470 = vsel %vm66, %v1469, %v1468
  %v1471 = vrot.slane %v1452, 3
  %v1472 = vsel %vm69, %v1471, %v1470
  %v1473 = vrot.slane %v1453, 2
  %v1474 = vsel %vm72, %v1473, %v1472
  %v1475 = vrot.slane %v1454, 1
  %v1476 = vsel %vm75, %v1475, %v1474
  %v1478 = vsel %vm563, %v1476, 0.0
  %1479 = vadd.xlane.f32.xlu0 %v1478
  %v1480 = vpop.xlane.xlu0 %1479
  %v1481 = vmul.f32 %v1480, %v667
  %v1482 = vadd.f32 %v1481, 1e-05
  %v1483 = vrsqrt.pop %v1482
  %v1485 = vrot.slane %v1483, 1
  %v1486 = vrot.slane %v1483, 2
  %v1487 = vrot.slane %v1483, 3
  %v1488 = vrot.slane %v1483, 4
  %v1489 = vrot.slane %v1483, 5
  %v1490 = vrot.slane %v1483, 6
  %v1491 = vrot.slane %v1483, 7
  %v1500 = vmul.f32 %v1439, %v1483
  %v1501 = vmul.f32 %v1440, %v1485
  %v1502 = vmul.f32 %v1441, %v1486
  %v1503 = vmul.f32 %v1442, %v1487
  %v1504 = vmul.f32 %v1443, %v1488
  %v1505 = vmul.f32 %v1444, %v1489
  %v1506 = vmul.f32 %v1445, %v1490
  %v1507 = vmul.f32 %v1446, %v1491
  %v1509 = vlaneseq
  %v1510 = vshrl.u32 %v1509, 7
  %v1511 = vsub.s32 0, %v1510
  %v1512 = vrot.slane %v1394, %v1511
  %v1514 = vmul.f32 %v1500, %v1512
  %v1515 = vmul.f32 %v1501, %v1512
  %v1516 = vmul.f32 %v1502, %v1512
  %v1517 = vmul.f32 %v1503, %v1512
  %v1518 = vmul.f32 %v1504, %v1512
  %v1519 = vmul.f32 %v1505, %v1512
  %v1520 = vmul.f32 %v1506, %v1512
  %v1521 = vmul.f32 %v1507, %v1512
  %v1523 = vlaneseq
  %v1524 = vshrl.u32 %v1523, 7
  %v1525 = vsub.s32 0, %v1524
  %v1526 = vrot.slane %v1395, %v1525
  %v1528 = vadd.f32 %v1514, %v1526
  %v1529 = vadd.f32 %v1515, %v1526
  %v1530 = vadd.f32 %v1516, %v1526
  %v1531 = vadd.f32 %v1517, %v1526
  %v1532 = vadd.f32 %v1518, %v1526
  %v1533 = vadd.f32 %v1519, %v1526
  %v1534 = vadd.f32 %v1520, %v1526
  %v1535 = vadd.f32 %v1521, %v1526
  %1536 = vst.msk [vmem:[%s6 + $0x1] sm:$0x1] %vm782, %v1528
  %1537 = vst.msk [vmem:[%s6 + $0x3] sm:$0x1] %vm782, %v1529
  %1538 = vst.msk [vmem:[%s6 + $0x5] sm:$0x1] %vm782, %v1530
  %1539 = vst.msk [vmem:[%s6 + $0x7] sm:$0x1] %vm782, %v1531
  %1540 = vst.msk [vmem:[%s6 + $0x9] sm:$0x1] %vm782, %v1532
  %1541 = vst.msk [vmem:[%s6 + $0xb] sm:$0x1] %vm782, %v1533
  %1542 = vst.msk [vmem:[%s6 + $0xd] sm:$0x1] %vm782, %v1534
  %1543 = vst.msk [vmem:[%s6 + $0xf] sm:$0x1] %vm782, %v1535
  // Predicated region
  $region26: #{transformer_classifier_forward.8} parent=0 // pred_check
    _
  $region27: #{transformer_classifier_forward.8} parent=0 // pred_check_branch
    %1545 = sbr.rel (0) target = $region29
  $region28: #{transformer_classifier_forward.8} parent=0 // pred_region
    _
  $region29: #{transformer_classifier_forward.8} parent=0 // pred_fallthru
    _
  // Predicated region
  $region30: #{transformer_classifier_forward.8} parent=0 // pred_check
    _
  $region31: #{transformer_classifier_forward.8} parent=0 // pred_check_branch
    %1547 = sbr.rel (0) target = $region33
  $region32: #{transformer_classifier_forward.8} parent=0 // pred_region
    _
  $region33: #{transformer_classifier_forward.8} parent=0 // pred_fallthru
    _

// kernel: transformer_classifier_forward.9
$region0: #{transformer_classifier_forward.9}
  #allocation0 [shape = 'u32[]', space=smem, size = 0x4, offset = 0x4, fixed_abs, tag = 'smem constant byte address 0x4 - core index']
  #allocation1 [shape = 'u32[144,128]{1,0:T(1,128)}', space=vmem, size = 0x12000, scoped, tag = 'internal scratch']
  %s0 = inlined_call_operand.vmem [shape: f32[16,32], index: 0, kind: input, shape index: {}]
  %s1 = inlined_call_operand.vmem [shape: bf16[32,2048], index: 1, kind: input, shape index: {}]
  %s2 = inlined_call_operand.vmem [shape: f32[1,2048], index: 2, kind: input, shape index: {}]
  %s3 = inlined_call_operand.vmem [shape: bf16[2048,32], index: 3, kind: input, shape index: {}]
  %s4 = inlined_call_operand.vmem [shape: f32[1,32], index: 4, kind: input, shape index: {}]
  %s5 = inlined_call_operand.vmem [shape: f32[1,32], index: 5, kind: input, shape index: {}]
  %s6 = inlined_call_operand.vmem [shape: f32[1,32], index: 6, kind: input, shape index: {}]
  %s7 = inlined_call_operand.vmem [shape: f32[16,32], index: 7, kind: output, shape index: {}]
  %s8 = sld [smem:[#allocation0]]
  $region38: #{transformer_classifier_forward.9} parent=0
    _
  %s10 = ssub.s32 1, %s8
  %s11 = scalar_select 0, %s10, %s8
  // Predicated region
  $region2: #{transformer_classifier_forward.9} parent=0 // pred_check
    _
  $region3: #{transformer_classifier_forward.9} parent=0 // pred_check_branch
    %13 = sbr.rel (0) target = $region5
  $region4: #{transformer_classifier_forward.9} parent=0 // pred_region
    _
  $region5: #{transformer_classifier_forward.9} parent=0 // pred_fallthru
    _
  // Predicated region
  $region6: #{transformer_classifier_forward.9} parent=0 // pred_check
    _
  $region7: #{transformer_classifier_forward.9} parent=0 // pred_check_branch
    %15 = sbr.rel (0) target = $region9
  $region8: #{transformer_classifier_forward.9} parent=0 // pred_region
    _
  $region9: #{transformer_classifier_forward.9} parent=0 // pred_fallthru
    _
  // Predicated region
  $region10: #{transformer_classifier_forward.9} parent=0 // pred_check
    _
  $region11: #{transformer_classifier_forward.9} parent=0 // pred_check_branch
    %17 = sbr.rel (0) target = $region13
  $region12: #{transformer_classifier_forward.9} parent=0 // pred_region
    _
  $region13: #{transformer_classifier_forward.9} parent=0 // pred_fallthru
    _
  // Predicated region
  $region14: #{transformer_classifier_forward.9} parent=0 // pred_check
    _
  $region15: #{transformer_classifier_forward.9} parent=0 // pred_check_branch
    %19 = sbr.rel (0) target = $region17
  $region16: #{transformer_classifier_forward.9} parent=0 // pred_region
    _
  $region17: #{transformer_classifier_forward.9} parent=0 // pred_fallthru
    _
  // Predicated region
  $region18: #{transformer_classifier_forward.9} parent=0 // pred_check
    _
  $region19: #{transformer_classifier_forward.9} parent=0 // pred_check_branch
    %21 = sbr.rel (0) target = $region21
  $region20: #{transformer_classifier_forward.9} parent=0 // pred_region
    _
  $region21: #{transformer_classifier_forward.9} parent=0 // pred_fallthru
    _
  // Predicated region
  $region22: #{transformer_classifier_forward.9} parent=0 // pred_check
    _
  $region23: #{transformer_classifier_forward.9} parent=0 // pred_check_branch
    %23 = sbr.rel (0) target = $region25
  $region24: #{transformer_classifier_forward.9} parent=0 // pred_region
    _
  $region25: #{transformer_classifier_forward.9} parent=0 // pred_fallthru
    _
  // Predicated region
  $region26: #{transformer_classifier_forward.9} parent=0 // pred_check
    _
  $region27: #{transformer_classifier_forward.9} parent=0 // pred_check_branch
    %25 = sbr.rel (0) target = $region29
  $region28: #{transformer_classifier_forward.9} parent=0 // pred_region
    _
  $region29: #{transformer_classifier_forward.9} parent=0 // pred_fallthru
    _
  %v27 = vld [vmem:[%s0] sm:$0xff]
  %v28 = vld [vmem:[%s0 + $0x8] sm:$0xff]
  %v29 = vpack.c.bf16 %v28, %v27
  %v30 = vld [vmem:[%s1] sm:$0xff]
  %v31 = vld [vmem:[%s1 + $0x8] sm:$0xff]
  %v32 = vld [vmem:[%s1 + $0x10] sm:$0xff]
  %v33 = vld [vmem:[%s1 + $0x18] sm:$0xff]
  %v34 = vld [vmem:[%s1 + $0x20] sm:$0xff]
  %v35 = vld [vmem:[%s1 + $0x28] sm:$0xff]
  %v36 = vld [vmem:[%s1 + $0x30] sm:$0xff]
  %v37 = vld [vmem:[%s1 + $0x38] sm:$0xff]
  %v38 = vld [vmem:[%s1 + $0x40] sm:$0xff]
  %v39 = vld [vmem:[%s1 + $0x48] sm:$0xff]
  %v40 = vld [vmem:[%s1 + $0x50] sm:$0xff]
  %v41 = vld [vmem:[%s1 + $0x58] sm:$0xff]
  %v42 = vld [vmem:[%s1 + $0x60] sm:$0xff]
  %v43 = vld [vmem:[%s1 + $0x68] sm:$0xff]
  %v44 = vld [vmem:[%s1 + $0x70] sm:$0xff]
  %v45 = vld [vmem:[%s1 + $0x78] sm:$0xff]
  %v46 = vld [vmem:[%s1 + $0x80] sm:$0xff]
  %v47 = vld [vmem:[%s1 + $0x88] sm:$0xff]
  %v48 = vld [vmem:[%s1 + $0x90] sm:$0xff]
  %v49 = vld [vmem:[%s1 + $0x98] sm:$0xff]
  %v50 = vld [vmem:[%s1 + $0xa0] sm:$0xff]
  %v51 = vld [vmem:[%s1 + $0xa8] sm:$0xff]
  %v52 = vld [vmem:[%s1 + $0xb0] sm:$0xff]
  %v53 = vld [vmem:[%s1 + $0xb8] sm:$0xff]
  %v54 = vld [vmem:[%s1 + $0xc0] sm:$0xff]
  %v55 = vld [vmem:[%s1 + $0xc8] sm:$0xff]
  %v56 = vld [vmem:[%s1 + $0xd0] sm:$0xff]
  %v57 = vld [vmem:[%s1 + $0xd8] sm:$0xff]
  %v58 = vld [vmem:[%s1 + $0xe0] sm:$0xff]
  %v59 = vld [vmem:[%s1 + $0xe8] sm:$0xff]
  %v60 = vld [vmem:[%s1 + $0xf0] sm:$0xff]
  %v61 = vld [vmem:[%s1 + $0xf8] sm:$0xff]
  %v62 = vld [vmem:[%s2] sm:$0xff]
  %v63 = vld [vmem:[%s2 + $0x8] sm:$0xff]
  %v66 = vlaneseq
  %v67 = vshrl.u32 %v66, 7
  %v68 = vsub.s32 0, %v67
  %v69 = vrot.slane %v62, %v68
  %v70 = vlaneseq
  %v71 = vshrl.u32 %v70, 7
  %v72 = vsub.s32 1, %v71
  %v73 = vrot.slane %v62, %v72
  %v74 = vlaneseq
  %v75 = vshrl.u32 %v74, 7
  %v76 = vsub.s32 2, %v75
  %v77 = vrot.slane %v62, %v76
  %v78 = vlaneseq
  %v79 = vshrl.u32 %v78, 7
  %v80 = vsub.s32 3, %v79
  %v81 = vrot.slane %v62, %v80
  %v82 = vlaneseq
  %v83 = vshrl.u32 %v82, 7
  %v84 = vsub.s32 4, %v83
  %v85 = vrot.slane %v62, %v84
  %v86 = vlaneseq
  %v87 = vshrl.u32 %v86, 7
  %v88 = vsub.s32 5, %v87
  %v89 = vrot.slane %v62, %v88
  %v90 = vlaneseq
  %v91 = vshrl.u32 %v90, 7
  %v92 = vsub.s32 6, %v91
  %v93 = vrot.slane %v62, %v92
  %v94 = vlaneseq
  %v95 = vshrl.u32 %v94, 7
  %v96 = vsub.s32 7, %v95
  %v97 = vrot.slane %v62, %v96
  %v98 = vlaneseq
  %v99 = vshrl.u32 %v98, 7
  %v100 = vsub.s32 0, %v99
  %v101 = vrot.slane %v63, %v100
  %v102 = vlaneseq
  %v103 = vshrl.u32 %v102, 7
  %v104 = vsub.s32 1, %v103
  %v105 = vrot.slane %v63, %v104
  %v106 = vlaneseq
  %v107 = vshrl.u32 %v106, 7
  %v108 = vsub.s32 2, %v107
  %v109 = vrot.slane %v63, %v108
  %v110 = vlaneseq
  %v111 = vshrl.u32 %v110, 7
  %v112 = vsub.s32 3, %v111
  %v113 = vrot.slane %v63, %v112
  %v114 = vlaneseq
  %v115 = vshrl.u32 %v114, 7
  %v116 = vsub.s32 4, %v115
  %v117 = vrot.slane %v63, %v116
  %v118 = vlaneseq
  %v119 = vshrl.u32 %v118, 7
  %v120 = vsub.s32 5, %v119
  %v121 = vrot.slane %v63, %v120
  %v122 = vlaneseq
  %v123 = vshrl.u32 %v122, 7
  %v124 = vsub.s32 6, %v123
  %v125 = vrot.slane %v63, %v124
  %v126 = vlaneseq
  %v127 = vshrl.u32 %v126, 7
  %v128 = vsub.s32 7, %v127
  %v129 = vrot.slane %v63, %v128
  %v178 = vunpack.c.l.b16 %v30
  %v179 = vunpack.c.h.b16 %v30
  %v180 = vunpack.c.l.b16 %v31
  %v181 = vunpack.c.h.b16 %v31
  %v182 = vunpack.c.l.b16 %v32
  %v183 = vunpack.c.h.b16 %v32
  %v184 = vunpack.c.l.b16 %v33
  %v185 = vunpack.c.h.b16 %v33
  %v186 = vunpack.c.l.b16 %v34
  %v187 = vunpack.c.h.b16 %v34
  %v188 = vunpack.c.l.b16 %v35
  %v189 = vunpack.c.h.b16 %v35
  %v190 = vunpack.c.l.b16 %v36
  %v191 = vunpack.c.h.b16 %v36
  %v192 = vunpack.c.l.b16 %v37
  %v193 = vunpack.c.h.b16 %v37
  %v194 = vunpack.c.l.b16 %v38
  %v195 = vunpack.c.h.b16 %v38
  %v196 = vunpack.c.l.b16 %v39
  %v197 = vunpack.c.h.b16 %v39
  %v198 = vunpack.c.l.b16 %v40
  %v199 = vunpack.c.h.b16 %v40
  %v200 = vunpack.c.l.b16 %v41
  %v201 = vunpack.c.h.b16 %v41
  %v202 = vunpack.c.l.b16 %v42
  %v203 = vunpack.c.h.b16 %v42
  %v204 = vunpack.c.l.b16 %v43
  %v205 = vunpack.c.h.b16 %v43
  %v206 = vunpack.c.l.b16 %v44
  %v207 = vunpack.c.h.b16 %v44
  %v208 = vunpack.c.l.b16 %v45
  %v209 = vunpack.c.h.b16 %v45
  %v210 = vunpack.c.l.b16 %v46
  %v211 = vunpack.c.h.b16 %v46
  %v212 = vunpack.c.l.b16 %v47
  %v213 = vunpack.c.h.b16 %v47
  %v214 = vunpack.c.l.b16 %v48
  %v215 = vunpack.c.h.b16 %v48
  %v216 = vunpack.c.l.b16 %v49
  %v217 = vunpack.c.h.b16 %v49
  %v218 = vunpack.c.l.b16 %v50
  %v219 = vunpack.c.h.b16 %v50
  %v220 = vunpack.c.l.b16 %v51
  %v221 = vunpack.c.h.b16 %v51
  %v222 = vunpack.c.l.b16 %v52
  %v223 = vunpack.c.h.b16 %v52
  %v224 = vunpack.c.l.b16 %v53
  %v225 = vunpack.c.h.b16 %v53
  %v226 = vunpack.c.l.b16 %v54
  %v227 = vunpack.c.h.b16 %v54
  %v228 = vunpack.c.l.b16 %v55
  %v229 = vunpack.c.h.b16 %v55
  %v230 = vunpack.c.l.b16 %v56
  %v231 = vunpack.c.h.b16 %v56
  %v232 = vunpack.c.l.b16 %v57
  %v233 = vunpack.c.h.b16 %v57
  %v234 = vunpack.c.l.b16 %v58
  %v235 = vunpack.c.h.b16 %v58
  %v236 = vunpack.c.l.b16 %v59
  %v237 = vunpack.c.h.b16 %v59
  %v238 = vunpack.c.l.b16 %v60
  %v239 = vunpack.c.h.b16 %v60
  %v240 = vunpack.c.l.b16 %v61
  %v241 = vunpack.c.h.b16 %v61
  %v242 = vpack.c.b16 %v194, %v178
  %v243 = vpack.c.b16 %v195, %v179
  %v244 = vpack.c.b16 %v196, %v180
  %v245 = vpack.c.b16 %v197, %v181
  %v246 = vpack.c.b16 %v198, %v182
  %v247 = vpack.c.b16 %v199, %v183
  %v248 = vpack.c.b16 %v200, %v184
  %v249 = vpack.c.b16 %v201, %v185
  %v250 = vpack.c.b16 %v202, %v186
  %v251 = vpack.c.b16 %v203, %v187
  %v252 = vpack.c.b16 %v204, %v188
  %v253 = vpack.c.b16 %v205, %v189
  %v254 = vpack.c.b16 %v206, %v190
  %v255 = vpack.c.b16 %v207, %v191
  %v256 = vpack.c.b16 %v208, %v192
  %v257 = vpack.c.b16 %v209, %v193
  %v258 = vpack.c.b16 %v226, %v210
  %v259 = vpack.c.b16 %v227, %v211
  %v260 = vpack.c.b16 %v228, %v212
  %v261 = vpack.c.b16 %v229, %v213
  %v262 = vpack.c.b16 %v230, %v214
  %v263 = vpack.c.b16 %v231, %v215
  %v264 = vpack.c.b16 %v232, %v216
  %v265 = vpack.c.b16 %v233, %v217
  %v266 = vpack.c.b16 %v234, %v218
  %v267 = vpack.c.b16 %v235, %v219
  %v268 = vpack.c.b16 %v236, %v220
  %v269 = vpack.c.b16 %v237, %v221
  %v270 = vpack.c.b16 %v238, %v222
  %v271 = vpack.c.b16 %v239, %v223
  %v272 = vpack.c.b16 %v240, %v224
  %v273 = vpack.c.b16 %v241, %v225
  %vm306 = vcmask 261120
  %v308 = vsel %vm306, %v29, 0
  %310 = vmatprep.subr.bf16.mxu0 %v243
  %311 = vmatpush1.bf16.msra.mxu0 %v242
  %312 = vmatprep.subr.bf16.mxu0 %v259
  %313 = vmatpush1.bf16.msra.mxu0 %v258
  %314 = vmatprep.subr.bf16.mxu0 0
  %315 = vmatpush1.bf16.msra.mxu0 0
  %316 = vmatprep.subr.bf16.mxu0 0
  %317 = vmatpush1.bf16.msra.mxu0 0
  %318 = vmatprep.subr.bf16.mxu0 0
  %319 = vmatpush1.bf16.msra.mxu0 0
  %320 = vmatprep.subr.bf16.mxu0 0
  %321 = vmatpush1.bf16.msra.mxu0 0
  %322 = vmatprep.subr.bf16.mxu0 0
  %323 = vmatpush1.bf16.msra.mxu0 0
  %324 = vmatprep.subr.bf16.mxu0 0
  %325 = vmatpush1.bf16.msra.mxu0 0
  %326 = vmatprep.subr.bf16.mxu0 0
  %327 = vmatpush1.bf16.msra.mxu0 0
  %328 = vmatprep.subr.bf16.mxu0 0
  %329 = vmatpush1.bf16.msra.mxu0 0
  %330 = vmatprep.subr.bf16.mxu0 0
  %331 = vmatpush1.bf16.msra.mxu0 0
  %332 = vmatprep.subr.bf16.mxu0 0
  %333 = vmatpush1.bf16.msra.mxu0 0
  %334 = vmatprep.subr.bf16.mxu0 0
  %335 = vmatpush1.bf16.msra.mxu0 0
  %336 = vmatprep.subr.bf16.mxu0 0
  %337 = vmatpush1.bf16.msra.mxu0 0
  %338 = vmatprep.subr.bf16.mxu0 0
  %339 = vmatpush1.bf16.msra.mxu0 0
  %340 = vmatprep.subr.bf16.mxu0 0
  %341 = vmatpush1.bf16.msra.mxu0 0
  %342 = vmatprep.mubr.bf16.mxu0 0
  %343 = vmatmul.mubr.bf16.gmra.mrb[0].mxu0 %v308
  %v344 = vpop.f32.mrb[0].mxu0
  %v345 = vadd.f32 %v69, %v344
  %v346 = vpop.f32.mrb[0].mxu0
  %v347 = vadd.f32 %v73, %v346
  %v348 = vpop.f32.mrb[0].mxu0
  %v349 = vadd.f32 %v69, %v348
  %v350 = vpop.f32.mrb[0].mxu0
  %v351 = vadd.f32 %v73, %v350
  %352 = vdwg.mxu0
  %353 = vmatprep.subr.bf16.mxu0 %v245
  %354 = vmatpush1.bf16.msra.mxu0 %v244
  %355 = vmatprep.subr.bf16.mxu0 %v261
  %356 = vmatpush1.bf16.msra.mxu0 %v260
  %357 = vmatprep.subr.bf16.mxu0 0
  %358 = vmatpush1.bf16.msra.mxu0 0
  %359 = vmatprep.subr.bf16.mxu0 0
  %360 = vmatpush1.bf16.msra.mxu0 0
  %361 = vmatprep.subr.bf16.mxu0 0
  %362 = vmatpush1.bf16.msra.mxu0 0
  %363 = vmatprep.subr.bf16.mxu0 0
  %364 = vmatpush1.bf16.msra.mxu0 0
  %365 = vmatprep.subr.bf16.mxu0 0
  %366 = vmatpush1.bf16.msra.mxu0 0
  %367 = vmatprep.subr.bf16.mxu0 0
  %368 = vmatpush1.bf16.msra.mxu0 0
  %369 = vmatprep.subr.bf16.mxu0 0
  %370 = vmatpush1.bf16.msra.mxu0 0
  %371 = vmatprep.subr.bf16.mxu0 0
  %372 = vmatpush1.bf16.msra.mxu0 0
  %373 = vmatprep.subr.bf16.mxu0 0
  %374 = vmatpush1.bf16.msra.mxu0 0
  %375 = vmatprep.subr.bf16.mxu0 0
  %376 = vmatpush1.bf16.msra.mxu0 0
  %377 = vmatprep.subr.bf16.mxu0 0
  %378 = vmatpush1.bf16.msra.mxu0 0
  %379 = vmatprep.subr.bf16.mxu0 0
  %380 = vmatpush1.bf16.msra.mxu0 0
  %381 = vmatprep.subr.bf16.mxu0 0
  %382 = vmatpush1.bf16.msra.mxu0 0
  %383 = vmatprep.subr.bf16.mxu0 0
  %384 = vmatpush1.bf16.msra.mxu0 0
  %385 = vmatprep.mubr.bf16.mxu0 0
  %386 = vmatmul.mubr.bf16.gmra.mrb[0].mxu0 %v308
  %v387 = vpop.f32.mrb[0].mxu0
  %v388 = vadd.f32 %v77, %v387
  %v389 = vpop.f32.mrb[0].mxu0
  %v390 = vadd.f32 %v81, %v389
  %v391 = vpop.f32.mrb[0].mxu0
  %v392 = vadd.f32 %v77, %v391
  %v393 = vpop.f32.mrb[0].mxu0
  %v394 = vadd.f32 %v81, %v393
  %395 = vdwg.mxu0
  %396 = vmatprep.subr.bf16.mxu0 %v247
  %397 = vmatpush1.bf16.msra.mxu0 %v246
  %398 = vmatprep.subr.bf16.mxu0 %v263
  %399 = vmatpush1.bf16.msra.mxu0 %v262
  %400 = vmatprep.subr.bf16.mxu0 0
  %401 = vmatpush1.bf16.msra.mxu0 0
  %402 = vmatprep.subr.bf16.mxu0 0
  %403 = vmatpush1.bf16.msra.mxu0 0
  %404 = vmatprep.subr.bf16.mxu0 0
  %405 = vmatpush1.bf16.msra.mxu0 0
  %406 = vmatprep.subr.bf16.mxu0 0
  %407 = vmatpush1.bf16.msra.mxu0 0
  %408 = vmatprep.subr.bf16.mxu0 0
  %409 = vmatpush1.bf16.msra.mxu0 0
  %410 = vmatprep.subr.bf16.mxu0 0
  %411 = vmatpush1.bf16.msra.mxu0 0
  %412 = vmatprep.subr.bf16.mxu0 0
  %413 = vmatpush1.bf16.msra.mxu0 0
  %414 = vmatprep.subr.bf16.mxu0 0
  %415 = vmatpush1.bf16.msra.mxu0 0
  %416 = vmatprep.subr.bf16.mxu0 0
  %417 = vmatpush1.bf16.msra.mxu0 0
  %418 = vmatprep.subr.bf16.mxu0 0
  %419 = vmatpush1.bf16.msra.mxu0 0
  %420 = vmatprep.subr.bf16.mxu0 0
  %421 = vmatpush1.bf16.msra.mxu0 0
  %422 = vmatprep.subr.bf16.mxu0 0
  %423 = vmatpush1.bf16.msra.mxu0 0
  %424 = vmatprep.subr.bf16.mxu0 0
  %425 = vmatpush1.bf16.msra.mxu0 0
  %426 = vmatprep.subr.bf16.mxu0 0
  %427 = vmatpush1.bf16.msra.mxu0 0
  %428 = vmatprep.mubr.bf16.mxu0 0
  %429 = vmatmul.mubr.bf16.gmra.mrb[0].mxu0 %v308
  %v430 = vpop.f32.mrb[0].mxu0
  %v431 = vadd.f32 %v85, %v430
  %v432 = vpop.f32.mrb[0].mxu0
  %v433 = vadd.f32 %v89, %v432
  %v434 = vpop.f32.mrb[0].mxu0
  %v435 = vadd.f32 %v85, %v434
  %v436 = vpop.f32.mrb[0].mxu0
  %v437 = vadd.f32 %v89, %v436
  %438 = vdwg.mxu0
  %439 = vmatprep.subr.bf16.mxu0 %v249
  %440 = vmatpush1.bf16.msra.mxu0 %v248
  %441 = vmatprep.subr.bf16.mxu0 %v265
  %442 = vmatpush1.bf16.msra.mxu0 %v264
  %443 = vmatprep.subr.bf16.mxu0 0
  %444 = vmatpush1.bf16.msra.mxu0 0
  %445 = vmatprep.subr.bf16.mxu0 0
  %446 = vmatpush1.bf16.msra.mxu0 0
  %447 = vmatprep.subr.bf16.mxu0 0
  %448 = vmatpush1.bf16.msra.mxu0 0
  %449 = vmatprep.subr.bf16.mxu0 0
  %450 = vmatpush1.bf16.msra.mxu0 0
  %451 = vmatprep.subr.bf16.mxu0 0
  %452 = vmatpush1.bf16.msra.mxu0 0
  %453 = vmatprep.subr.bf16.mxu0 0
  %454 = vmatpush1.bf16.msra.mxu0 0
  %455 = vmatprep.subr.bf16.mxu0 0
  %456 = vmatpush1.bf16.msra.mxu0 0
  %457 = vmatprep.subr.bf16.mxu0 0
  %458 = vmatpush1.bf16.msra.mxu0 0
  %459 = vmatprep.subr.bf16.mxu0 0
  %460 = vmatpush1.bf16.msra.mxu0 0
  %461 = vmatprep.subr.bf16.mxu0 0
  %462 = vmatpush1.bf16.msra.mxu0 0
  %463 = vmatprep.subr.bf16.mxu0 0
  %464 = vmatpush1.bf16.msra.mxu0 0
  %465 = vmatprep.subr.bf16.mxu0 0
  %466 = vmatpush1.bf16.msra.mxu0 0
  %467 = vmatprep.subr.bf16.mxu0 0
  %468 = vmatpush1.bf16.msra.mxu0 0
  %469 = vmatprep.subr.bf16.mxu0 0
  %470 = vmatpush1.bf16.msra.mxu0 0
  %471 = vmatprep.mubr.bf16.mxu0 0
  %472 = vmatmul.mubr.bf16.gmra.mrb[0].mxu0 %v308
  %v473 = vpop.f32.mrb[0].mxu0
  %v474 = vadd.f32 %v93, %v473
  %v475 = vpop.f32.mrb[0].mxu0
  %v476 = vadd.f32 %v97, %v475
  %v477 = vpop.f32.mrb[0].mxu0
  %v478 = vadd.f32 %v93, %v477
  %v479 = vpop.f32.mrb[0].mxu0
  %v480 = vadd.f32 %v97, %v479
  %481 = vdwg.mxu0
  %482 = vmatprep.subr.bf16.mxu0 %v251
  %483 = vmatpush1.bf16.msra.mxu0 %v250
  %484 = vmatprep.subr.bf16.mxu0 %v267
  %485 = vmatpush1.bf16.msra.mxu0 %v266
  %486 = vmatprep.subr.bf16.mxu0 0
  %487 = vmatpush1.bf16.msra.mxu0 0
  %488 = vmatprep.subr.bf16.mxu0 0
  %489 = vmatpush1.bf16.msra.mxu0 0
  %490 = vmatprep.subr.bf16.mxu0 0
  %491 = vmatpush1.bf16.msra.mxu0 0
  %492 = vmatprep.subr.bf16.mxu0 0
  %493 = vmatpush1.bf16.msra.mxu0 0
  %494 = vmatprep.subr.bf16.mxu0 0
  %495 = vmatpush1.bf16.msra.mxu0 0
  %496 = vmatprep.subr.bf16.mxu0 0
  %497 = vmatpush1.bf16.msra.mxu0 0
  %498 = vmatprep.subr.bf16.mxu0 0
  %499 = vmatpush1.bf16.msra.mxu0 0
  %500 = vmatprep.subr.bf16.mxu0 0
  %501 = vmatpush1.bf16.msra.mxu0 0
  %502 = vmatprep.subr.bf16.mxu0 0
  %503 = vmatpush1.bf16.msra.mxu0 0
  %504 = vmatprep.subr.bf16.mxu0 0
  %505 = vmatpush1.bf16.msra.mxu0 0
  %506 = vmatprep.subr.bf16.mxu0 0
  %507 = vmatpush1.bf16.msra.mxu0 0
  %508 = vmatprep.subr.bf16.mxu0 0
  %509 = vmatpush1.bf16.msra.mxu0 0
  %510 = vmatprep.subr.bf16.mxu0 0
  %511 = vmatpush1.bf16.msra.mxu0 0
  %512 = vmatprep.subr.bf16.mxu0 0
  %513 = vmatpush1.bf16.msra.mxu0 0
  %514 = vmatprep.mubr.bf16.mxu0 0
  %515 = vmatmul.mubr.bf16.gmra.mrb[0].mxu0 %v308
  %v516 = vpop.f32.mrb[0].mxu0
  %v517 = vadd.f32 %v101, %v516
  %v518 = vpop.f32.mrb[0].mxu0
  %v519 = vadd.f32 %v105, %v518
  %v520 = vpop.f32.mrb[0].mxu0
  %v521 = vadd.f32 %v101, %v520
  %v522 = vpop.f32.mrb[0].mxu0
  %v523 = vadd.f32 %v105, %v522
  %524 = vdwg.mxu0
  %525 = vmatprep.subr.bf16.mxu0 %v253
  %526 = vmatpush1.bf16.msra.mxu0 %v252
  %527 = vmatprep.subr.bf16.mxu0 %v269
  %528 = vmatpush1.bf16.msra.mxu0 %v268
  %529 = vmatprep.subr.bf16.mxu0 0
  %530 = vmatpush1.bf16.msra.mxu0 0
  %531 = vmatprep.subr.bf16.mxu0 0
  %532 = vmatpush1.bf16.msra.mxu0 0
  %533 = vmatprep.subr.bf16.mxu0 0
  %534 = vmatpush1.bf16.msra.mxu0 0
  %535 = vmatprep.subr.bf16.mxu0 0
  %536 = vmatpush1.bf16.msra.mxu0 0
  %537 = vmatprep.subr.bf16.mxu0 0
  %538 = vmatpush1.bf16.msra.mxu0 0
  %539 = vmatprep.subr.bf16.mxu0 0
  %540 = vmatpush1.bf16.msra.mxu0 0
  %541 = vmatprep.subr.bf16.mxu0 0
  %542 = vmatpush1.bf16.msra.mxu0 0
  %543 = vmatprep.subr.bf16.mxu0 0
  %544 = vmatpush1.bf16.msra.mxu0 0
  %545 = vmatprep.subr.bf16.mxu0 0
  %546 = vmatpush1.bf16.msra.mxu0 0
  %547 = vmatprep.subr.bf16.mxu0 0
  %548 = vmatpush1.bf16.msra.mxu0 0
  %549 = vmatprep.subr.bf16.mxu0 0
  %550 = vmatpush1.bf16.msra.mxu0 0
  %551 = vmatprep.subr.bf16.mxu0 0
  %552 = vmatpush1.bf16.msra.mxu0 0
  %553 = vmatprep.subr.bf16.mxu0 0
  %554 = vmatpush1.bf16.msra.mxu0 0
  %555 = vmatprep.subr.bf16.mxu0 0
  %556 = vmatpush1.bf16.msra.mxu0 0
  %557 = vmatprep.mubr.bf16.mxu0 0
  %558 = vmatmul.mubr.bf16.gmra.mrb[0].mxu0 %v308
  %v559 = vpop.f32.mrb[0].mxu0
  %v560 = vadd.f32 %v109, %v559
  %v561 = vpop.f32.mrb[0].mxu0
  %v562 = vadd.f32 %v113, %v561
  %v563 = vpop.f32.mrb[0].mxu0
  %v564 = vadd.f32 %v109, %v563
  %v565 = vpop.f32.mrb[0].mxu0
  %v566 = vadd.f32 %v113, %v565
  %567 = vdwg.mxu0
  %568 = vmatprep.subr.bf16.mxu0 %v255
  %569 = vmatpush1.bf16.msra.mxu0 %v254
  %570 = vmatprep.subr.bf16.mxu0 %v271
  %571 = vmatpush1.bf16.msra.mxu0 %v270
  %572 = vmatprep.subr.bf16.mxu0 0
  %573 = vmatpush1.bf16.msra.mxu0 0
  %574 = vmatprep.subr.bf16.mxu0 0
  %575 = vmatpush1.bf16.msra.mxu0 0
  %576 = vmatprep.subr.bf16.mxu0 0
  %577 = vmatpush1.bf16.msra.mxu0 0
  %578 = vmatprep.subr.bf16.mxu0 0
  %579 = vmatpush1.bf16.msra.mxu0 0
  %580 = vmatprep.subr.bf16.mxu0 0
  %581 = vmatpush1.bf16.msra.mxu0 0
  %582 = vmatprep.subr.bf16.mxu0 0
  %583 = vmatpush1.bf16.msra.mxu0 0
  %584 = vmatprep.subr.bf16.mxu0 0
  %585 = vmatpush1.bf16.msra.mxu0 0
  %586 = vmatprep.subr.bf16.mxu0 0
  %587 = vmatpush1.bf16.msra.mxu0 0
  %588 = vmatprep.subr.bf16.mxu0 0
  %589 = vmatpush1.bf16.msra.mxu0 0
  %590 = vmatprep.subr.bf16.mxu0 0
  %591 = vmatpush1.bf16.msra.mxu0 0
  %592 = vmatprep.subr.bf16.mxu0 0
  %593 = vmatpush1.bf16.msra.mxu0 0
  %594 = vmatprep.subr.bf16.mxu0 0
  %595 = vmatpush1.bf16.msra.mxu0 0
  %596 = vmatprep.subr.bf16.mxu0 0
  %597 = vmatpush1.bf16.msra.mxu0 0
  %598 = vmatprep.subr.bf16.mxu0 0
  %599 = vmatpush1.bf16.msra.mxu0 0
  %600 = vmatprep.mubr.bf16.mxu0 0
  %601 = vmatmul.mubr.bf16.gmra.mrb[0].mxu0 %v308
  %v602 = vpop.f32.mrb[0].mxu0
  %v603 = vadd.f32 %v117, %v602
  %v604 = vpop.f32.mrb[0].mxu0
  %v605 = vadd.f32 %v121, %v604
  %v606 = vpop.f32.mrb[0].mxu0
  %v607 = vadd.f32 %v117, %v606
  %v608 = vpop.f32.mrb[0].mxu0
  %v609 = vadd.f32 %v121, %v608
  %610 = vdwg.mxu0
  %611 = vmatprep.subr.bf16.mxu0 %v257
  %612 = vmatpush1.bf16.msra.mxu0 %v256
  %613 = vmatprep.subr.bf16.mxu0 %v273
  %614 = vmatpush1.bf16.msra.mxu0 %v272
  %615 = vmatprep.subr.bf16.mxu0 0
  %616 = vmatpush1.bf16.msra.mxu0 0
  %617 = vmatprep.subr.bf16.mxu0 0
  %618 = vmatpush1.bf16.msra.mxu0 0
  %619 = vmatprep.subr.bf16.mxu0 0
  %620 = vmatpush1.bf16.msra.mxu0 0
  %621 = vmatprep.subr.bf16.mxu0 0
  %622 = vmatpush1.bf16.msra.mxu0 0
  %623 = vmatprep.subr.bf16.mxu0 0
  %624 = vmatpush1.bf16.msra.mxu0 0
  %625 = vmatprep.subr.bf16.mxu0 0
  %626 = vmatpush1.bf16.msra.mxu0 0
  %627 = vmatprep.subr.bf16.mxu0 0
  %628 = vmatpush1.bf16.msra.mxu0 0
  %629 = vmatprep.subr.bf16.mxu0 0
  %630 = vmatpush1.bf16.msra.mxu0 0
  %631 = vmatprep.subr.bf16.mxu0 0
  %632 = vmatpush1.bf16.msra.mxu0 0
  %633 = vmatprep.subr.bf16.mxu0 0
  %634 = vmatpush1.bf16.msra.mxu0 0
  %635 = vmatprep.subr.bf16.mxu0 0
  %636 = vmatpush1.bf16.msra.mxu0 0
  %637 = vmatprep.subr.bf16.mxu0 0
  %638 = vmatpush1.bf16.msra.mxu0 0
  %639 = vmatprep.subr.bf16.mxu0 0
  %640 = vmatpush1.bf16.msra.mxu0 0
  %641 = vmatprep.subr.bf16.mxu0 0
  %642 = vmatpush1.bf16.msra.mxu0 0
  %643 = vmatprep.mubr.bf16.mxu0 0
  %644 = vmatmul.mubr.bf16.gmra.mrb[0].mxu0 %v308
  %v645 = vpop.f32.mrb[0].mxu0
  %v646 = vadd.f32 %v125, %v645
  %v647 = vpop.f32.mrb[0].mxu0
  %v648 = vadd.f32 %v129, %v647
  %v649 = vpop.f32.mrb[0].mxu0
  %v650 = vadd.f32 %v125, %v649
  %v651 = vpop.f32.mrb[0].mxu0
  %v652 = vadd.f32 %v129, %v651
  %653 = vdwg.mxu0
  %v654 = vmax.f32 %v345, 0.0
  %v655 = vmax.f32 %v347, 0.0
  %v656 = vmax.f32 %v388, 0.0
  %v657 = vmax.f32 %v390, 0.0
  %v658 = vmax.f32 %v431, 0.0
  %v659 = vmax.f32 %v433, 0.0
  %v660 = vmax.f32 %v474, 0.0
  %v661 = vmax.f32 %v476, 0.0
  %v662 = vmax.f32 %v517, 0.0
  %v663 = vmax.f32 %v519, 0.0
  %v664 = vmax.f32 %v560, 0.0
  %v665 = vmax.f32 %v562, 0.0
  %v666 = vmax.f32 %v603, 0.0
  %v667 = vmax.f32 %v605, 0.0
  %v668 = vmax.f32 %v646, 0.0
  %v669 = vmax.f32 %v648, 0.0
  %v670 = vmax.f32 %v349, 0.0
  %v671 = vmax.f32 %v351, 0.0
  %v672 = vmax.f32 %v392, 0.0
  %v673 = vmax.f32 %v394, 0.0
  %v674 = vmax.f32 %v435, 0.0
  %v675 = vmax.f32 %v437, 0.0
  %v676 = vmax.f32 %v478, 0.0
  %v677 = vmax.f32 %v480, 0.0
  %v678 = vmax.f32 %v521, 0.0
  %v679 = vmax.f32 %v523, 0.0
  %v680 = vmax.f32 %v564, 0.0
  %v681 = vmax.f32 %v566, 0.0
  %v682 = vmax.f32 %v607, 0.0
  %v683 = vmax.f32 %v609, 0.0
  %v684 = vmax.f32 %v650, 0.0
  %v685 = vmax.f32 %v652, 0.0
  %v686 = vpack.c.bf16 %v670, %v654
  %v687 = vpack.c.bf16 %v671, %v655
  %v688 = vpack.c.bf16 %v672, %v656
  %v689 = vpack.c.bf16 %v673, %v657
  %v690 = vpack.c.bf16 %v674, %v658
  %v691 = vpack.c.bf16 %v675, %v659
  %v692 = vpack.c.bf16 %v676, %v660
  %v693 = vpack.c.bf16 %v677, %v661
  %v694 = vpack.c.bf16 %v678, %v662
  %v695 = vpack.c.bf16 %v679, %v663
  %v696 = vpack.c.bf16 %v680, %v664
  %v697 = vpack.c.bf16 %v681, %v665
  %v698 = vpack.c.bf16 %v682, %v666
  %v699 = vpack.c.bf16 %v683, %v667
  %v700 = vpack.c.bf16 %v684, %v668
  %v701 = vpack.c.bf16 %v685, %v669
  %v702 = vld [vmem:[%s3] sm:$0xf]
  %v703 = vld [vmem:[%s3 + $0x4] sm:$0xf]
  %v704 = vld [vmem:[%s3 + $0x8] sm:$0xf]
  %v705 = vld [vmem:[%s3 + $0xc] sm:$0xf]
  %v706 = vld [vmem:[%s3 + $0x10] sm:$0xf]
  %v707 = vld [vmem:[%s3 + $0x14] sm:$0xf]
  %v708 = vld [vmem:[%s3 + $0x18] sm:$0xf]
  %v709 = vld [vmem:[%s3 + $0x1c] sm:$0xf]
  %v710 = vld [vmem:[%s3 + $0x20] sm:$0xf]
  %v711 = vld [vmem:[%s3 + $0x24] sm:$0xf]
  %v712 = vld [vmem:[%s3 + $0x28] sm:$0xf]
  %v713 = vld [vmem:[%s3 + $0x2c] sm:$0xf]
  %v714 = vld [vmem:[%s3 + $0x30] sm:$0xf]
  %v715 = vld [vmem:[%s3 + $0x34] sm:$0xf]
  %v716 = vld [vmem:[%s3 + $0x38] sm:$0xf]
  %v717 = vld [vmem:[%s3 + $0x3c] sm:$0xf]
  %v718 = vld [vmem:[%s3 + $0x40] sm:$0xf]
  %v719 = vld [vmem:[%s3 + $0x44] sm:$0xf]
  %v720 = vld [vmem:[%s3 + $0x48] sm:$0xf]
  %v721 = vld [vmem:[%s3 + $0x4c] sm:$0xf]
  %v722 = vld [vmem:[%s3 + $0x50] sm:$0xf]
  %v723 = vld [vmem:[%s3 + $0x54] sm:$0xf]
  %v724 = vld [vmem:[%s3 + $0x58] sm:$0xf]
  %v725 = vld [vmem:[%s3 + $0x5c] sm:$0xf]
  %v726 = vld [vmem:[%s3 + $0x60] sm:$0xf]
  %v727 = vld [vmem:[%s3 + $0x64] sm:$0xf]
  %v728 = vld [vmem:[%s3 + $0x68] sm:$0xf]
  %v729 = vld [vmem:[%s3 + $0x6c] sm:$0xf]
  %v730 = vld [vmem:[%s3 + $0x70] sm:$0xf]
  %v731 = vld [vmem:[%s3 + $0x74] sm:$0xf]
  %v732 = vld [vmem:[%s3 + $0x78] sm:$0xf]
  %v733 = vld [vmem:[%s3 + $0x7c] sm:$0xf]
  %v734 = vld [vmem:[%s3 + $0x80] sm:$0xf]
  %v735 = vld [vmem:[%s3 + $0x84] sm:$0xf]
  %v736 = vld [vmem:[%s3 + $0x88] sm:$0xf]
  %v737 = vld [vmem:[%s3 + $0x8c] sm:$0xf]
  %v738 = vld [vmem:[%s3 + $0x90] sm:$0xf]
  %v739 = vld [vmem:[%s3 + $0x94] sm:$0xf]
  %v740 = vld [vmem:[%s3 + $0x98] sm:$0xf]
  %v741 = vld [vmem:[%s3 + $0x9c] sm:$0xf]
  %v742 = vld [vmem:[%s3 + $0xa0] sm:$0xf]
  %v743 = vld [vmem:[%s3 + $0xa4] sm:$0xf]
  %v744 = vld [vmem:[%s3 + $0xa8] sm:$0xf]
  %v745 = vld [vmem:[%s3 + $0xac] sm:$0xf]
  %v746 = vld [vmem:[%s3 + $0xb0] sm:$0xf]
  %v747 = vld [vmem:[%s3 + $0xb4] sm:$0xf]
  %v748 = vld [vmem:[%s3 + $0xb8] sm:$0xf]
  %v749 = vld [vmem:[%s3 + $0xbc] sm:$0xf]
  %v750 = vld [vmem:[%s3 + $0xc0] sm:$0xf]
  %v751 = vld [vmem:[%s3 + $0xc4] sm:$0xf]
  %v752 = vld [vmem:[%s3 + $0xc8] sm:$0xf]
  %v753 = vld [vmem:[%s3 + $0xcc] sm:$0xf]
  %v754 = vld [vmem:[%s3 + $0xd0] sm:$0xf]
  %v755 = vld [vmem:[%s3 + $0xd4] sm:$0xf]
  %v756 = vld [vmem:[%s3 + $0xd8] sm:$0xf]
  %v757 = vld [vmem:[%s3 + $0xdc] sm:$0xf]
  %v758 = vld [vmem:[%s3 + $0xe0] sm:$0xf]
  %v759 = vld [vmem:[%s3 + $0xe4] sm:$0xf]
  %v760 = vld [vmem:[%s3 + $0xe8] sm:$0xf]
  %v761 = vld [vmem:[%s3 + $0xec] sm:$0xf]
  %v762 = vld [vmem:[%s3 + $0xf0] sm:$0xf]
  %v763 = vld [vmem:[%s3 + $0xf4] sm:$0xf]
  %v764 = vld [vmem:[%s3 + $0xf8] sm:$0xf]
  %v765 = vld [vmem:[%s3 + $0xfc] sm:$0xf]
  %v766 = vld [vmem:[%s3 + $0x100] sm:$0xf]
  %v767 = vld [vmem:[%s3 + $0x104] sm:$0xf]
  %v768 = vld [vmem:[%s3 + $0x108] sm:$0xf]
  %v769 = vld [vmem:[%s3 + $0x10c] sm:$0xf]
  %v770 = vld [vmem:[%s3 + $0x110] sm:$0xf]
  %v771 = vld [vmem:[%s3 + $0x114] sm:$0xf]
  %v772 = vld [vmem:[%s3 + $0x118] sm:$0xf]
  %v773 = vld [vmem:[%s3 + $0x11c] sm:$0xf]
  %v774 = vld [vmem:[%s3 + $0x120] sm:$0xf]
  %v775 = vld [vmem:[%s3 + $0x124] sm:$0xf]
  %v776 = vld [vmem:[%s3 + $0x128] sm:$0xf]
  %v777 = vld [vmem:[%s3 + $0x12c] sm:$0xf]
  %v778 = vld [vmem:[%s3 + $0x130] sm:$0xf]
  %v779 = vld [vmem:[%s3 + $0x134] sm:$0xf]
  %v780 = vld [vmem:[%s3 + $0x138] sm:$0xf]
  %v781 = vld [vmem:[%s3 + $0x13c] sm:$0xf]
  %v782 = vld [vmem:[%s3 + $0x140] sm:$0xf]
  %v783 = vld [vmem:[%s3 + $0x144] sm:$0xf]
  %v784 = vld [vmem:[%s3 + $0x148] sm:$0xf]
  %v785 = vld [vmem:[%s3 + $0x14c] sm:$0xf]
  %v786 = vld [vmem:[%s3 + $0x150] sm:$0xf]
  %v787 = vld [vmem:[%s3 + $0x154] sm:$0xf]
  %v788 = vld [vmem:[%s3 + $0x158] sm:$0xf]
  %v789 = vld [vmem:[%s3 + $0x15c] sm:$0xf]
  %v790 = vld [vmem:[%s3 + $0x160] sm:$0xf]
  %v791 = vld [vmem:[%s3 + $0x164] sm:$0xf]
  %v792 = vld [vmem:[%s3 + $0x168] sm:$0xf]
  %v793 = vld [vmem:[%s3 + $0x16c] sm:$0xf]
  %v794 = vld [vmem:[%s3 + $0x170] sm:$0xf]
  %v795 = vld [vmem:[%s3 + $0x174] sm:$0xf]
  %v796 = vld [vmem:[%s3 + $0x178] sm:$0xf]
  %v797 = vld [vmem:[%s3 + $0x17c] sm:$0xf]
  %v798 = vld [vmem:[%s3 + $0x180] sm:$0xf]
  %v799 = vld [vmem:[%s3 + $0x184] sm:$0xf]
  %v800 = vld [vmem:[%s3 + $0x188] sm:$0xf]
  %v801 = vld [vmem:[%s3 + $0x18c] sm:$0xf]
  %v802 = vld [vmem:[%s3 + $0x190] sm:$0xf]
  %v803 = vld [vmem:[%s3 + $0x194] sm:$0xf]
  %v804 = vld [vmem:[%s3 + $0x198] sm:$0xf]
  %v805 = vld [vmem:[%s3 + $0x19c] sm:$0xf]
  %v806 = vld [vmem:[%s3 + $0x1a0] sm:$0xf]
  %v807 = vld [vmem:[%s3 + $0x1a4] sm:$0xf]
  %v808 = vld [vmem:[%s3 + $0x1a8] sm:$0xf]
  %v809 = vld [vmem:[%s3 + $0x1ac] sm:$0xf]
  %v810 = vld [vmem:[%s3 + $0x1b0] sm:$0xf]
  %v811 = vld [vmem:[%s3 + $0x1b4] sm:$0xf]
  %v812 = vld [vmem:[%s3 + $0x1b8] sm:$0xf]
  %v813 = vld [vmem:[%s3 + $0x1bc] sm:$0xf]
  %v814 = vld [vmem:[%s3 + $0x1c0] sm:$0xf]
  %v815 = vld [vmem:[%s3 + $0x1c4] sm:$0xf]
  %v816 = vld [vmem:[%s3 + $0x1c8] sm:$0xf]
  %v817 = vld [vmem:[%s3 + $0x1cc] sm:$0xf]
  %v818 = vld [vmem:[%s3 + $0x1d0] sm:$0xf]
  %v819 = vld [vmem:[%s3 + $0x1d4] sm:$0xf]
  %v820 = vld [vmem:[%s3 + $0x1d8] sm:$0xf]
  %v821 = vld [vmem:[%s3 + $0x1dc] sm:$0xf]
  %v822 = vld [vmem:[%s3 + $0x1e0] sm:$0xf]
  %v823 = vld [vmem:[%s3 + $0x1e4] sm:$0xf]
  %v824 = vld [vmem:[%s3 + $0x1e8] sm:$0xf]
  %v825 = vld [vmem:[%s3 + $0x1ec] sm:$0xf]
  %v826 = vld [vmem:[%s3 + $0x1f0] sm:$0xf]
  %v827 = vld [vmem:[%s3 + $0x1f4] sm:$0xf]
  %v828 = vld [vmem:[%s3 + $0x1f8] sm:$0xf]
  %v829 = vld [vmem:[%s3 + $0x1fc] sm:$0xf]
  %v830 = vld [vmem:[%s3 + $0x200] sm:$0xf]
  %v831 = vld [vmem:[%s3 + $0x204] sm:$0xf]
  %v832 = vld [vmem:[%s3 + $0x208] sm:$0xf]
  %v833 = vld [vmem:[%s3 + $0x20c] sm:$0xf]
  %v834 = vld [vmem:[%s3 + $0x210] sm:$0xf]
  %v835 = vld [vmem:[%s3 + $0x214] sm:$0xf]
  %v836 = vld [vmem:[%s3 + $0x218] sm:$0xf]
  %v837 = vld [vmem:[%s3 + $0x21c] sm:$0xf]
  %v838 = vld [vmem:[%s3 + $0x220] sm:$0xf]
  %v839 = vld [vmem:[%s3 + $0x224] sm:$0xf]
  %v840 = vld [vmem:[%s3 + $0x228] sm:$0xf]
  %v841 = vld [vmem:[%s3 + $0x22c] sm:$0xf]
  %v842 = vld [vmem:[%s3 + $0x230] sm:$0xf]
  %v843 = vld [vmem:[%s3 + $0x234] sm:$0xf]
  %v844 = vld [vmem:[%s3 + $0x238] sm:$0xf]
  %v845 = vld [vmem:[%s3 + $0x23c] sm:$0xf]
  %v846 = vld [vmem:[%s3 + $0x240] sm:$0xf]
  %v847 = vld [vmem:[%s3 + $0x244] sm:$0xf]
  %v848 = vld [vmem:[%s3 + $0x248] sm:$0xf]
  %v849 = vld [vmem:[%s3 + $0x24c] sm:$0xf]
  %v850 = vld [vmem:[%s3 + $0x250] sm:$0xf]
  %v851 = vld [vmem:[%s3 + $0x254] sm:$0xf]
  %v852 = vld [vmem:[%s3 + $0x258] sm:$0xf]
  %v853 = vld [vmem:[%s3 + $0x25c] sm:$0xf]
  %v854 = vld [vmem:[%s3 + $0x260] sm:$0xf]
  %v855 = vld [vmem:[%s3 + $0x264] sm:$0xf]
  %v856 = vld [vmem:[%s3 + $0x268] sm:$0xf]
  %v857 = vld [vmem:[%s3 + $0x26c] sm:$0xf]
  %v858 = vld [vmem:[%s3 + $0x270] sm:$0xf]
  %v859 = vld [vmem:[%s3 + $0x274] sm:$0xf]
  %v860 = vld [vmem:[%s3 + $0x278] sm:$0xf]
  %v861 = vld [vmem:[%s3 + $0x27c] sm:$0xf]
  %v862 = vld [vmem:[%s3 + $0x280] sm:$0xf]
  %v863 = vld [vmem:[%s3 + $0x284] sm:$0xf]
  %v864 = vld [vmem:[%s3 + $0x288] sm:$0xf]
  %v865 = vld [vmem:[%s3 + $0x28c] sm:$0xf]
  %v866 = vld [vmem:[%s3 + $0x290] sm:$0xf]
  %v867 = vld [vmem:[%s3 + $0x294] sm:$0xf]
  %v868 = vld [vmem:[%s3 + $0x298] sm:$0xf]
  %v869 = vld [vmem:[%s3 + $0x29c] sm:$0xf]
  %v870 = vld [vmem:[%s3 + $0x2a0] sm:$0xf]
  %v871 = vld [vmem:[%s3 + $0x2a4] sm:$0xf]
  %v872 = vld [vmem:[%s3 + $0x2a8] sm:$0xf]
  %v873 = vld [vmem:[%s3 + $0x2ac] sm:$0xf]
  %v874 = vld [vmem:[%s3 + $0x2b0] sm:$0xf]
  %v875 = vld [vmem:[%s3 + $0x2b4] sm:$0xf]
  %v876 = vld [vmem:[%s3 + $0x2b8] sm:$0xf]
  %v877 = vld [vmem:[%s3 + $0x2bc] sm:$0xf]
  %v878 = vld [vmem:[%s3 + $0x2c0] sm:$0xf]
  %v879 = vld [vmem:[%s3 + $0x2c4] sm:$0xf]
  %v880 = vld [vmem:[%s3 + $0x2c8] sm:$0xf]
  %v881 = vld [vmem:[%s3 + $0x2cc] sm:$0xf]
  %v882 = vld [vmem:[%s3 + $0x2d0] sm:$0xf]
  %v883 = vld [vmem:[%s3 + $0x2d4] sm:$0xf]
  %v884 = vld [vmem:[%s3 + $0x2d8] sm:$0xf]
  %v885 = vld [vmem:[%s3 + $0x2dc] sm:$0xf]
  %v886 = vld [vmem:[%s3 + $0x2e0] sm:$0xf]
  %v887 = vld [vmem:[%s3 + $0x2e4] sm:$0xf]
  %v888 = vld [vmem:[%s3 + $0x2e8] sm:$0xf]
  %v889 = vld [vmem:[%s3 + $0x2ec] sm:$0xf]
  %v890 = vld [vmem:[%s3 + $0x2f0] sm:$0xf]
  %v891 = vld [vmem:[%s3 + $0x2f4] sm:$0xf]
  %v892 = vld [vmem:[%s3 + $0x2f8] sm:$0xf]
  %v893 = vld [vmem:[%s3 + $0x2fc] sm:$0xf]
  %v894 = vld [vmem:[%s3 + $0x300] sm:$0xf]
  %v895 = vld [vmem:[%s3 + $0x304] sm:$0xf]
  %v896 = vld [vmem:[%s3 + $0x308] sm:$0xf]
  %v897 = vld [vmem:[%s3 + $0x30c] sm:$0xf]
  %v898 = vld [vmem:[%s3 + $0x310] sm:$0xf]
  %v899 = vld [vmem:[%s3 + $0x314] sm:$0xf]
  %v900 = vld [vmem:[%s3 + $0x318] sm:$0xf]
  %v901 = vld [vmem:[%s3 + $0x31c] sm:$0xf]
  %v902 = vld [vmem:[%s3 + $0x320] sm:$0xf]
  %v903 = vld [vmem:[%s3 + $0x324] sm:$0xf]
  %v904 = vld [vmem:[%s3 + $0x328] sm:$0xf]
  %v905 = vld [vmem:[%s3 + $0x32c] sm:$0xf]
  %v906 = vld [vmem:[%s3 + $0x330] sm:$0xf]
  %v907 = vld [vmem:[%s3 + $0x334] sm:$0xf]
  %v908 = vld [vmem:[%s3 + $0x338] sm:$0xf]
  %v909 = vld [vmem:[%s3 + $0x33c] sm:$0xf]
  %v910 = vld [vmem:[%s3 + $0x340] sm:$0xf]
  %v911 = vld [vmem:[%s3 + $0x344] sm:$0xf]
  %v912 = vld [vmem:[%s3 + $0x348] sm:$0xf]
  %v913 = vld [vmem:[%s3 + $0x34c] sm:$0xf]
  %v914 = vld [vmem:[%s3 + $0x350] sm:$0xf]
  %v915 = vld [vmem:[%s3 + $0x354] sm:$0xf]
  %v916 = vld [vmem:[%s3 + $0x358] sm:$0xf]
  %v917 = vld [vmem:[%s3 + $0x35c] sm:$0xf]
  %v918 = vld [vmem:[%s3 + $0x360] sm:$0xf]
  %v919 = vld [vmem:[%s3 + $0x364] sm:$0xf]
  %v920 = vld [vmem:[%s3 + $0x368] sm:$0xf]
  %v921 = vld [vmem:[%s3 + $0x36c] sm:$0xf]
  %v922 = vld [vmem:[%s3 + $0x370] sm:$0xf]
  %v923 = vld [vmem:[%s3 + $0x374] sm:$0xf]
  %v924 = vld [vmem:[%s3 + $0x378] sm:$0xf]
  %v925 = vld [vmem:[%s3 + $0x37c] sm:$0xf]
  %v926 = vld [vmem:[%s3 + $0x380] sm:$0xf]
  %v927 = vld [vmem:[%s3 + $0x384] sm:$0xf]
  %v928 = vld [vmem:[%s3 + $0x388] sm:$0xf]
  %v929 = vld [vmem:[%s3 + $0x38c] sm:$0xf]
  %v930 = vld [vmem:[%s3 + $0x390] sm:$0xf]
  %v931 = vld [vmem:[%s3 + $0x394] sm:$0xf]
  %v932 = vld [vmem:[%s3 + $0x398] sm:$0xf]
  %v933 = vld [vmem:[%s3 + $0x39c] sm:$0xf]
  %v934 = vld [vmem:[%s3 + $0x3a0] sm:$0xf]
  %v935 = vld [vmem:[%s3 + $0x3a4] sm:$0xf]
  %v936 = vld [vmem:[%s3 + $0x3a8] sm:$0xf]
  %v937 = vld [vmem:[%s3 + $0x3ac] sm:$0xf]
  %v938 = vld [vmem:[%s3 + $0x3b0] sm:$0xf]
  %v939 = vld [vmem:[%s3 + $0x3b4] sm:$0xf]
  %v940 = vld [vmem:[%s3 + $0x3b8] sm:$0xf]
  %v941 = vld [vmem:[%s3 + $0x3bc] sm:$0xf]
  %v942 = vld [vmem:[%s3 + $0x3c0] sm:$0xf]
  %v943 = vld [vmem:[%s3 + $0x3c4] sm:$0xf]
  %v944 = vld [vmem:[%s3 + $0x3c8] sm:$0xf]
  %v945 = vld [vmem:[%s3 + $0x3cc] sm:$0xf]
  %v946 = vld [vmem:[%s3 + $0x3d0] sm:$0xf]
  %v947 = vld [vmem:[%s3 + $0x3d4] sm:$0xf]
  %v948 = vld [vmem:[%s3 + $0x3d8] sm:$0xf]
  %v949 = vld [vmem:[%s3 + $0x3dc] sm:$0xf]
  %v950 = vld [vmem:[%s3 + $0x3e0] sm:$0xf]
  %v951 = vld [vmem:[%s3 + $0x3e4] sm:$0xf]
  %v952 = vld [vmem:[%s3 + $0x3e8] sm:$0xf]
  %v953 = vld [vmem:[%s3 + $0x3ec] sm:$0xf]
  %v954 = vld [vmem:[%s3 + $0x3f0] sm:$0xf]
  %v955 = vld [vmem:[%s3 + $0x3f4] sm:$0xf]
  %v956 = vld [vmem:[%s3 + $0x3f8] sm:$0xf]
  %v957 = vld [vmem:[%s3 + $0x3fc] sm:$0xf]
  %v958 = vld [vmem:[%s4] sm:$0x1]
  %v960 = vlaneseq
  %v961 = vshrl.u32 %v960, 7
  %v962 = vsub.s32 0, %v961
  %v963 = vrot.slane %v958, %v962
  %v1221 = vunpack.c.l.b16 %v702
  %v1222 = vunpack.c.l.b16 %v703
  %v1223 = vunpack.c.l.b16 %v704
  %v1224 = vunpack.c.l.b16 %v705
  %v1225 = vunpack.c.l.b16 %v706
  %v1226 = vunpack.c.l.b16 %v707
  %v1227 = vunpack.c.l.b16 %v708
  %v1228 = vunpack.c.l.b16 %v709
  %v1229 = vunpack.c.l.b16 %v710
  %v1230 = vunpack.c.l.b16 %v711
  %v1231 = vunpack.c.l.b16 %v712
  %v1232 = vunpack.c.l.b16 %v713
  %v1233 = vunpack.c.l.b16 %v714
  %v1234 = vunpack.c.l.b16 %v715
  %v1235 = vunpack.c.l.b16 %v716
  %v1236 = vunpack.c.l.b16 %v717
  %v1237 = vunpack.c.l.b16 %v718
  %v1238 = vunpack.c.l.b16 %v719
  %v1239 = vunpack.c.l.b16 %v720
  %v1240 = vunpack.c.l.b16 %v721
  %v1241 = vunpack.c.l.b16 %v722
  %v1242 = vunpack.c.l.b16 %v723
  %v1243 = vunpack.c.l.b16 %v724
  %v1244 = vunpack.c.l.b16 %v725
  %v1245 = vunpack.c.l.b16 %v726
  %v1246 = vunpack.c.l.b16 %v727
  %v1247 = vunpack.c.l.b16 %v728
  %v1248 = vunpack.c.l.b16 %v729
  %v1249 = vunpack.c.l.b16 %v730
  %v1250 = vunpack.c.l.b16 %v731
  %v1251 = vunpack.c.l.b16 %v732
  %v1252 = vunpack.c.l.b16 %v733
  %v1253 = vunpack.c.l.b16 %v734
  %v1254 = vunpack.c.l.b16 %v735
  %v1255 = vunpack.c.l.b16 %v736
  %v1256 = vunpack.c.l.b16 %v737
  %v1257 = vunpack.c.l.b16 %v738
  %v1258 = vunpack.c.l.b16 %v739
  %v1259 = vunpack.c.l.b16 %v740
  %v1260 = vunpack.c.l.b16 %v741
  %v1261 = vunpack.c.l.b16 %v742
  %v1262 = vunpack.c.l.b16 %v743
  %v1263 = vunpack.c.l.b16 %v744
  %v1264 = vunpack.c.l.b16 %v745
  %v1265 = vunpack.c.l.b16 %v746
  %v1266 = vunpack.c.l.b16 %v747
  %v1267 = vunpack.c.l.b16 %v748
  %v1268 = vunpack.c.l.b16 %v749
  %v1269 = vunpack.c.l.b16 %v750
  %v1270 = vunpack.c.l.b16 %v751
  %v1271 = vunpack.c.l.b16 %v752
  %v1272 = vunpack.c.l.b16 %v753
  %v1273 = vunpack.c.l.b16 %v754
  %v1274 = vunpack.c.l.b16 %v755
  %v1275 = vunpack.c.l.b16 %v756
  %v1276 = vunpack.c.l.b16 %v757
  %v1277 = vunpack.c.l.b16 %v758
  %v1278 = vunpack.c.l.b16 %v759
  %v1279 = vunpack.c.l.b16 %v760
  %v1280 = vunpack.c.l.b16 %v761
  %v1281 = vunpack.c.l.b16 %v762
  %v1282 = vunpack.c.l.b16 %v763
  %v1283 = vunpack.c.l.b16 %v764
  %v1284 = vunpack.c.l.b16 %v765
  %v1285 = vunpack.c.l.b16 %v766
  %v1286 = vunpack.c.l.b16 %v767
  %v1287 = vunpack.c.l.b16 %v768
  %v1288 = vunpack.c.l.b16 %v769
  %v1289 = vunpack.c.l.b16 %v770
  %v1290 = vunpack.c.l.b16 %v771
  %v1291 = vunpack.c.l.b16 %v772
  %v1292 = vunpack.c.l.b16 %v773
  %v1293 = vunpack.c.l.b16 %v774
  %v1294 = vunpack.c.l.b16 %v775
  %v1295 = vunpack.c.l.b16 %v776
  %v1296 = vunpack.c.l.b16 %v777
  %v1297 = vunpack.c.l.b16 %v778
  %v1298 = vunpack.c.l.b16 %v779
  %v1299 = vunpack.c.l.b16 %v780
  %v1300 = vunpack.c.l.b16 %v781
  %v1301 = vunpack.c.l.b16 %v782
  %v1302 = vunpack.c.l.b16 %v783
  %v1303 = vunpack.c.l.b16 %v784
  %v1304 = vunpack.c.l.b16 %v785
  %v1305 = vunpack.c.l.b16 %v786
  %v1306 = vunpack.c.l.b16 %v787
  %v1307 = vunpack.c.l.b16 %v788
  %v1308 = vunpack.c.l.b16 %v789
  %v1309 = vunpack.c.l.b16 %v790
  %v1310 = vunpack.c.l.b16 %v791
  %v1311 = vunpack.c.l.b16 %v792
  %v1312 = vunpack.c.l.b16 %v793
  %v1313 = vunpack.c.l.b16 %v794
  %v1314 = vunpack.c.l.b16 %v795
  %v1315 = vunpack.c.l.b16 %v796
  %v1316 = vunpack.c.l.b16 %v797
  %v1317 = vunpack.c.l.b16 %v798
  %v1318 = vunpack.c.l.b16 %v799
  %v1319 = vunpack.c.l.b16 %v800
  %v1320 = vunpack.c.l.b16 %v801
  %v1321 = vunpack.c.l.b16 %v802
  %v1322 = vunpack.c.l.b16 %v803
  %v1323 = vunpack.c.l.b16 %v804
  %v1324 = vunpack.c.l.b16 %v805
  %v1325 = vunpack.c.l.b16 %v806
  %v1326 = vunpack.c.l.b16 %v807
  %v1327 = vunpack.c.l.b16 %v808
  %v1328 = vunpack.c.l.b16 %v809
  %v1329 = vunpack.c.l.b16 %v810
  %v1330 = vunpack.c.l.b16 %v811
  %v1331 = vunpack.c.l.b16 %v812
  %v1332 = vunpack.c.l.b16 %v813
  %v1333 = vunpack.c.l.b16 %v814
  %v1334 = vunpack.c.l.b16 %v815
  %v1335 = vunpack.c.l.b16 %v816
  %v1336 = vunpack.c.l.b16 %v817
  %v1337 = vunpack.c.l.b16 %v818
  %v1338 = vunpack.c.l.b16 %v819
  %v1339 = vunpack.c.l.b16 %v820
  %v1340 = vunpack.c.l.b16 %v821
  %v1341 = vunpack.c.l.b16 %v822
  %v1342 = vunpack.c.l.b16 %v823
  %v1343 = vunpack.c.l.b16 %v824
  %v1344 = vunpack.c.l.b16 %v825
  %v1345 = vunpack.c.l.b16 %v826
  %v1346 = vunpack.c.l.b16 %v827
  %v1347 = vunpack.c.l.b16 %v828
  %v1348 = vunpack.c.l.b16 %v829
  %v1349 = vunpack.c.l.b16 %v830
  %v1350 = vunpack.c.l.b16 %v831
  %v1351 = vunpack.c.l.b16 %v832
  %v1352 = vunpack.c.l.b16 %v833
  %v1353 = vunpack.c.l.b16 %v834
  %v1354 = vunpack.c.l.b16 %v835
  %v1355 = vunpack.c.l.b16 %v836
  %v1356 = vunpack.c.l.b16 %v837
  %v1357 = vunpack.c.l.b16 %v838
  %v1358 = vunpack.c.l.b16 %v839
  %v1359 = vunpack.c.l.b16 %v840
  %v1360 = vunpack.c.l.b16 %v841
  %v1361 = vunpack.c.l.b16 %v842
  %v1362 = vunpack.c.l.b16 %v843
  %v1363 = vunpack.c.l.b16 %v844
  %v1364 = vunpack.c.l.b16 %v845
  %v1365 = vunpack.c.l.b16 %v846
  %v1366 = vunpack.c.l.b16 %v847
  %v1367 = vunpack.c.l.b16 %v848
  %v1368 = vunpack.c.l.b16 %v849
  %v1369 = vunpack.c.l.b16 %v850
  %v1370 = vunpack.c.l.b16 %v851
  %v1371 = vunpack.c.l.b16 %v852
  %v1372 = vunpack.c.l.b16 %v853
  %v1373 = vunpack.c.l.b16 %v854
  %v1374 = vunpack.c.l.b16 %v855
  %v1375 = vunpack.c.l.b16 %v856
  %v1376 = vunpack.c.l.b16 %v857
  %v1377 = vunpack.c.l.b16 %v858
  %v1378 = vunpack.c.l.b16 %v859
  %v1379 = vunpack.c.l.b16 %v860
  %v1380 = vunpack.c.l.b16 %v861
  %v1381 = vunpack.c.l.b16 %v862
  %v1382 = vunpack.c.l.b16 %v863
  %v1383 = vunpack.c.l.b16 %v864
  %v1384 = vunpack.c.l.b16 %v865
  %v1385 = vunpack.c.l.b16 %v866
  %v1386 = vunpack.c.l.b16 %v867
  %v1387 = vunpack.c.l.b16 %v868
  %v1388 = vunpack.c.l.b16 %v869
  %v1389 = vunpack.c.l.b16 %v870
  %v1390 = vunpack.c.l.b16 %v871
  %v1391 = vunpack.c.l.b16 %v872
  %v1392 = vunpack.c.l.b16 %v873
  %v1393 = vunpack.c.l.b16 %v874
  %v1394 = vunpack.c.l.b16 %v875
  %v1395 = vunpack.c.l.b16 %v876
  %v1396 = vunpack.c.l.b16 %v877
  %v1397 = vunpack.c.l.b16 %v878
  %v1398 = vunpack.c.l.b16 %v879
  %v1399 = vunpack.c.l.b16 %v880
  %v1400 = vunpack.c.l.b16 %v881
  %v1401 = vunpack.c.l.b16 %v882
  %v1402 = vunpack.c.l.b16 %v883
  %v1403 = vunpack.c.l.b16 %v884
  %v1404 = vunpack.c.l.b16 %v885
  %v1405 = vunpack.c.l.b16 %v886
  %v1406 = vunpack.c.l.b16 %v887
  %v1407 = vunpack.c.l.b16 %v888
  %v1408 = vunpack.c.l.b16 %v889
  %v1409 = vunpack.c.l.b16 %v890
  %v1410 = vunpack.c.l.b16 %v891
  %v1411 = vunpack.c.l.b16 %v892
  %v1412 = vunpack.c.l.b16 %v893
  %v1413 = vunpack.c.l.b16 %v894
  %v1414 = vunpack.c.l.b16 %v895
  %v1415 = vunpack.c.l.b16 %v896
  %v1416 = vunpack.c.l.b16 %v897
  %v1417 = vunpack.c.l.b16 %v898
  %v1418 = vunpack.c.l.b16 %v899
  %v1419 = vunpack.c.l.b16 %v900
  %v1420 = vunpack.c.l.b16 %v901
  %v1421 = vunpack.c.l.b16 %v902
  %v1422 = vunpack.c.l.b16 %v903
  %v1423 = vunpack.c.l.b16 %v904
  %v1424 = vunpack.c.l.b16 %v905
  %v1425 = vunpack.c.l.b16 %v906
  %v1426 = vunpack.c.l.b16 %v907
  %v1427 = vunpack.c.l.b16 %v908
  %v1428 = vunpack.c.l.b16 %v909
  %v1429 = vunpack.c.l.b16 %v910
  %v1430 = vunpack.c.l.b16 %v911
  %v1431 = vunpack.c.l.b16 %v912
  %v1432 = vunpack.c.l.b16 %v913
  %v1433 = vunpack.c.l.b16 %v914
  %v1434 = vunpack.c.l.b16 %v915
  %v1435 = vunpack.c.l.b16 %v916
  %v1436 = vunpack.c.l.b16 %v917
  %v1437 = vunpack.c.l.b16 %v918
  %v1438 = vunpack.c.l.b16 %v919
  %v1439 = vunpack.c.l.b16 %v920
  %v1440 = vunpack.c.l.b16 %v921
  %v1441 = vunpack.c.l.b16 %v922
  %v1442 = vunpack.c.l.b16 %v923
  %v1443 = vunpack.c.l.b16 %v924
  %v1444 = vunpack.c.l.b16 %v925
  %v1445 = vunpack.c.l.b16 %v926
  %v1446 = vunpack.c.l.b16 %v927
  %v1447 = vunpack.c.l.b16 %v928
  %v1448 = vunpack.c.l.b16 %v929
  %v1449 = vunpack.c.l.b16 %v930
  %v1450 = vunpack.c.l.b16 %v931
  %v1451 = vunpack.c.l.b16 %v932
  %v1452 = vunpack.c.l.b16 %v933
  %v1453 = vunpack.c.l.b16 %v934
  %v1454 = vunpack.c.l.b16 %v935
  %v1455 = vunpack.c.l.b16 %v936
  %v1456 = vunpack.c.l.b16 %v937
  %v1457 = vunpack.c.l.b16 %v938
  %v1458 = vunpack.c.l.b16 %v939
  %v1459 = vunpack.c.l.b16 %v940
  %v1460 = vunpack.c.l.b16 %v941
  %v1461 = vunpack.c.l.b16 %v942
  %v1462 = vunpack.c.l.b16 %v943
  %v1463 = vunpack.c.l.b16 %v944
  %v1464 = vunpack.c.l.b16 %v945
  %v1465 = vunpack.c.l.b16 %v946
  %v1466 = vunpack.c.l.b16 %v947
  %v1467 = vunpack.c.l.b16 %v948
  %v1468 = vunpack.c.l.b16 %v949
  %v1469 = vunpack.c.l.b16 %v950
  %v1470 = vunpack.c.l.b16 %v951
  %v1471 = vunpack.c.l.b16 %v952
  %v1472 = vunpack.c.l.b16 %v953
  %v1473 = vunpack.c.l.b16 %v954
  %v1474 = vunpack.c.l.b16 %v955
  %v1475 = vunpack.c.l.b16 %v956
  %v1476 = vunpack.c.l.b16 %v957
  %v1477 = vpack.c.b16 %v1222, %v1221
  %v1478 = vpack.c.b16 %v1224, %v1223
  %v1479 = vpack.c.b16 %v1226, %v1225
  %v1480 = vpack.c.b16 %v1228, %v1227
  %v1481 = vpack.c.b16 %v1230, %v1229
  %v1482 = vpack.c.b16 %v1232, %v1231
  %v1483 = vpack.c.b16 %v1234, %v1233
  %v1484 = vpack.c.b16 %v1236, %v1235
  %v1485 = vpack.c.b16 %v1238, %v1237
  %v1486 = vpack.c.b16 %v1240, %v1239
  %v1487 = vpack.c.b16 %v1242, %v1241
  %v1488 = vpack.c.b16 %v1244, %v1243
  %v1489 = vpack.c.b16 %v1246, %v1245
  %v1490 = vpack.c.b16 %v1248, %v1247
  %v1491 = vpack.c.b16 %v1250, %v1249
  %v1492 = vpack.c.b16 %v1252, %v1251
  %v1493 = vpack.c.b16 %v1254, %v1253
  %v1494 = vpack.c.b16 %v1256, %v1255
  %v1495 = vpack.c.b16 %v1258, %v1257
  %v1496 = vpack.c.b16 %v1260, %v1259
  %v1497 = vpack.c.b16 %v1262, %v1261
  %v1498 = vpack.c.b16 %v1264, %v1263
  %v1499 = vpack.c.b16 %v1266, %v1265
  %v1500 = vpack.c.b16 %v1268, %v1267
  %v1501 = vpack.c.b16 %v1270, %v1269
  %v1502 = vpack.c.b16 %v1272, %v1271
  %v1503 = vpack.c.b16 %v1274, %v1273
  %v1504 = vpack.c.b16 %v1276, %v1275
  %v1505 = vpack.c.b16 %v1278, %v1277
  %v1506 = vpack.c.b16 %v1280, %v1279
  %v1507 = vpack.c.b16 %v1282, %v1281
  %v1508 = vpack.c.b16 %v1284, %v1283
  %v1509 = vpack.c.b16 %v1286, %v1285
  %v1510 = vpack.c.b16 %v1288, %v1287
  %v1511 = vpack.c.b16 %v1290, %v1289
  %v1512 = vpack.c.b16 %v1292, %v1291
  %v1513 = vpack.c.b16 %v1294, %v1293
  %v1514 = vpack.c.b16 %v1296, %v1295
  %v1515 = vpack.c.b16 %v1298, %v1297
  %v1516 = vpack.c.b16 %v1300, %v1299
  %v1517 = vpack.c.b16 %v1302, %v1301
  %v1518 = vpack.c.b16 %v1304, %v1303
  %v1519 = vpack.c.b16 %v1306, %v1305
  %v1520 = vpack.c.b16 %v1308, %v1307
  %v1521 = vpack.c.b16 %v1310, %v1309
  %v1522 = vpack.c.b16 %v1312, %v1311
  %v1523 = vpack.c.b16 %v1314, %v1313
  %v1524 = vpack.c.b16 %v1316, %v1315
  %v1525 = vpack.c.b16 %v1318, %v1317
  %v1526 = vpack.c.b16 %v1320, %v1319
  %v1527 = vpack.c.b16 %v1322, %v1321
  %v1528 = vpack.c.b16 %v1324, %v1323
  %v1529 = vpack.c.b16 %v1326, %v1325
  %v1530 = vpack.c.b16 %v1328, %v1327
  %v1531 = vpack.c.b16 %v1330, %v1329
  %v1532 = vpack.c.b16 %v1332, %v1331
  %v1533 = vpack.c.b16 %v1334, %v1333
  %v1534 = vpack.c.b16 %v1336, %v1335
  %v1535 = vpack.c.b16 %v1338, %v1337
  %v1536 = vpack.c.b16 %v1340, %v1339
  %v1537 = vpack.c.b16 %v1342, %v1341
  %v1538 = vpack.c.b16 %v1344, %v1343
  %v1539 = vpack.c.b16 %v1346, %v1345
  %v1540 = vpack.c.b16 %v1348, %v1347
  %v1541 = vpack.c.b16 %v1350, %v1349
  %v1542 = vpack.c.b16 %v1352, %v1351
  %v1543 = vpack.c.b16 %v1354, %v1353
  %v1544 = vpack.c.b16 %v1356, %v1355
  %v1545 = vpack.c.b16 %v1358, %v1357
  %v1546 = vpack.c.b16 %v1360, %v1359
  %v1547 = vpack.c.b16 %v1362, %v1361
  %v1548 = vpack.c.b16 %v1364, %v1363
  %v1549 = vpack.c.b16 %v1366, %v1365
  %v1550 = vpack.c.b16 %v1368, %v1367
  %v1551 = vpack.c.b16 %v1370, %v1369
  %v1552 = vpack.c.b16 %v1372, %v1371
  %v1553 = vpack.c.b16 %v1374, %v1373
  %v1554 = vpack.c.b16 %v1376, %v1375
  %v1555 = vpack.c.b16 %v1378, %v1377
  %v1556 = vpack.c.b16 %v1380, %v1379
  %v1557 = vpack.c.b16 %v1382, %v1381
  %v1558 = vpack.c.b16 %v1384, %v1383
  %v1559 = vpack.c.b16 %v1386, %v1385
  %v1560 = vpack.c.b16 %v1388, %v1387
  %v1561 = vpack.c.b16 %v1390, %v1389
  %v1562 = vpack.c.b16 %v1392, %v1391
  %v1563 = vpack.c.b16 %v1394, %v1393
  %v1564 = vpack.c.b16 %v1396, %v1395
  %v1565 = vpack.c.b16 %v1398, %v1397
  %v1566 = vpack.c.b16 %v1400, %v1399
  %v1567 = vpack.c.b16 %v1402, %v1401
  %v1568 = vpack.c.b16 %v1404, %v1403
  %v1569 = vpack.c.b16 %v1406, %v1405
  %v1570 = vpack.c.b16 %v1408, %v1407
  %v1571 = vpack.c.b16 %v1410, %v1409
  %v1572 = vpack.c.b16 %v1412, %v1411
  %v1573 = vpack.c.b16 %v1414, %v1413
  %v1574 = vpack.c.b16 %v1416, %v1415
  %v1575 = vpack.c.b16 %v1418, %v1417
  %v1576 = vpack.c.b16 %v1420, %v1419
  %v1577 = vpack.c.b16 %v1422, %v1421
  %v1578 = vpack.c.b16 %v1424, %v1423
  %v1579 = vpack.c.b16 %v1426, %v1425
  %v1580 = vpack.c.b16 %v1428, %v1427
  %v1581 = vpack.c.b16 %v1430, %v1429
  %v1582 = vpack.c.b16 %v1432, %v1431
  %v1583 = vpack.c.b16 %v1434, %v1433
  %v1584 = vpack.c.b16 %v1436, %v1435
  %v1585 = vpack.c.b16 %v1438, %v1437
  %v1586 = vpack.c.b16 %v1440, %v1439
  %v1587 = vpack.c.b16 %v1442, %v1441
  %v1588 = vpack.c.b16 %v1444, %v1443
  %v1589 = vpack.c.b16 %v1446, %v1445
  %v1590 = vpack.c.b16 %v1448, %v1447
  %v1591 = vpack.c.b16 %v1450, %v1449
  %v1592 = vpack.c.b16 %v1452, %v1451
  %v1593 = vpack.c.b16 %v1454, %v1453
  %v1594 = vpack.c.b16 %v1456, %v1455
  %v1595 = vpack.c.b16 %v1458, %v1457
  %v1596 = vpack.c.b16 %v1460, %v1459
  %v1597 = vpack.c.b16 %v1462, %v1461
  %v1598 = vpack.c.b16 %v1464, %v1463
  %v1599 = vpack.c.b16 %v1466, %v1465
  %v1600 = vpack.c.b16 %v1468, %v1467
  %v1601 = vpack.c.b16 %v1470, %v1469
  %v1602 = vpack.c.b16 %v1472, %v1471
  %v1603 = vpack.c.b16 %v1474, %v1473
  %v1604 = vpack.c.b16 %v1476, %v1475
  %1733 = vmatprep.subr.bf16.mxu0 0
  %1734 = vmatpush1.bf16.msra.mxu0 %v1477
  %1735 = vmatprep.subr.bf16.mxu0 0
  %1736 = vmatpush1.bf16.msra.mxu0 %v1478
  %1737 = vmatprep.subr.bf16.mxu0 0
  %1738 = vmatpush1.bf16.msra.mxu0 %v1479
  %1739 = vmatprep.subr.bf16.mxu0 0
  %1740 = vmatpush1.bf16.msra.mxu0 %v1480
  %1741 = vmatprep.subr.bf16.mxu0 0
  %1742 = vmatpush1.bf16.msra.mxu0 %v1481
  %1743 = vmatprep.subr.bf16.mxu0 0
  %1744 = vmatpush1.bf16.msra.mxu0 %v1482
  %1745 = vmatprep.subr.bf16.mxu0 0
  %1746 = vmatpush1.bf16.msra.mxu0 %v1483
  %1747 = vmatprep.subr.bf16.mxu0 0
  %1748 = vmatpush1.bf16.msra.mxu0 %v1484
  %1749 = vmatprep.subr.bf16.mxu0 0
  %1750 = vmatpush1.bf16.msra.mxu0 %v1485
  %1751 = vmatprep.subr.bf16.mxu0 0
  %1752 = vmatpush1.bf16.msra.mxu0 %v1486
  %1753 = vmatprep.subr.bf16.mxu0 0
  %1754 = vmatpush1.bf16.msra.mxu0 %v1487
  %1755 = vmatprep.subr.bf16.mxu0 0
  %1756 = vmatpush1.bf16.msra.mxu0 %v1488
  %1757 = vmatprep.subr.bf16.mxu0 0
  %1758 = vmatpush1.bf16.msra.mxu0 %v1489
  %1759 = vmatprep.subr.bf16.mxu0 0
  %1760 = vmatpush1.bf16.msra.mxu0 %v1490
  %1761 = vmatprep.subr.bf16.mxu0 0
  %1762 = vmatpush1.bf16.msra.mxu0 %v1491
  %1763 = vmatprep.subr.bf16.mxu0 0
  %1764 = vmatpush1.bf16.msra.mxu0 %v1492
  %1765 = vmatprep.mubr.bf16.mxu0 %v687
  %1766 = vmatmul.mubr.bf16.gmra.mrb[0].mxu0 %v686
  %v1767 = vpop.f32.mrb[0].mxu0
  %v1768 = vadd.f32 %v963, %v1767
  %v1769 = vpop.f32.mrb[0].mxu0
  %v1770 = vpop.f32.mrb[0].mxu0
  %v1771 = vadd.f32 %v963, %v1770
  %v1772 = vpop.f32.mrb[0].mxu0
  %1773 = vdwg.mxu0
  %1774 = vmatprep.subr.bf16.mxu0 0
  %1775 = vmatpush1.bf16.msra.mxu0 %v1493
  %1776 = vmatprep.subr.bf16.mxu0 0
  %1777 = vmatpush1.bf16.msra.mxu0 %v1494
  %1778 = vmatprep.subr.bf16.mxu0 0
  %1779 = vmatpush1.bf16.msra.mxu0 %v1495
  %1780 = vmatprep.subr.bf16.mxu0 0
  %1781 = vmatpush1.bf16.msra.mxu0 %v1496
  %1782 = vmatprep.subr.bf16.mxu0 0
  %1783 = vmatpush1.bf16.msra.mxu0 %v1497
  %1784 = vmatprep.subr.bf16.mxu0 0
  %1785 = vmatpush1.bf16.msra.mxu0 %v1498
  %1786 = vmatprep.subr.bf16.mxu0 0
  %1787 = vmatpush1.bf16.msra.mxu0 %v1499
  %1788 = vmatprep.subr.bf16.mxu0 0
  %1789 = vmatpush1.bf16.msra.mxu0 %v1500
  %1790 = vmatprep.subr.bf16.mxu0 0
  %1791 = vmatpush1.bf16.msra.mxu0 %v1501
  %1792 = vmatprep.subr.bf16.mxu0 0
  %1793 = vmatpush1.bf16.msra.mxu0 %v1502
  %1794 = vmatprep.subr.bf16.mxu0 0
  %1795 = vmatpush1.bf16.msra.mxu0 %v1503
  %1796 = vmatprep.subr.bf16.mxu0 0
  %1797 = vmatpush1.bf16.msra.mxu0 %v1504
  %1798 = vmatprep.subr.bf16.mxu0 0
  %1799 = vmatpush1.bf16.msra.mxu0 %v1505
  %1800 = vmatprep.subr.bf16.mxu0 0
  %1801 = vmatpush1.bf16.msra.mxu0 %v1506
  %1802 = vmatprep.subr.bf16.mxu0 0
  %1803 = vmatpush1.bf16.msra.mxu0 %v1507
  %1804 = vmatprep.subr.bf16.mxu0 0
  %1805 = vmatpush1.bf16.msra.mxu0 %v1508
  %1806 = vmatprep.mubr.bf16.mxu0 %v689
  %1807 = vmatmul.mubr.bf16.gmra.mrb[0].mxu0 %v688
  %v1808 = vpop.f32.mrb[0].mxu0
  %v1809 = vadd.f32 %v1768, %v1808
  %v1810 = vpop.f32.mrb[0].mxu0
  %v1811 = vpop.f32.mrb[0].mxu0
  %v1812 = vadd.f32 %v1771, %v1811
  %v1813 = vpop.f32.mrb[0].mxu0
  %1814 = vdwg.mxu0
  %1815 = vmatprep.subr.bf16.mxu0 0
  %1816 = vmatpush1.bf16.msra.mxu0 %v1509
  %1817 = vmatprep.subr.bf16.mxu0 0
  %1818 = vmatpush1.bf16.msra.mxu0 %v1510
  %1819 = vmatprep.subr.bf16.mxu0 0
  %1820 = vmatpush1.bf16.msra.mxu0 %v1511
  %1821 = vmatprep.subr.bf16.mxu0 0
  %1822 = vmatpush1.bf16.msra.mxu0 %v1512
  %1823 = vmatprep.subr.bf16.mxu0 0
  %1824 = vmatpush1.bf16.msra.mxu0 %v1513
  %1825 = vmatprep.subr.bf16.mxu0 0
  %1826 = vmatpush1.bf16.msra.mxu0 %v1514
  %1827 = vmatprep.subr.bf16.mxu0 0
  %1828 = vmatpush1.bf16.msra.mxu0 %v1515
  %1829 = vmatprep.subr.bf16.mxu0 0
  %1830 = vmatpush1.bf16.msra.mxu0 %v1516
  %1831 = vmatprep.subr.bf16.mxu0 0
  %1832 = vmatpush1.bf16.msra.mxu0 %v1517
  %1833 = vmatprep.subr.bf16.mxu0 0
  %1834 = vmatpush1.bf16.msra.mxu0 %v1518
  %1835 = vmatprep.subr.bf16.mxu0 0
  %1836 = vmatpush1.bf16.msra.mxu0 %v1519
  %1837 = vmatprep.subr.bf16.mxu0 0
  %1838 = vmatpush1.bf16.msra.mxu0 %v1520
  %1839 = vmatprep.subr.bf16.mxu0 0
  %1840 = vmatpush1.bf16.msra.mxu0 %v1521
  %1841 = vmatprep.subr.bf16.mxu0 0
  %1842 = vmatpush1.bf16.msra.mxu0 %v1522
  %1843 = vmatprep.subr.bf16.mxu0 0
  %1844 = vmatpush1.bf16.msra.mxu0 %v1523
  %1845 = vmatprep.subr.bf16.mxu0 0
  %1846 = vmatpush1.bf16.msra.mxu0 %v1524
  %1847 = vmatprep.mubr.bf16.mxu0 %v691
  %1848 = vmatmul.mubr.bf16.gmra.mrb[0].mxu0 %v690
  %v1849 = vpop.f32.mrb[0].mxu0
  %v1850 = vadd.f32 %v1809, %v1849
  %v1851 = vpop.f32.mrb[0].mxu0
  %v1852 = vpop.f32.mrb[0].mxu0
  %v1853 = vadd.f32 %v1812, %v1852
  %v1854 = vpop.f32.mrb[0].mxu0
  %1855 = vdwg.mxu0
  %1856 = vmatprep.subr.bf16.mxu0 0
  %1857 = vmatpush1.bf16.msra.mxu0 %v1525
  %1858 = vmatprep.subr.bf16.mxu0 0
  %1859 = vmatpush1.bf16.msra.mxu0 %v1526
  %1860 = vmatprep.subr.bf16.mxu0 0
  %1861 = vmatpush1.bf16.msra.mxu0 %v1527
  %1862 = vmatprep.subr.bf16.mxu0 0
  %1863 = vmatpush1.bf16.msra.mxu0 %v1528
  %1864 = vmatprep.subr.bf16.mxu0 0
  %1865 = vmatpush1.bf16.msra.mxu0 %v1529
  %1866 = vmatprep.subr.bf16.mxu0 0
  %1867 = vmatpush1.bf16.msra.mxu0 %v1530
  %1868 = vmatprep.subr.bf16.mxu0 0
  %1869 = vmatpush1.bf16.msra.mxu0 %v1531
  %1870 = vmatprep.subr.bf16.mxu0 0
  %1871 = vmatpush1.bf16.msra.mxu0 %v1532
  %1872 = vmatprep.subr.bf16.mxu0 0
  %1873 = vmatpush1.bf16.msra.mxu0 %v1533
  %1874 = vmatprep.subr.bf16.mxu0 0
  %1875 = vmatpush1.bf16.msra.mxu0 %v1534
  %1876 = vmatprep.subr.bf16.mxu0 0
  %1877 = vmatpush1.bf16.msra.mxu0 %v1535
  %1878 = vmatprep.subr.bf16.mxu0 0
  %1879 = vmatpush1.bf16.msra.mxu0 %v1536
  %1880 = vmatprep.subr.bf16.mxu0 0
  %1881 = vmatpush1.bf16.msra.mxu0 %v1537
  %1882 = vmatprep.subr.bf16.mxu0 0
  %1883 = vmatpush1.bf16.msra.mxu0 %v1538
  %1884 = vmatprep.subr.bf16.mxu0 0
  %1885 = vmatpush1.bf16.msra.mxu0 %v1539
  %1886 = vmatprep.subr.bf16.mxu0 0
  %1887 = vmatpush1.bf16.msra.mxu0 %v1540
  %1888 = vmatprep.mubr.bf16.mxu0 %v693
  %1889 = vmatmul.mubr.bf16.gmra.mrb[0].mxu0 %v692
  %v1890 = vpop.f32.mrb[0].mxu0
  %v1891 = vadd.f32 %v1850, %v1890
  %v1892 = vpop.f32.mrb[0].mxu0
  %v1893 = vpop.f32.mrb[0].mxu0
  %v1894 = vadd.f32 %v1853, %v1893
  %v1895 = vpop.f32.mrb[0].mxu0
  %1896 = vdwg.mxu0
  %1897 = vmatprep.subr.bf16.mxu0 0
  %1898 = vmatpush1.bf16.msra.mxu0 %v1541
  %1899 = vmatprep.subr.bf16.mxu0 0
  %1900 = vmatpush1.bf16.msra.mxu0 %v1542
  %1901 = vmatprep.subr.bf16.mxu0 0
  %1902 = vmatpush1.bf16.msra.mxu0 %v1543
  %1903 = vmatprep.subr.bf16.mxu0 0
  %1904 = vmatpush1.bf16.msra.mxu0 %v1544
  %1905 = vmatprep.subr.bf16.mxu0 0
  %1906 = vmatpush1.bf16.msra.mxu0 %v1545
  %1907 = vmatprep.subr.bf16.mxu0 0
  %1908 = vmatpush1.bf16.msra.mxu0 %v1546
  %1909 = vmatprep.subr.bf16.mxu0 0
  %1910 = vmatpush1.bf16.msra.mxu0 %v1547
  %1911 = vmatprep.subr.bf16.mxu0 0
  %1912 = vmatpush1.bf16.msra.mxu0 %v1548
  %1913 = vmatprep.subr.bf16.mxu0 0
  %1914 = vmatpush1.bf16.msra.mxu0 %v1549
  %1915 = vmatprep.subr.bf16.mxu0 0
  %1916 = vmatpush1.bf16.msra.mxu0 %v1550
  %1917 = vmatprep.subr.bf16.mxu0 0
  %1918 = vmatpush1.bf16.msra.mxu0 %v1551
  %1919 = vmatprep.subr.bf16.mxu0 0
  %1920 = vmatpush1.bf16.msra.mxu0 %v1552
  %1921 = vmatprep.subr.bf16.mxu0 0
  %1922 = vmatpush1.bf16.msra.mxu0 %v1553
  %1923 = vmatprep.subr.bf16.mxu0 0
  %1924 = vmatpush1.bf16.msra.mxu0 %v1554
  %1925 = vmatprep.subr.bf16.mxu0 0
  %1926 = vmatpush1.bf16.msra.mxu0 %v1555
  %1927 = vmatprep.subr.bf16.mxu0 0
  %1928 = vmatpush1.bf16.msra.mxu0 %v1556
  %1929 = vmatprep.mubr.bf16.mxu0 %v695
  %1930 = vmatmul.mubr.bf16.gmra.mrb[0].mxu0 %v694
  %v1931 = vpop.f32.mrb[0].mxu0
  %v1932 = vadd.f32 %v1891, %v1931
  %v1933 = vpop.f32.mrb[0].mxu0
  %v1934 = vpop.f32.mrb[0].mxu0
  %v1935 = vadd.f32 %v1894, %v1934
  %v1936 = vpop.f32.mrb[0].mxu0
  %1937 = vdwg.mxu0
  %1938 = vmatprep.subr.bf16.mxu0 0
  %1939 = vmatpush1.bf16.msra.mxu0 %v1557
  %1940 = vmatprep.subr.bf16.mxu0 0
  %1941 = vmatpush1.bf16.msra.mxu0 %v1558
  %1942 = vmatprep.subr.bf16.mxu0 0
  %1943 = vmatpush1.bf16.msra.mxu0 %v1559
  %1944 = vmatprep.subr.bf16.mxu0 0
  %1945 = vmatpush1.bf16.msra.mxu0 %v1560
  %1946 = vmatprep.subr.bf16.mxu0 0
  %1947 = vmatpush1.bf16.msra.mxu0 %v1561
  %1948 = vmatprep.subr.bf16.mxu0 0
  %1949 = vmatpush1.bf16.msra.mxu0 %v1562
  %1950 = vmatprep.subr.bf16.mxu0 0
  %1951 = vmatpush1.bf16.msra.mxu0 %v1563
  %1952 = vmatprep.subr.bf16.mxu0 0
  %1953 = vmatpush1.bf16.msra.mxu0 %v1564
  %1954 = vmatprep.subr.bf16.mxu0 0
  %1955 = vmatpush1.bf16.msra.mxu0 %v1565
  %1956 = vmatprep.subr.bf16.mxu0 0
  %1957 = vmatpush1.bf16.msra.mxu0 %v1566
  %1958 = vmatprep.subr.bf16.mxu0 0
  %1959 = vmatpush1.bf16.msra.mxu0 %v1567
  %1960 = vmatprep.subr.bf16.mxu0 0
  %1961 = vmatpush1.bf16.msra.mxu0 %v1568
  %1962 = vmatprep.subr.bf16.mxu0 0
  %1963 = vmatpush1.bf16.msra.mxu0 %v1569
  %1964 = vmatprep.subr.bf16.mxu0 0
  %1965 = vmatpush1.bf16.msra.mxu0 %v1570
  %1966 = vmatprep.subr.bf16.mxu0 0
  %1967 = vmatpush1.bf16.msra.mxu0 %v1571
  %1968 = vmatprep.subr.bf16.mxu0 0
  %1969 = vmatpush1.bf16.msra.mxu0 %v1572
  %1970 = vmatprep.mubr.bf16.mxu0 %v697
  %1971 = vmatmul.mubr.bf16.gmra.mrb[0].mxu0 %v696
  %v1972 = vpop.f32.mrb[0].mxu0
  %v1973 = vadd.f32 %v1932, %v1972
  %v1974 = vpop.f32.mrb[0].mxu0
  %v1975 = vpop.f32.mrb[0].mxu0
  %v1976 = vadd.f32 %v1935, %v1975
  %v1977 = vpop.f32.mrb[0].mxu0
  %1978 = vdwg.mxu0
  %1979 = vmatprep.subr.bf16.mxu0 0
  %1980 = vmatpush1.bf16.msra.mxu0 %v1573
  %1981 = vmatprep.subr.bf16.mxu0 0
  %1982 = vmatpush1.bf16.msra.mxu0 %v1574
  %1983 = vmatprep.subr.bf16.mxu0 0
  %1984 = vmatpush1.bf16.msra.mxu0 %v1575
  %1985 = vmatprep.subr.bf16.mxu0 0
  %1986 = vmatpush1.bf16.msra.mxu0 %v1576
  %1987 = vmatprep.subr.bf16.mxu0 0
  %1988 = vmatpush1.bf16.msra.mxu0 %v1577
  %1989 = vmatprep.subr.bf16.mxu0 0
  %1990 = vmatpush1.bf16.msra.mxu0 %v1578
  %1991 = vmatprep.subr.bf16.mxu0 0
  %1992 = vmatpush1.bf16.msra.mxu0 %v1579
  %1993 = vmatprep.subr.bf16.mxu0 0
  %1994 = vmatpush1.bf16.msra.mxu0 %v1580
  %1995 = vmatprep.subr.bf16.mxu0 0
  %1996 = vmatpush1.bf16.msra.mxu0 %v1581
  %1997 = vmatprep.subr.bf16.mxu0 0
  %1998 = vmatpush1.bf16.msra.mxu0 %v1582
  %1999 = vmatprep.subr.bf16.mxu0 0
  %2000 = vmatpush1.bf16.msra.mxu0 %v1583
  %2001 = vmatprep.subr.bf16.mxu0 0
  %2002 = vmatpush1.bf16.msra.mxu0 %v1584
  %2003 = vmatprep.subr.bf16.mxu0 0
  %2004 = vmatpush1.bf16.msra.mxu0 %v1585
  %2005 = vmatprep.subr.bf16.mxu0 0
  %2006 = vmatpush1.bf16.msra.mxu0 %v1586
  %2007 = vmatprep.subr.bf16.mxu0 0
  %2008 = vmatpush1.bf16.msra.mxu0 %v1587
  %2009 = vmatprep.subr.bf16.mxu0 0
  %2010 = vmatpush1.bf16.msra.mxu0 %v1588
  %2011 = vmatprep.mubr.bf16.mxu0 %v699
  %2012 = vmatmul.mubr.bf16.gmra.mrb[0].mxu0 %v698
  %v2013 = vpop.f32.mrb[0].mxu0
  %v2014 = vadd.f32 %v1973, %v2013
  %v2015 = vpop.f32.mrb[0].mxu0
  %v2016 = vpop.f32.mrb[0].mxu0
  %v2017 = vadd.f32 %v1976, %v2016
  %v2018 = vpop.f32.mrb[0].mxu0
  %2019 = vdwg.mxu0
  %2020 = vmatprep.subr.bf16.mxu0 0
  %2021 = vmatpush1.bf16.msra.mxu0 %v1589
  %2022 = vmatprep.subr.bf16.mxu0 0
  %2023 = vmatpush1.bf16.msra.mxu0 %v1590
  %2024 = vmatprep.subr.bf16.mxu0 0
  %2025 = vmatpush1.bf16.msra.mxu0 %v1591
  %2026 = vmatprep.subr.bf16.mxu0 0
  %2027 = vmatpush1.bf16.msra.mxu0 %v1592
  %2028 = vmatprep.subr.bf16.mxu0 0
  %2029 = vmatpush1.bf16.msra.mxu0 %v1593
  %2030 = vmatprep.subr.bf16.mxu0 0
  %2031 = vmatpush1.bf16.msra.mxu0 %v1594
  %2032 = vmatprep.subr.bf16.mxu0 0
  %2033 = vmatpush1.bf16.msra.mxu0 %v1595
  %2034 = vmatprep.subr.bf16.mxu0 0
  %2035 = vmatpush1.bf16.msra.mxu0 %v1596
  %2036 = vmatprep.subr.bf16.mxu0 0
  %2037 = vmatpush1.bf16.msra.mxu0 %v1597
  %2038 = vmatprep.subr.bf16.mxu0 0
  %2039 = vmatpush1.bf16.msra.mxu0 %v1598
  %2040 = vmatprep.subr.bf16.mxu0 0
  %2041 = vmatpush1.bf16.msra.mxu0 %v1599
  %2042 = vmatprep.subr.bf16.mxu0 0
  %2043 = vmatpush1.bf16.msra.mxu0 %v1600
  %2044 = vmatprep.subr.bf16.mxu0 0
  %2045 = vmatpush1.bf16.msra.mxu0 %v1601
  %2046 = vmatprep.subr.bf16.mxu0 0
  %2047 = vmatpush1.bf16.msra.mxu0 %v1602
  %2048 = vmatprep.subr.bf16.mxu0 0
  %2049 = vmatpush1.bf16.msra.mxu0 %v1603
  %2050 = vmatprep.subr.bf16.mxu0 0
  %2051 = vmatpush1.bf16.msra.mxu0 %v1604
  %2052 = vmatprep.mubr.bf16.mxu0 %v701
  %2053 = vmatmul.mubr.bf16.gmra.mrb[0].mxu0 %v700
  %v2054 = vpop.f32.mrb[0].mxu0
  %v2055 = vadd.f32 %v2014, %v2054
  %v2056 = vpop.f32.mrb[0].mxu0
  %v2057 = vpop.f32.mrb[0].mxu0
  %v2058 = vadd.f32 %v2017, %v2057
  %v2059 = vpop.f32.mrb[0].mxu0
  %2060 = vdwg.mxu0
  %v2061 = vadd.f32 %v27, %v2055
  %v2062 = vadd.f32 %v28, %v2058
  %v2063 = vld [vmem:[%s5] sm:$0x1]
  %v2064 = vld [vmem:[%s6] sm:$0x1]
  %v2065 = vsel %vm306, %v2061, 0.0
  %2066 = vadd.xlane.f32.xlu0 %v2065
  %v2067 = vpop.xlane.xlu0 %2066
  %v2068 = vsel %vm306, %v2062, 0.0
  %2069 = vadd.xlane.f32.xlu0 %v2068
  %v2070 = vpop.xlane.xlu0 %2069
  %v2071 = vrcp.pop 32.0
  %v2072 = vmul.f32 %v2067, %v2071
  %v2073 = vmul.f32 %v2070, %v2071
  %v2074 = vsub.f32 %v2061, %v2072
  %v2075 = vsub.f32 %v2062, %v2073
  %v2076 = vmul.f32 %v2074, %v2074
  %v2077 = vmul.f32 %v2075, %v2075
  %v2078 = vsel %vm306, %v2076, 0.0
  %2079 = vadd.xlane.f32.xlu0 %v2078
  %v2080 = vpop.xlane.xlu0 %2079
  %v2081 = vsel %vm306, %v2077, 0.0
  %2082 = vadd.xlane.f32.xlu0 %v2081
  %v2083 = vpop.xlane.xlu0 %2082
  %v2084 = vmul.f32 %v2080, %v2071
  %v2085 = vmul.f32 %v2083, %v2071
  %v2086 = vadd.f32 %v2084, 1e-05
  %v2087 = vadd.f32 %v2085, 1e-05
  %v2088 = vrsqrt.pop %v2086
  %v2089 = vrsqrt.pop %v2087
  %v2090 = vmul.f32 %v2074, %v2088
  %v2091 = vmul.f32 %v2075, %v2089
  %v2093 = vlaneseq
  %v2094 = vshrl.u32 %v2093, 7
  %v2095 = vsub.s32 0, %v2094
  %v2096 = vrot.slane %v2063, %v2095
  %v2098 = vmul.f32 %v2090, %v2096
  %v2099 = vmul.f32 %v2091, %v2096
  %v2101 = vlaneseq
  %v2102 = vshrl.u32 %v2101, 7
  %v2103 = vsub.s32 0, %v2102
  %v2104 = vrot.slane %v2064, %v2103
  %v2106 = vadd.f32 %v2098, %v2104
  %v2107 = vadd.f32 %v2099, %v2104
  %2108 = vst.msk [vmem:[%s7] sm:$0xff] %vm306, %v2106
  %2109 = vst.msk [vmem:[%s7 + $0x8] sm:$0xff] %vm306, %v2107
  // Predicated region
  $region30: #{transformer_classifier_forward.9} parent=0 // pred_check
    _
  $region31: #{transformer_classifier_forward.9} parent=0 // pred_check_branch
    %2111 = sbr.rel (0) target = $region33
  $region32: #{transformer_classifier_forward.9} parent=0 // pred_region
    _
  $region33: #{transformer_classifier_forward.9} parent=0 // pred_fallthru
    _
  // Predicated region
  $region34: #{transformer_classifier_forward.9} parent=0 // pred_check
    _
  $region35: #{transformer_classifier_forward.9} parent=0 // pred_check_branch
    %2113 = sbr.rel (0) target = $region37
  $region36: #{transformer_classifier_forward.9} parent=0 // pred_region
    _
  $region37: #{transformer_classifier_forward.9} parent=0 // pred_fallthru
    _

// kernel: transformer_classifier_forward.13
$region0: #{transformer_classifier_forward.13}
  #allocation0 [shape = 'u32[]', space=smem, size = 0x4, offset = 0x4, fixed_abs, tag = 'smem constant byte address 0x4 - core index']
  #allocation1 [shape = 'u32[144,128]{1,0:T(1,128)}', space=vmem, size = 0x12000, scoped, tag = 'internal scratch']
  %s0 = inlined_call_operand.vmem [shape: f32[16,32], index: 0, kind: input, shape index: {}]
  %s1 = inlined_call_operand.vmem [shape: bf16[32,32], index: 1, kind: input, shape index: {}]
  %s2 = inlined_call_operand.vmem [shape: f32[1,32], index: 2, kind: input, shape index: {}]
  %s3 = inlined_call_operand.vmem [shape: bf16[32,128], index: 3, kind: input, shape index: {}]
  %s4 = inlined_call_operand.vmem [shape: f32[1,128], index: 4, kind: input, shape index: {}]
  %s5 = inlined_call_operand.vmem [shape: f32[16,128], index: 5, kind: output, shape index: {}]
  %s6 = sld [smem:[#allocation0]]
  $region30: #{transformer_classifier_forward.13} parent=0
    _
  %s8 = ssub.s32 1, %s6
  %s9 = scalar_select 0, %s8, %s6
  // Predicated region
  $region2: #{transformer_classifier_forward.13} parent=0 // pred_check
    _
  $region3: #{transformer_classifier_forward.13} parent=0 // pred_check_branch
    %11 = sbr.rel (0) target = $region5
  $region4: #{transformer_classifier_forward.13} parent=0 // pred_region
    _
  $region5: #{transformer_classifier_forward.13} parent=0 // pred_fallthru
    _
  // Predicated region
  $region6: #{transformer_classifier_forward.13} parent=0 // pred_check
    _
  $region7: #{transformer_classifier_forward.13} parent=0 // pred_check_branch
    %13 = sbr.rel (0) target = $region9
  $region8: #{transformer_classifier_forward.13} parent=0 // pred_region
    _
  $region9: #{transformer_classifier_forward.13} parent=0 // pred_fallthru
    _
  // Predicated region
  $region10: #{transformer_classifier_forward.13} parent=0 // pred_check
    _
  $region11: #{transformer_classifier_forward.13} parent=0 // pred_check_branch
    %15 = sbr.rel (0) target = $region13
  $region12: #{transformer_classifier_forward.13} parent=0 // pred_region
    _
  $region13: #{transformer_classifier_forward.13} parent=0 // pred_fallthru
    _
  // Predicated region
  $region14: #{transformer_classifier_forward.13} parent=0 // pred_check
    _
  $region15: #{transformer_classifier_forward.13} parent=0 // pred_check_branch
    %17 = sbr.rel (0) target = $region17
  $region16: #{transformer_classifier_forward.13} parent=0 // pred_region
    _
  $region17: #{transformer_classifier_forward.13} parent=0 // pred_fallthru
    _
  // Predicated region
  $region18: #{transformer_classifier_forward.13} parent=0 // pred_check
    _
  $region19: #{transformer_classifier_forward.13} parent=0 // pred_check_branch
    %19 = sbr.rel (0) target = $region21
  $region20: #{transformer_classifier_forward.13} parent=0 // pred_region
    _
  $region21: #{transformer_classifier_forward.13} parent=0 // pred_fallthru
    _
  %v21 = vld [vmem:[%s0] sm:$0xff]
  %v22 = vld [vmem:[%s0 + $0x8] sm:$0xff]
  %v23 = vpack.c.bf16 %v22, %v21
  %v24 = vld [vmem:[%s1] sm:$0xf]
  %v25 = vld [vmem:[%s1 + $0x4] sm:$0xf]
  %v26 = vld [vmem:[%s1 + $0x8] sm:$0xf]
  %v27 = vld [vmem:[%s1 + $0xc] sm:$0xf]
  %v28 = vld [vmem:[%s2] sm:$0x1]
  %v30 = vlaneseq
  %v31 = vshrl.u32 %v30, 7
  %v32 = vsub.s32 0, %v31
  %v33 = vrot.slane %v28, %v32
  %v39 = vunpack.c.l.b16 %v24
  %v40 = vunpack.c.l.b16 %v25
  %v41 = vunpack.c.l.b16 %v26
  %v42 = vunpack.c.l.b16 %v27
  %v43 = vpack.c.b16 %v40, %v39
  %v44 = vpack.c.b16 %v42, %v41
  %vm47 = vcmask 261120
  %v49 = vsel %vm47, %v23, 0
  %51 = vmatprep.subr.bf16.mxu0 0
  %52 = vmatpush1.bf16.msra.mxu0 %v43
  %53 = vmatprep.subr.bf16.mxu0 0
  %54 = vmatpush1.bf16.msra.mxu0 %v44
  %55 = vmatprep.subr.bf16.mxu0 0
  %56 = vmatpush1.bf16.msra.mxu0 0
  %57 = vmatprep.subr.bf16.mxu0 0
  %58 = vmatpush1.bf16.msra.mxu0 0
  %59 = vmatprep.subr.bf16.mxu0 0
  %60 = vmatpush1.bf16.msra.mxu0 0
  %61 = vmatprep.subr.bf16.mxu0 0
  %62 = vmatpush1.bf16.msra.mxu0 0
  %63 = vmatprep.subr.bf16.mxu0 0
  %64 = vmatpush1.bf16.msra.mxu0 0
  %65 = vmatprep.subr.bf16.mxu0 0
  %66 = vmatpush1.bf16.msra.mxu0 0
  %67 = vmatprep.subr.bf16.mxu0 0
  %68 = vmatpush1.bf16.msra.mxu0 0
  %69 = vmatprep.subr.bf16.mxu0 0
  %70 = vmatpush1.bf16.msra.mxu0 0
  %71 = vmatprep.subr.bf16.mxu0 0
  %72 = vmatpush1.bf16.msra.mxu0 0
  %73 = vmatprep.subr.bf16.mxu0 0
  %74 = vmatpush1.bf16.msra.mxu0 0
  %75 = vmatprep.subr.bf16.mxu0 0
  %76 = vmatpush1.bf16.msra.mxu0 0
  %77 = vmatprep.subr.bf16.mxu0 0
  %78 = vmatpush1.bf16.msra.mxu0 0
  %79 = vmatprep.subr.bf16.mxu0 0
  %80 = vmatpush1.bf16.msra.mxu0 0
  %81 = vmatprep.subr.bf16.mxu0 0
  %82 = vmatpush1.bf16.msra.mxu0 0
  %83 = vmatprep.mubr.bf16.mxu0 0
  %84 = vmatmul.mubr.bf16.gmra.mrb[0].mxu0 %v49
  %v85 = vpop.f32.mrb[0].mxu0
  %v86 = vadd.f32 %v33, %v85
  %v87 = vpop.f32.mrb[0].mxu0
  %v88 = vpop.f32.mrb[0].mxu0
  %v89 = vadd.f32 %v33, %v88
  %v90 = vpop.f32.mrb[0].mxu0
  %91 = vdwg.mxu0
  %v92 = vmul.f32 %v86, 0.5
  %v93 = vmul.f32 %v89, 0.5
  %v94 = vmul.f32 %v86, 0.70710677
  %v95 = vmul.f32 %v89, 0.70710677
  %v96 = verf.f32.pop %v94
  %v97 = verf.f32.pop %v95
  %v98 = vadd.f32 %v96, 1.0
  %v99 = vadd.f32 %v97, 1.0
  %v100 = vmul.f32 %v92, %v98
  %v101 = vmul.f32 %v93, %v99
  %v102 = vpack.c.bf16 %v101, %v100
  %v103 = vld [vmem:[%s3] sm:$0xf]
  %v104 = vld [vmem:[%s3 + $0x4] sm:$0xf]
  %v105 = vld [vmem:[%s3 + $0x8] sm:$0xf]
  %v106 = vld [vmem:[%s3 + $0xc] sm:$0xf]
  %v107 = vld [vmem:[%s4] sm:$0x1]
  %v109 = vlaneseq
  %v110 = vshrl.u32 %v109, 7
  %v111 = vsub.s32 0, %v110
  %v112 = vrot.slane %v107, %v111
  %v118 = vunpack.c.l.b16 %v103
  %v119 = vunpack.c.l.b16 %v104
  %v120 = vunpack.c.l.b16 %v105
  %v121 = vunpack.c.l.b16 %v106
  %v122 = vpack.c.b16 %v119, %v118
  %v123 = vpack.c.b16 %v121, %v120
  %v127 = vsel %vm47, %v102, 0
  %129 = vmatprep.subr.bf16.mxu0 0
  %130 = vmatpush1.bf16.msra.mxu0 %v122
  %131 = vmatprep.subr.bf16.mxu0 0
  %132 = vmatpush1.bf16.msra.mxu0 %v123
  %133 = vmatprep.subr.bf16.mxu0 0
  %134 = vmatpush1.bf16.msra.mxu0 0
  %135 = vmatprep.subr.bf16.mxu0 0
  %136 = vmatpush1.bf16.msra.mxu0 0
  %137 = vmatprep.subr.bf16.mxu0 0
  %138 = vmatpush1.bf16.msra.mxu0 0
  %139 = vmatprep.subr.bf16.mxu0 0
  %140 = vmatpush1.bf16.msra.mxu0 0
  %141 = vmatprep.subr.bf16.mxu0 0
  %142 = vmatpush1.bf16.msra.mxu0 0
  %143 = vmatprep.subr.bf16.mxu0 0
  %144 = vmatpush1.bf16.msra.mxu0 0
  %145 = vmatprep.subr.bf16.mxu0 0
  %146 = vmatpush1.bf16.msra.mxu0 0
  %147 = vmatprep.subr.bf16.mxu0 0
  %148 = vmatpush1.bf16.msra.mxu0 0
  %149 = vmatprep.subr.bf16.mxu0 0
  %150 = vmatpush1.bf16.msra.mxu0 0
  %151 = vmatprep.subr.bf16.mxu0 0
  %152 = vmatpush1.bf16.msra.mxu0 0
  %153 = vmatprep.subr.bf16.mxu0 0
  %154 = vmatpush1.bf16.msra.mxu0 0
  %155 = vmatprep.subr.bf16.mxu0 0
  %156 = vmatpush1.bf16.msra.mxu0 0
  %157 = vmatprep.subr.bf16.mxu0 0
  %158 = vmatpush1.bf16.msra.mxu0 0
  %159 = vmatprep.subr.bf16.mxu0 0
  %160 = vmatpush1.bf16.msra.mxu0 0
  %161 = vmatprep.mubr.bf16.mxu0 0
  %162 = vmatmul.mubr.bf16.gmra.mrb[0].mxu0 %v127
  %v163 = vpop.f32.mrb[0].mxu0
  %v164 = vadd.f32 %v112, %v163
  %v165 = vpop.f32.mrb[0].mxu0
  %v166 = vpop.f32.mrb[0].mxu0
  %v167 = vadd.f32 %v112, %v166
  %v168 = vpop.f32.mrb[0].mxu0
  %169 = vdwg.mxu0
  %170 = vst [vmem:[%s5] sm:$0xff] %v164
  %171 = vst [vmem:[%s5 + $0x8] sm:$0xff] %v167
  // Predicated region
  $region22: #{transformer_classifier_forward.13} parent=0 // pred_check
    _
  $region23: #{transformer_classifier_forward.13} parent=0 // pred_check_branch
    %173 = sbr.rel (0) target = $region25
  $region24: #{transformer_classifier_forward.13} parent=0 // pred_region
    _
  $region25: #{transformer_classifier_forward.13} parent=0 // pred_fallthru
    _
  // Predicated region
  $region26: #{transformer_classifier_forward.13} parent=0 // pred_check
    _
  $region27: #{transformer_classifier_forward.13} parent=0 // pred_check_branch
    %175 = sbr.rel (0) target = $region29
  $region28: #{transformer_classifier_forward.13} parent=0 // pred_region
    _
  $region29: #{transformer_classifier_forward.13} parent=0 // pred_fallthru
    _

</llo_original>
